<compile_context>
chip_gen: v6e
topology: v6e:2x2x1
jax: 0.10.0
libtpu: 0.0.40
codegen_flags: <defaults>
</compile_context>

<pallas_src>
import jax
import jax.numpy as jnp
from jax.experimental import pallas as pl
from jax.experimental.pallas import tpu as pltpu


def _gvp_linear_kernel(s_ref, vflat_ref, w_big_ref, w_ss_ref, w_dv_ref, b_s_ref,
                       s_out_ref, v_out_ref):
    # s_ref:     (tm, si)
    # vflat_ref: (tm, 3*vi)     lanes ordered [comp0 | comp1 | comp2]
    # w_big_ref: (vi, 2H+vo)    columns ordered [Wl^T | Wr^T | Wh^T@Wv^T]
    # w_ss_ref:  (si, so)       scalar part of Ws
    # w_dv_ref:  (H, so)        Wdp^T @ Wsv  (vn projection folded into Ws)
    # b_s_ref:   (1, so)        bs + bdp @ Wsv
    # s_out_ref: (tm, so)
    # v_out_ref: (tm, 3*vo)     lanes ordered [comp0 | comp1 | comp2]
    vi = w_big_ref.shape[0]
    h = w_dv_ref.shape[0]
    tm = vflat_ref.shape[0]

    vflat = vflat_ref[...]                       # (tm, 3*vi)
    w_big = w_big_ref[...]                       # (vi, 2H+vo)

    dot = jnp.zeros((tm, h), jnp.float32)
    vout_parts = []
    # Static unroll over the 3 spatial components; each step is ONE fused MXU
    # matmul producing [left_t | right_t | vout_t] in a single (tm, 2H+vo) result.
    for t in range(3):
        vt = vflat[:, t * vi:(t + 1) * vi]                               # (tm, vi)
        p = jnp.dot(vt, w_big, preferred_element_type=jnp.float32)       # (tm, 2H+vo)
        dot = dot + p[:, :h] * p[:, h:2 * h]                             # sum over components
        vout_parts.append(p[:, 2 * h:])                                  # (tm, vo)

    # Scalar branch: s_pre = s@Wss + dot@(Wdp^T@Wsv) + (bs + bdp@Wsv), then relu.
    s_pre = (jnp.dot(s_ref[...], w_ss_ref[...], preferred_element_type=jnp.float32)
             + jnp.dot(dot, w_dv_ref[...], preferred_element_type=jnp.float32)
             + b_s_ref[...])
    s_out_ref[...] = jnp.maximum(s_pre, 0.0).astype(s_out_ref.dtype)

    # Vector branch: norm over the 3 spatial components, sigmoid gate.
    v0, v1, v2 = vout_parts
    nrm = jnp.sqrt(jnp.maximum(v0 * v0 + v1 * v1 + v2 * v2, 1e-8))       # _norm_no_nan
    gate = 1.0 / (1.0 + jnp.exp(-nrm))                                   # sigmoid (vector_act)
    v_out_ref[...] = jnp.concatenate(
        [v0 * gate, v1 * gate, v2 * gate], axis=1).astype(v_out_ref.dtype)


def gvp_linear(s, v, wl, wr, wh, w_dp, b_dp, ws, bs, wv, *,
               block_n=256, compute_dtype=None):
    """Fused GVPLinear forward (default configuration).

    s:  (N, si)          scalar features
    v:  (N, vi, 3)       vector features (module layout)
    wl, wr, wh: (H, vi)  PyTorch Linear weights (out, in), no bias
    w_dp: (H, H), b_dp: (H,)          dot_prod.linear_out
    ws: (so, si+H), bs: (so,)         ws acting on cat([s, vn])
    wv: (vo, H)                       wv, no bias
    Returns (s_out (N, so), v_out (N, vo, 3)).
    """
    N, vi, three = v.shape
    assert three == 3
    si = s.shape[1]
    H = wl.shape[0]
    so = ws.shape[0]
    vo = wv.shape[0]

    # Lane-dense flattened vec: (N, 3*vi), contiguous rows, big DMA bursts.
    vflat = jnp.swapaxes(v, -1, -2).reshape(N, 3 * vi)

    # Weight prep (done once in the wrapper, f32):
    #   - fold wv into wh:  vout_t = vt @ (Wh^T @ Wv^T)
    #   - fold wdp into ws: vn@Wsv = dot@(Wdp^T@Wsv) + bdp@Wsv
    w_hv = wh.T @ wv.T                                       # (vi, vo)
    w_big = jnp.concatenate([wl.T, wr.T, w_hv], axis=1)      # (vi, 2H+vo)
    w_sv = ws[:, si:].T                                      # (H, so)
    w_ss = ws[:, :si].T                                      # (si, so)
    w_dv = w_dp.T @ w_sv                                     # (H, so)
    b_eff = (bs + b_dp @ w_sv).reshape(1, so).astype(jnp.float32)

    s_in = s
    if compute_dtype is not None:                            # e.g. bf16 on v6e/v7x
        vflat = vflat.astype(compute_dtype)
        s_in = s_in.astype(compute_dtype)
        w_big = w_big.astype(compute_dtype)
        w_ss = w_ss.astype(compute_dtype)
        w_dv = w_dv.astype(compute_dtype)

    # Ragged N: pad up to a multiple of block_n (zero rows are harmless).
    n_blocks = pl.cdiv(N, block_n)
    n_pad = n_blocks * block_n
    if n_pad != N:
        pad = n_pad - N
        s_in = jnp.pad(s_in, ((0, pad), (0, 0)))
        vflat = jnp.pad(vflat, ((0, pad), (0, 0)))

    s_out, v_out_flat = pl.pallas_call(
        _gvp_linear_kernel,
        out_shape=(
            jax.ShapeDtypeStruct((n_pad, so), s.dtype),
            jax.ShapeDtypeStruct((n_pad, 3 * vo), v.dtype),
        ),
        grid_spec=pltpu.PrefetchScalarGridSpec(
            num_scalar_prefetch=0,
            grid=(n_blocks,),
            in_specs=[
                pl.BlockSpec((block_n, si), lambda i: (i, 0)),         # s tile
                pl.BlockSpec((block_n, 3 * vi), lambda i: (i, 0)),     # flattened vec tile
                pl.BlockSpec((vi, 2 * H + vo), lambda i: (0, 0)),      # fused Wl|Wr|Whv (resident)
                pl.BlockSpec((si, so), lambda i: (0, 0)),              # Ws (scalar part)
                pl.BlockSpec((H, so), lambda i: (0, 0)),               # Wdp^T @ Wsv
                pl.BlockSpec((1, so), lambda i: (0, 0)),               # folded bias
            ],
            out_specs=(
                pl.BlockSpec((block_n, so), lambda i: (i, 0)),
                pl.BlockSpec((block_n, 3 * vo), lambda i: (i, 0)),
            ),
        ),
        compiler_params=pltpu.CompilerParams(dimension_semantics=("parallel",)),
    )(s_in, vflat, w_big, w_ss, w_dv, b_eff)

    s_out = s_out[:N]
    v_out = jnp.swapaxes(v_out_flat[:N].reshape(N, 3, vo), -1, -2)   # (N, vo, 3)
    return s_out, v_out


def _reference(s, v, wl, wr, wh, w_dp, b_dp, ws, bs, wv):
    """Pure-JAX mirror of the PyTorch GVPLinear forward (default config)."""
    vt = jnp.swapaxes(v, -1, -2)                                 # (N, 3, vi)
    left = jnp.einsum("ntc,hc->nth", vt, wl)
    right = jnp.einsum("ntc,hc->nth", vt, wr)
    dot = (left * right).sum(axis=1)                             # (N, H)
    vn = dot @ w_dp.T + b_dp                                     # (N, H)
    s_out = jnp.concatenate([s, vn], axis=-1) @ ws.T + bs        # (N, so)
    vh = jnp.einsum("ntc,hc->nth", vt, wh)                       # (N, 3, H)
    v_out = jnp.swapaxes(jnp.einsum("nth,oh->nto", vh, wv), -1, -2)  # (N, vo, 3)
    nrm = jnp.sqrt(jnp.clip((v_out ** 2).sum(-1, keepdims=True), 1e-8))
    v_out = v_out * jax.nn.sigmoid(nrm)
    s_out = jax.nn.relu(s_out)
    return s_out, v_out


if __name__ == "__main__":
    # Small shapes consistent with the module: si=16 scalar dims, vi=16 vector
    # channels (x3 spatial), so=32, vo=16, h_dim=max(vi,vo)=16. N=500 exercises
    # the cdiv/padding path with block_n=256 (grid of 2 -> both v7x cores busy).
    N, si, vi, so, vo = 500, 16, 16, 32, 16
    H = max(vi, vo)

    key = jax.random.PRNGKey(0)
    ks = jax.random.split(key, 10)
    s = jax.random.normal(ks[0], (N, si), dtype=jnp.float32)
    v = jax.random.normal(ks[1], (N, vi, 3), dtype=jnp.float32)
    wl = jax.random.normal(ks[2], (H, vi), dtype=jnp.float32) * 0.1
    wr = jax.random.normal(ks[3], (H, vi), dtype=jnp.float32) * 0.1
    wh = jax.random.normal(ks[4], (H, vi), dtype=jnp.float32) * 0.1
    w_dp = jax.random.normal(ks[5], (H, H), dtype=jnp.float32) * 0.1
    b_dp = jax.random.normal(ks[6], (H,), dtype=jnp.float32) * 0.1
    ws = jax.random.normal(ks[7], (so, si + H), dtype=jnp.float32) * 0.1
    bs = jax.random.normal(ks[8], (so,), dtype=jnp.float32) * 0.1
    wv = jax.random.normal(ks[9], (vo, H), dtype=jnp.float32) * 0.1

    s_out, v_out = gvp_linear(s, v, wl, wr, wh, w_dp, b_dp, ws, bs, wv, block_n=256)
    s_out = jax.block_until_ready(s_out)
    v_out = jax.block_until_ready(v_out)

    s_ref, v_ref = _reference(s, v, wl, wr, wh, w_dp, b_dp, ws, bs, wv)
    assert s_out.shape == (N, so) and v_out.shape == (N, vo, 3)
    assert jnp.allclose(s_out, s_ref, atol=1e-3, rtol=1e-3), "scalar output mismatch"
    assert jnp.allclose(v_out, v_ref, atol=1e-3, rtol=1e-3), "vector output mismatch"

    print("KERNEL_OK")
</pallas_src>

<mosaic_0001>
module attributes {stable_mosaic.version = 11 : i64} {
  func.func @_gvp_linear_kernel(%arg0: i32, %arg1: memref<256x16xf32, #tpu.memory_space<vmem>>, %arg2: memref<256x48xf32, #tpu.memory_space<vmem>>, %arg3: memref<16x48xf32, #tpu.memory_space<vmem>>, %arg4: memref<16x32xf32, #tpu.memory_space<vmem>>, %arg5: memref<16x32xf32, #tpu.memory_space<vmem>>, %arg6: memref<1x32xf32, #tpu.memory_space<vmem>>, %arg7: memref<256x32xf32, #tpu.memory_space<vmem>>, %arg8: memref<256x48xf32, #tpu.memory_space<vmem>>) attributes {dimension_semantics = [#tpu.dimension_semantics<parallel>], iteration_bounds = array<i64: 2>, scalar_prefetch = 0 : i64, scratch_operands = 0 : i64, tpu.core_type = #tpu.core_type<tc>, window_params = [{transform_indices = @transform_0, window_bounds = array<i64: 256, 16>}, {transform_indices = @transform_1, window_bounds = array<i64: 256, 48>}, {pipeline_mode = #tpu.pipeline_mode<synchronous>, transform_indices = @transform_2, window_bounds = array<i64: 16, 48>}, {pipeline_mode = #tpu.pipeline_mode<synchronous>, transform_indices = @transform_3, window_bounds = array<i64: 16, 32>}, {pipeline_mode = #tpu.pipeline_mode<synchronous>, transform_indices = @transform_4, window_bounds = array<i64: 16, 32>}, {pipeline_mode = #tpu.pipeline_mode<synchronous>, transform_indices = @transform_5, window_bounds = array<i64: 1, 32>}, {transform_indices = @transform_6, window_bounds = array<i64: 256, 32>}, {transform_indices = @transform_7, window_bounds = array<i64: 256, 48>}]} {
    %c0 = arith.constant 0 : index
    %c0_0 = arith.constant 0 : index
    %0 = vector.load %arg2[%c0, %c0_0] : memref<256x48xf32, #tpu.memory_space<vmem>>, vector<256x48xf32>
    %c0_1 = arith.constant 0 : index
    %c0_2 = arith.constant 0 : index
    %1 = vector.load %arg3[%c0_1, %c0_2] : memref<16x48xf32, #tpu.memory_space<vmem>>, vector<16x48xf32>
    %cst = arith.constant 0.000000e+00 : f32
    %2 = vector.broadcast %cst : f32 to vector<256x16xf32>
    %3 = vector.extract_strided_slice %0 {offsets = [0, 0], sizes = [256, 16], strides = [1, 1]} : vector<256x48xf32> to vector<256x16xf32>
    %cst_3 = arith.constant dense<0.000000e+00> : vector<256x48xf32>
    %4 = tpu.matmul %3, %1, %cst_3 {dimension_numbers = #tpu.dot_dimension_numbers<[1], [0], [0], [1], [0, 0, 1, 1], [], []>} : vector<256x16xf32>, vector<16x48xf32>, vector<256x48xf32> -> vector<256x48xf32>
    %5 = vector.extract_strided_slice %4 {offsets = [0, 0], sizes = [256, 16], strides = [1, 1]} : vector<256x48xf32> to vector<256x16xf32>
    %6 = vector.extract_strided_slice %4 {offsets = [0, 16], sizes = [256, 16], strides = [1, 1]} : vector<256x48xf32> to vector<256x16xf32>
    %7 = arith.mulf %5, %6 : vector<256x16xf32>
    %8 = arith.addf %2, %7 : vector<256x16xf32>
    %9 = vector.extract_strided_slice %4 {offsets = [0, 32], sizes = [256, 16], strides = [1, 1]} : vector<256x48xf32> to vector<256x16xf32>
    %10 = vector.extract_strided_slice %0 {offsets = [0, 16], sizes = [256, 16], strides = [1, 1]} : vector<256x48xf32> to vector<256x16xf32>
    %cst_4 = arith.constant dense<0.000000e+00> : vector<256x48xf32>
    %11 = tpu.matmul %10, %1, %cst_4 {dimension_numbers = #tpu.dot_dimension_numbers<[1], [0], [0], [1], [0, 0, 1, 1], [], []>} : vector<256x16xf32>, vector<16x48xf32>, vector<256x48xf32> -> vector<256x48xf32>
    %12 = vector.extract_strided_slice %11 {offsets = [0, 0], sizes = [256, 16], strides = [1, 1]} : vector<256x48xf32> to vector<256x16xf32>
    %13 = vector.extract_strided_slice %11 {offsets = [0, 16], sizes = [256, 16], strides = [1, 1]} : vector<256x48xf32> to vector<256x16xf32>
    %14 = arith.mulf %12, %13 : vector<256x16xf32>
    %15 = arith.addf %8, %14 : vector<256x16xf32>
    %16 = vector.extract_strided_slice %11 {offsets = [0, 32], sizes = [256, 16], strides = [1, 1]} : vector<256x48xf32> to vector<256x16xf32>
    %17 = vector.extract_strided_slice %0 {offsets = [0, 32], sizes = [256, 16], strides = [1, 1]} : vector<256x48xf32> to vector<256x16xf32>
    %cst_5 = arith.constant dense<0.000000e+00> : vector<256x48xf32>
    %18 = tpu.matmul %17, %1, %cst_5 {dimension_numbers = #tpu.dot_dimension_numbers<[1], [0], [0], [1], [0, 0, 1, 1], [], []>} : vector<256x16xf32>, vector<16x48xf32>, vector<256x48xf32> -> vector<256x48xf32>
    %19 = vector.extract_strided_slice %18 {offsets = [0, 0], sizes = [256, 16], strides = [1, 1]} : vector<256x48xf32> to vector<256x16xf32>
    %20 = vector.extract_strided_slice %18 {offsets = [0, 16], sizes = [256, 16], strides = [1, 1]} : vector<256x48xf32> to vector<256x16xf32>
    %21 = arith.mulf %19, %20 : vector<256x16xf32>
    %22 = arith.addf %15, %21 : vector<256x16xf32>
    %23 = vector.extract_strided_slice %18 {offsets = [0, 32], sizes = [256, 16], strides = [1, 1]} : vector<256x48xf32> to vector<256x16xf32>
    %c0_6 = arith.constant 0 : index
    %c0_7 = arith.constant 0 : index
    %24 = vector.load %arg1[%c0_6, %c0_7] : memref<256x16xf32, #tpu.memory_space<vmem>>, vector<256x16xf32>
    %c0_8 = arith.constant 0 : index
    %c0_9 = arith.constant 0 : index
    %25 = vector.load %arg4[%c0_8, %c0_9] : memref<16x32xf32, #tpu.memory_space<vmem>>, vector<16x32xf32>
    %cst_10 = arith.constant dense<0.000000e+00> : vector<256x32xf32>
    %26 = tpu.matmul %24, %25, %cst_10 {dimension_numbers = #tpu.dot_dimension_numbers<[1], [0], [0], [1], [0, 0, 1, 1], [], []>} : vector<256x16xf32>, vector<16x32xf32>, vector<256x32xf32> -> vector<256x32xf32>
    %c0_11 = arith.constant 0 : index
    %c0_12 = arith.constant 0 : index
    %27 = vector.load %arg5[%c0_11, %c0_12] : memref<16x32xf32, #tpu.memory_space<vmem>>, vector<16x32xf32>
    %cst_13 = arith.constant dense<0.000000e+00> : vector<256x32xf32>
    %28 = tpu.matmul %22, %27, %cst_13 {dimension_numbers = #tpu.dot_dimension_numbers<[1], [0], [0], [1], [0, 0, 1, 1], [], []>} : vector<256x16xf32>, vector<16x32xf32>, vector<256x32xf32> -> vector<256x32xf32>
    %29 = arith.addf %26, %28 : vector<256x32xf32>
    %c0_14 = arith.constant 0 : index
    %c0_15 = arith.constant 0 : index
    %30 = vector.load %arg6[%c0_14, %c0_15] : memref<1x32xf32, #tpu.memory_space<vmem>>, vector<1x32xf32>
    %31 = vector.broadcast %30 : vector<1x32xf32> to vector<256x32xf32>
    %32 = arith.addf %29, %31 : vector<256x32xf32>
    %cst_16 = arith.constant 0.000000e+00 : f32
    %33 = vector.broadcast %cst_16 : f32 to vector<256x32xf32>
    %34 = arith.maximumf %32, %33 : vector<256x32xf32>
    %c0_17 = arith.constant 0 : index
    %c0_18 = arith.constant 0 : index
    %35 = vector.load %arg7[%c0_17, %c0_18] : memref<256x32xf32, #tpu.memory_space<vmem>>, vector<256x32xf32>
    tpu.vector_store %arg7[%c0_17, %c0_18], %34 {strides = array<i32>} : memref<256x32xf32, #tpu.memory_space<vmem>>, vector<256x32xf32>,
    %36 = arith.mulf %9, %9 : vector<256x16xf32>
    %37 = arith.mulf %16, %16 : vector<256x16xf32>
    %38 = arith.addf %36, %37 : vector<256x16xf32>
    %39 = arith.mulf %23, %23 : vector<256x16xf32>
    %40 = arith.addf %38, %39 : vector<256x16xf32>
    %cst_19 = arith.constant 9.99999993E-9 : f32
    %41 = vector.broadcast %cst_19 : f32 to vector<256x16xf32>
    %42 = arith.maximumf %40, %41 : vector<256x16xf32>
    %43 = math.sqrt %42 : vector<256x16xf32>
    %cst_20 = arith.constant 0.000000e+00 : f32
    %44 = vector.broadcast %cst_20 : f32 to vector<256x16xf32>
    %45 = arith.subf %44, %43 : vector<256x16xf32>
    %46 = math.exp %45 : vector<256x16xf32>
    %cst_21 = arith.constant 1.000000e+00 : f32
    %47 = vector.broadcast %cst_21 : f32 to vector<256x16xf32>
    %48 = arith.addf %47, %46 : vector<256x16xf32>
    %cst_22 = arith.constant 1.000000e+00 : f32
    %49 = vector.broadcast %cst_22 : f32 to vector<256x16xf32>
    %50 = arith.divf %49, %48 : vector<256x16xf32>
    %51 = arith.mulf %9, %50 : vector<256x16xf32>
    %52 = arith.mulf %16, %50 : vector<256x16xf32>
    %53 = arith.mulf %23, %50 : vector<256x16xf32>
    %54 = tpu.concatenate %51, %52, %53 in 1 : vector<256x16xf32>, vector<256x16xf32>, vector<256x16xf32> -> vector<256x48xf32>
    %c0_23 = arith.constant 0 : index
    %c0_24 = arith.constant 0 : index
    %55 = vector.load %arg8[%c0_23, %c0_24] : memref<256x48xf32, #tpu.memory_space<vmem>>, vector<256x48xf32>
    tpu.vector_store %arg8[%c0_23, %c0_24], %54 {strides = array<i32>} : memref<256x48xf32, #tpu.memory_space<vmem>>, vector<256x48xf32>,
    return
  }
  func.func @transform_0(%arg0: i32) -> (i32, i32) {
    %c0_i32 = arith.constant 0 : i32
    %c0_i32_0 = arith.constant 0 : i32
    return %arg0, %c0_i32 : i32, i32
  }
  func.func @transform_1(%arg0: i32) -> (i32, i32) {
    %c0_i32 = arith.constant 0 : i32
    %c0_i32_0 = arith.constant 0 : i32
    return %arg0, %c0_i32 : i32, i32
  }
  func.func @transform_2(%arg0: i32) -> (i32, i32) {
    %c0_i32 = arith.constant 0 : i32
    %c0_i32_0 = arith.constant 0 : i32
    %c0_i32_1 = arith.constant 0 : i32
    return %c0_i32, %c0_i32_0 : i32, i32
  }
  func.func @transform_3(%arg0: i32) -> (i32, i32) {
    %c0_i32 = arith.constant 0 : i32
    %c0_i32_0 = arith.constant 0 : i32
    %c0_i32_1 = arith.constant 0 : i32
    return %c0_i32, %c0_i32_0 : i32, i32
  }
  func.func @transform_4(%arg0: i32) -> (i32, i32) {
    %c0_i32 = arith.constant 0 : i32
    %c0_i32_0 = arith.constant 0 : i32
    %c0_i32_1 = arith.constant 0 : i32
    return %c0_i32, %c0_i32_0 : i32, i32
  }
  func.func @transform_5(%arg0: i32) -> (i32, i32) {
    %c0_i32 = arith.constant 0 : i32
    %c0_i32_0 = arith.constant 0 : i32
    %c0_i32_1 = arith.constant 0 : i32
    return %c0_i32, %c0_i32_0 : i32, i32
  }
  func.func @transform_6(%arg0: i32) -> (i32, i32) {
    %c0_i32 = arith.constant 0 : i32
    %c0_i32_0 = arith.constant 0 : i32
    return %arg0, %c0_i32 : i32, i32
  }
  func.func @transform_7(%arg0: i32) -> (i32, i32) {
    %c0_i32 = arith.constant 0 : i32
    %c0_i32_0 = arith.constant 0 : i32
    return %arg0, %c0_i32 : i32, i32
  }
}

</mosaic_0001>

<llo_original>
// kernel: tpu_custom_call.1
$region0: #{tpu_custom_call.1}
  #allocation0 [shape = 'u32[]', space=smem, size = 0x4, offset = 0x4, fixed_abs, tag = 'smem constant byte address 0x4 - core index']
  #allocation1 [shape = 'u32[144,128]{1,0:T(1,128)}', space=vmem, size = 0x12000, scoped, tag = 'internal scratch']
  %s0 = inlined_call_operand.vmem [shape: f32[512,16], index: 0, kind: input, shape index: {}]
  %s1 = inlined_call_operand.vmem [shape: f32[512,48], index: 1, kind: input, shape index: {}]
  %s2 = inlined_call_operand.vmem [shape: f32[16,48], index: 2, kind: input, shape index: {}]
  %s3 = inlined_call_operand.vmem [shape: f32[16,32], index: 3, kind: input, shape index: {}]
  %s4 = inlined_call_operand.vmem [shape: f32[16,32], index: 4, kind: input, shape index: {}]
  %s5 = inlined_call_operand.vmem [shape: f32[1,32], index: 5, kind: input, shape index: {}]
  %s6 = inlined_call_operand.vmem [shape: f32[512,32], index: 6, kind: output, shape index: {0}]
  %s7 = inlined_call_operand.vmem [shape: f32[512,48], index: 7, kind: output, shape index: {1}]
  %8 = xla_tuple %s6, %s7
  %s9 = sld [smem:[#allocation0]]
  $region65: #{tpu_custom_call.1} parent=0
    _
  %s11 = ssub.s32 1, %s9
  %s12 = scalar_select 0, %s11, %s9
  loop: start=0, step=1, limit=4
  $region2: #{tpu_custom_call.1} parent=0 // loop_pre_header
    _
  $region3: #{tpu_custom_call.1} parent=0 // loop_header
    %s14 = sphi 0, %s18
    %p15 = scmp.ge.s32.totalorder %s14, 4
    %s24 = sphi 0, %s26
    %s27 = sphi 0, %s24
    %s28 = sphi 0, %s27
    %s44 = sphi 0, %s28
    %s50 = sphi 0, %s52
    %s53 = sphi 0, %s50
    %s54 = sphi 0, %s53
    %s70 = sphi 0, %s54
    %s74 = sphi 0, %s74
    %s76 = sphi 0, %s74
    %s77 = sphi 0, %s76
    %s91 = sphi 0, %s77
    %s95 = sphi 0, %s95
    %s97 = sphi 0, %s95
    %s98 = sphi 0, %s97
    %s112 = sphi 0, %s98
    %s116 = sphi 0, %s116
    %s118 = sphi 0, %s116
    %s119 = sphi 0, %s118
    %s133 = sphi 0, %s119
    %s137 = sphi 0, %s137
    %s139 = sphi 0, %s137
    %s140 = sphi 0, %s139
    %s154 = sphi 0, %s140
    %s160 = sphi 0, %s162
    %s163 = sphi 0, %s160
    %s164 = sphi 0, %s163
    %s180 = sphi 0, %s164
    %s186 = sphi 0, %s188
    %s189 = sphi 0, %s186
    %s190 = sphi 0, %s189
    %s206 = sphi 0, %s190
  $region4: #{tpu_custom_call.1} parent=0 // loop_header_branch
    %17 = sbr.rel (%p15) target = $region8
  $region5: #{tpu_custom_call.1} parent=0 // loop_body
    %s19 = ssub.s32 %s14, 1
    %s20 = ssub.s32 %s14, 2
    %s21 = sadd.s32 %s14, 1
    %s22 = ssub.s32 %s14, %s21
    %p23 = scmp.eq.s32.totalorder %s22, 0
    %s25 = sadd.s32 %s24, 1
    %s26 = scalar_select %p23, %s24, %s25
    %p29 = pneg %p23
    %p30 = scmp.eq.s32.totalorder %s14, 1
    %p31 = por %p29, %p30
    %p32 = scmp.ne.s32.totalorder %s24, %s27
    %p33 = scmp.eq.s32.totalorder %s14, 0
    %p34 = por %p32, %p33
    %p35 = scmp.ne.s32.totalorder %s24, %s27
    %p36 = scmp.eq.s32.totalorder %s19, 1
    %p37 = por %p35, %p36
    %p38 = scmp.ne.s32.totalorder %s27, %s28
    %p39 = scmp.eq.s32.totalorder %s19, 0
    %p40 = por %p38, %p39
    %p41 = scmp.ne.s32.totalorder %s27, %s28
    %p42 = scmp.eq.s32.totalorder %s20, 1
    %p43 = por %p41, %p42
    %p45 = scmp.ne.s32.totalorder %s28, %s44
    %p46 = scmp.eq.s32.totalorder %s20, 0
    %p47 = por %p45, %p46
    %s48 = ssub.s32 %s14, %s21
    %p49 = scmp.eq.s32.totalorder %s48, 0
    %s51 = sadd.s32 %s50, 1
    %s52 = scalar_select %p49, %s50, %s51
    %p55 = pneg %p49
    %p56 = scmp.eq.s32.totalorder %s14, 1
    %p57 = por %p55, %p56
    %p58 = scmp.ne.s32.totalorder %s50, %s53
    %p59 = scmp.eq.s32.totalorder %s14, 0
    %p60 = por %p58, %p59
    %p61 = scmp.ne.s32.totalorder %s50, %s53
    %p62 = scmp.eq.s32.totalorder %s19, 1
    %p63 = por %p61, %p62
    %p64 = scmp.ne.s32.totalorder %s53, %s54
    %p65 = scmp.eq.s32.totalorder %s19, 0
    %p66 = por %p64, %p65
    %p67 = scmp.ne.s32.totalorder %s53, %s54
    %p68 = scmp.eq.s32.totalorder %s20, 1
    %p69 = por %p67, %p68
    %p71 = scmp.ne.s32.totalorder %s54, %s70
    %p72 = scmp.eq.s32.totalorder %s20, 0
    %p73 = por %p71, %p72
    %s75 = sadd.s32 %s74, 1
    %p78 = scmp.eq.s32.totalorder %s14, 1
    %p79 = scmp.ne.s32.totalorder %s74, %s76
    %p80 = scmp.eq.s32.totalorder %s14, 0
    %p81 = por %p79, %p80
    %p82 = scmp.ne.s32.totalorder %s74, %s76
    %p83 = scmp.eq.s32.totalorder %s19, 1
    %p84 = por %p82, %p83
    %p85 = scmp.ne.s32.totalorder %s76, %s77
    %p86 = scmp.eq.s32.totalorder %s19, 0
    %p87 = por %p85, %p86
    %p88 = scmp.ne.s32.totalorder %s76, %s77
    %p89 = scmp.eq.s32.totalorder %s20, 1
    %p90 = por %p88, %p89
    %p92 = scmp.ne.s32.totalorder %s77, %s91
    %p93 = scmp.eq.s32.totalorder %s20, 0
    %p94 = por %p92, %p93
    %s96 = sadd.s32 %s95, 1
    %p99 = scmp.eq.s32.totalorder %s14, 1
    %p100 = scmp.ne.s32.totalorder %s95, %s97
    %p101 = scmp.eq.s32.totalorder %s14, 0
    %p102 = por %p100, %p101
    %p103 = scmp.ne.s32.totalorder %s95, %s97
    %p104 = scmp.eq.s32.totalorder %s19, 1
    %p105 = por %p103, %p104
    %p106 = scmp.ne.s32.totalorder %s97, %s98
    %p107 = scmp.eq.s32.totalorder %s19, 0
    %p108 = por %p106, %p107
    %p109 = scmp.ne.s32.totalorder %s97, %s98
    %p110 = scmp.eq.s32.totalorder %s20, 1
    %p111 = por %p109, %p110
    %p113 = scmp.ne.s32.totalorder %s98, %s112
    %p114 = scmp.eq.s32.totalorder %s20, 0
    %p115 = por %p113, %p114
    %s117 = sadd.s32 %s116, 1
    %p120 = scmp.eq.s32.totalorder %s14, 1
    %p121 = scmp.ne.s32.totalorder %s116, %s118
    %p122 = scmp.eq.s32.totalorder %s14, 0
    %p123 = por %p121, %p122
    %p124 = scmp.ne.s32.totalorder %s116, %s118
    %p125 = scmp.eq.s32.totalorder %s19, 1
    %p126 = por %p124, %p125
    %p127 = scmp.ne.s32.totalorder %s118, %s119
    %p128 = scmp.eq.s32.totalorder %s19, 0
    %p129 = por %p127, %p128
    %p130 = scmp.ne.s32.totalorder %s118, %s119
    %p131 = scmp.eq.s32.totalorder %s20, 1
    %p132 = por %p130, %p131
    %p134 = scmp.ne.s32.totalorder %s119, %s133
    %p135 = scmp.eq.s32.totalorder %s20, 0
    %p136 = por %p134, %p135
    %s138 = sadd.s32 %s137, 1
    %p141 = scmp.eq.s32.totalorder %s14, 1
    %p142 = scmp.ne.s32.totalorder %s137, %s139
    %p143 = scmp.eq.s32.totalorder %s14, 0
    %p144 = por %p142, %p143
    %p145 = scmp.ne.s32.totalorder %s137, %s139
    %p146 = scmp.eq.s32.totalorder %s19, 1
    %p147 = por %p145, %p146
    %p148 = scmp.ne.s32.totalorder %s139, %s140
    %p149 = scmp.eq.s32.totalorder %s19, 0
    %p150 = por %p148, %p149
    %p151 = scmp.ne.s32.totalorder %s139, %s140
    %p152 = scmp.eq.s32.totalorder %s20, 1
    %p153 = por %p151, %p152
    %p155 = scmp.ne.s32.totalorder %s140, %s154
    %p156 = scmp.eq.s32.totalorder %s20, 0
    %p157 = por %p155, %p156
    %s158 = ssub.s32 %s14, %s21
    %p159 = scmp.eq.s32.totalorder %s158, 0
    %s161 = sadd.s32 %s160, 1
    %s162 = scalar_select %p159, %s160, %s161
    %p165 = pneg %p159
    %p166 = scmp.eq.s32.totalorder %s14, 1
    %p167 = por %p165, %p166
    %p168 = scmp.ne.s32.totalorder %s160, %s163
    %p169 = scmp.eq.s32.totalorder %s14, 0
    %p170 = por %p168, %p169
    %p171 = scmp.ne.s32.totalorder %s160, %s163
    %p172 = scmp.eq.s32.totalorder %s19, 1
    %p173 = por %p171, %p172
    %p174 = scmp.ne.s32.totalorder %s163, %s164
    %p175 = scmp.eq.s32.totalorder %s19, 0
    %p176 = por %p174, %p175
    %p177 = scmp.ne.s32.totalorder %s163, %s164
    %p178 = scmp.eq.s32.totalorder %s20, 1
    %p179 = por %p177, %p178
    %p181 = scmp.ne.s32.totalorder %s164, %s180
    %p182 = scmp.eq.s32.totalorder %s20, 0
    %p183 = por %p181, %p182
    %s184 = ssub.s32 %s14, %s21
    %p185 = scmp.eq.s32.totalorder %s184, 0
    %s187 = sadd.s32 %s186, 1
    %s188 = scalar_select %p185, %s186, %s187
    %p191 = pneg %p185
    %p192 = scmp.eq.s32.totalorder %s14, 1
    %p193 = por %p191, %p192
    %p194 = scmp.ne.s32.totalorder %s186, %s189
    %p195 = scmp.eq.s32.totalorder %s14, 0
    %p196 = por %p194, %p195
    %p197 = scmp.ne.s32.totalorder %s186, %s189
    %p198 = scmp.eq.s32.totalorder %s19, 1
    %p199 = por %p197, %p198
    %p200 = scmp.ne.s32.totalorder %s189, %s190
    %p201 = scmp.eq.s32.totalorder %s19, 0
    %p202 = por %p200, %p201
    %p203 = scmp.ne.s32.totalorder %s189, %s190
    %p204 = scmp.eq.s32.totalorder %s20, 1
    %p205 = por %p203, %p204
    %p207 = scmp.ne.s32.totalorder %s190, %s206
    %p208 = scmp.eq.s32.totalorder %s20, 0
    %p209 = por %p207, %p208
    %p210 = scmp.le.s32.totalorder 1, %s14
    %p211 = scmp.lt.s32.totalorder %s14, 3
    %p212 = pnand %p210, %p211
    %p213 = pneg %p212
    // Predicated region
    $region9: #{tpu_custom_call.1} parent=5 // pred_check
      _
    $region10: #{tpu_custom_call.1} parent=5 // pred_check_branch
      %215 = sbr.rel (%p212) target = $region12
    $region11: #{tpu_custom_call.1} parent=5 // pred_region
      %s216 = ssub.s32 %s14, 1
      // Predicated region
      $region13: #{tpu_custom_call.1} parent=11 // pred_check
        %p217 = pneg %p87
      $region14: #{tpu_custom_call.1} parent=11 // pred_check_branch
        %219 = sbr.rel (%p217) target = $region16
      $region15: #{tpu_custom_call.1} parent=11 // pred_region
        _
      $region16: #{tpu_custom_call.1} parent=11 // pred_fallthru
        _
      // Predicated region
      $region17: #{tpu_custom_call.1} parent=11 // pred_check
        %p220 = pneg %p108
      $region18: #{tpu_custom_call.1} parent=11 // pred_check_branch
        %222 = sbr.rel (%p220) target = $region20
      $region19: #{tpu_custom_call.1} parent=11 // pred_region
        _
      $region20: #{tpu_custom_call.1} parent=11 // pred_fallthru
        _
      // Predicated region
      $region21: #{tpu_custom_call.1} parent=11 // pred_check
        %p223 = pneg %p129
      $region22: #{tpu_custom_call.1} parent=11 // pred_check_branch
        %225 = sbr.rel (%p223) target = $region24
      $region23: #{tpu_custom_call.1} parent=11 // pred_region
        _
      $region24: #{tpu_custom_call.1} parent=11 // pred_fallthru
        _
      // Predicated region
      $region25: #{tpu_custom_call.1} parent=11 // pred_check
        %p226 = pneg %p150
      $region26: #{tpu_custom_call.1} parent=11 // pred_check_branch
        %228 = sbr.rel (%p226) target = $region28
      $region27: #{tpu_custom_call.1} parent=11 // pred_region
        _
      $region28: #{tpu_custom_call.1} parent=11 // pred_fallthru
        _
    $region12: #{tpu_custom_call.1} parent=5 // pred_fallthru
      _
    %p229 = scmp.lt.s32.totalorder %s14, 2
    // Predicated region
    $region29: #{tpu_custom_call.1} parent=5 // pred_check
      %p230 = pneg %p229
    $region30: #{tpu_custom_call.1} parent=5 // pred_check_branch
      %232 = sbr.rel (%p230) target = $region32
    $region31: #{tpu_custom_call.1} parent=5 // pred_region
      // Predicated region
      $region33: #{tpu_custom_call.1} parent=31 // pred_check
        %p233 = pneg %p34
      $region34: #{tpu_custom_call.1} parent=31 // pred_check_branch
        %235 = sbr.rel (%p233) target = $region36
      $region35: #{tpu_custom_call.1} parent=31 // pred_region
        %s236 = smul.u32 32, %s14
        %p237 = scmp.lt.s32.totalorder %s236, 63
        %s238 = scalar_select %p237, %s236, 63
        %s239 = smul.addr %s238, 8
        %s240 = scalar_lea.vmem %s0, %s239
        %s241 = smul.u32 32, %s14
      $region36: #{tpu_custom_call.1} parent=31 // pred_fallthru
        _
      // Predicated region
      $region37: #{tpu_custom_call.1} parent=31 // pred_check
        %p242 = pneg %p60
      $region38: #{tpu_custom_call.1} parent=31 // pred_check_branch
        %244 = sbr.rel (%p242) target = $region40
      $region39: #{tpu_custom_call.1} parent=31 // pred_region
        %s245 = smul.u32 32, %s14
        %p246 = scmp.lt.s32.totalorder %s245, 63
        %s247 = scalar_select %p246, %s245, 63
        %s248 = smul.addr %s247, 8
        %s249 = scalar_lea.vmem %s1, %s248
        %s250 = smul.u32 32, %s14
      $region40: #{tpu_custom_call.1} parent=31 // pred_fallthru
        _
    $region32: #{tpu_custom_call.1} parent=5 // pred_fallthru
      _
    %p251 = scmp.le.s32.totalorder 1, %s14
    %p252 = scmp.lt.s32.totalorder %s14, 3
    %p253 = pnand %p251, %p252
    %p254 = pneg %p253
    // Predicated region
    $region41: #{tpu_custom_call.1} parent=5 // pred_check
      _
    $region42: #{tpu_custom_call.1} parent=5 // pred_check_branch
      %256 = sbr.rel (%p253) target = $region44
    $region43: #{tpu_custom_call.1} parent=5 // pred_region
      %s257 = ssub.s32 %s14, 1
      %s258 = smul.u32 32, %s19
      %p259 = scmp.lt.s32.totalorder %s258, 63
      %s260 = scalar_select %p259, %s258, 63
      %s261 = smul.addr %s260, 8
      %s262 = scalar_lea.vmem %s0, %s261
      %p263 = pneg %p40
      %p264 = pneg %p37
      %s265 = smul.u32 32, %s19
      %p266 = scmp.lt.s32.totalorder %s265, 63
      %s267 = scalar_select %p266, %s265, 63
      %s268 = smul.addr %s267, 8
      %s269 = scalar_lea.vmem %s1, %s268
      %p270 = pneg %p66
      %p271 = pneg %p63
      %p272 = pneg %p87
      %p273 = pneg %p84
      %p274 = pneg %p108
      %p275 = pneg %p105
      %p276 = pneg %p129
      %p277 = pneg %p126
      %p278 = pneg %p150
      %p279 = pneg %p147
      %p280 = pneg %p176
      %p281 = pneg %p173
      %s282 = smul.u32 32, %s19
      %p283 = scmp.lt.s32.totalorder %s282, 63
      %s284 = scalar_select %p283, %s282, 63
      %s285 = smul.addr %s284, 8
      %s286 = scalar_lea.vmem %s6, %s285
      %p287 = pneg %p202
      %p288 = pneg %p199
      %s289 = smul.u32 32, %s19
      %p290 = scmp.lt.s32.totalorder %s289, 63
      %s291 = scalar_select %p290, %s289, 63
      %s292 = smul.addr %s291, 8
      %s293 = scalar_lea.vmem %s7, %s292
      %s294 = smul.u32 32, %s19
      %p295 = scmp.lt.s32.totalorder %s294, 63
      %s296 = scalar_select %p295, %s294, 63
      %s297 = smul.addr %s296, 8
      %s298 = scalar_lea.vmem %s0, %s297
      %s299 = smul.u32 32, %s19
      %s300 = smul.u32 32, %s19
      %p301 = scmp.lt.s32.totalorder %s300, 63
      %s302 = scalar_select %p301, %s300, 63
      %s303 = smul.addr %s302, 8
      %s304 = scalar_lea.vmem %s1, %s303
      %s305 = smul.u32 32, %s19
      %s306 = smul.u32 32, %s19
      %p307 = scmp.lt.s32.totalorder %s306, 63
      %s308 = scalar_select %p307, %s306, 63
      %s309 = smul.addr %s308, 8
      %s310 = scalar_lea.vmem %s6, %s309
      %s311 = smul.u32 32, %s19
      %s312 = smul.u32 32, %s19
      %p313 = scmp.lt.s32.totalorder %s312, 63
      %s314 = scalar_select %p313, %s312, 63
      %s315 = smul.addr %s314, 8
      %s316 = scalar_lea.vmem %s7, %s315
      %s317 = smul.u32 32, %s19
      %v318 = vld [vmem:[%s304] sm:$0xff]
      %v319 = vld [vmem:[%s304 + $0x8] sm:$0xff]
      %v320 = vld [vmem:[%s304 + $0x10] sm:$0xff]
      %v321 = vld [vmem:[%s304 + $0x18] sm:$0xff]
      %v322 = vld [vmem:[%s304 + $0x20] sm:$0xff]
      %v323 = vld [vmem:[%s304 + $0x28] sm:$0xff]
      %v324 = vld [vmem:[%s304 + $0x30] sm:$0xff]
      %v325 = vld [vmem:[%s304 + $0x38] sm:$0xff]
      %v326 = vld [vmem:[%s304 + $0x40] sm:$0xff]
      %v327 = vld [vmem:[%s304 + $0x48] sm:$0xff]
      %v328 = vld [vmem:[%s304 + $0x50] sm:$0xff]
      %v329 = vld [vmem:[%s304 + $0x58] sm:$0xff]
      %v330 = vld [vmem:[%s304 + $0x60] sm:$0xff]
      %v331 = vld [vmem:[%s304 + $0x68] sm:$0xff]
      %v332 = vld [vmem:[%s304 + $0x70] sm:$0xff]
      %v333 = vld [vmem:[%s304 + $0x78] sm:$0xff]
      %v334 = vld [vmem:[%s304 + $0x80] sm:$0xff]
      %v335 = vld [vmem:[%s304 + $0x88] sm:$0xff]
      %v336 = vld [vmem:[%s304 + $0x90] sm:$0xff]
      %v337 = vld [vmem:[%s304 + $0x98] sm:$0xff]
      %v338 = vld [vmem:[%s304 + $0xa0] sm:$0xff]
      %v339 = vld [vmem:[%s304 + $0xa8] sm:$0xff]
      %v340 = vld [vmem:[%s304 + $0xb0] sm:$0xff]
      %v341 = vld [vmem:[%s304 + $0xb8] sm:$0xff]
      %v342 = vld [vmem:[%s304 + $0xc0] sm:$0xff]
      %v343 = vld [vmem:[%s304 + $0xc8] sm:$0xff]
      %v344 = vld [vmem:[%s304 + $0xd0] sm:$0xff]
      %v345 = vld [vmem:[%s304 + $0xd8] sm:$0xff]
      %v346 = vld [vmem:[%s304 + $0xe0] sm:$0xff]
      %v347 = vld [vmem:[%s304 + $0xe8] sm:$0xff]
      %v348 = vld [vmem:[%s304 + $0xf0] sm:$0xff]
      %v349 = vld [vmem:[%s304 + $0xf8] sm:$0xff]
      %v350 = vld [vmem:[%s2] sm:$0xff]
      %v351 = vld [vmem:[%s2 + $0x8] sm:$0xff]
      %vm352 = vcmask 130048
      %v354 = vsel %vm352, %v318, 0
      %v357 = vsel %vm352, %v319, 0
      %v360 = vsel %vm352, %v320, 0
      %v363 = vsel %vm352, %v321, 0
      %v366 = vsel %vm352, %v322, 0
      %v369 = vsel %vm352, %v323, 0
      %v372 = vsel %vm352, %v324, 0
      %v375 = vsel %vm352, %v325, 0
      %v378 = vsel %vm352, %v326, 0
      %v381 = vsel %vm352, %v327, 0
      %v384 = vsel %vm352, %v328, 0
      %v387 = vsel %vm352, %v329, 0
      %v390 = vsel %vm352, %v330, 0
      %v393 = vsel %vm352, %v331, 0
      %v396 = vsel %vm352, %v332, 0
      %v399 = vsel %vm352, %v333, 0
      %v402 = vsel %vm352, %v334, 0
      %v405 = vsel %vm352, %v335, 0
      %v408 = vsel %vm352, %v336, 0
      %v411 = vsel %vm352, %v337, 0
      %v414 = vsel %vm352, %v338, 0
      %v417 = vsel %vm352, %v339, 0
      %v420 = vsel %vm352, %v340, 0
      %v423 = vsel %vm352, %v341, 0
      %v426 = vsel %vm352, %v342, 0
      %v429 = vsel %vm352, %v343, 0
      %v432 = vsel %vm352, %v344, 0
      %v435 = vsel %vm352, %v345, 0
      %v438 = vsel %vm352, %v346, 0
      %v441 = vsel %vm352, %v347, 0
      %v444 = vsel %vm352, %v348, 0
      %v447 = vsel %vm352, %v349, 0
      %449 = vmatprep.subr.mxu0 0.0
      %450 = vmatpush1.msra.mxu0 0.0
      %451 = vmatprep.subr.mxu0 0.0
      %452 = vmatpush1.msra.mxu0 0.0
      %453 = vmatprep.subr.mxu0 0.0
      %454 = vmatpush1.msra.mxu0 0.0
      %455 = vmatprep.subr.mxu0 0.0
      %456 = vmatpush1.msra.mxu0 0.0
      %457 = vmatprep.subr.mxu0 0.0
      %458 = vmatpush1.msra.mxu0 0.0
      %459 = vmatprep.subr.mxu0 0.0
      %460 = vmatpush1.msra.mxu0 0.0
      %461 = vmatprep.subr.mxu0 0.0
      %462 = vmatpush1.msra.mxu0 0.0
      %463 = vmatprep.subr.mxu0 0.0
      %464 = vmatpush1.msra.mxu0 0.0
      %465 = vmatprep.subr.mxu0 0.0
      %466 = vmatpush1.msra.mxu0 0.0
      %467 = vmatprep.subr.mxu0 0.0
      %468 = vmatpush1.msra.mxu0 0.0
      %469 = vmatprep.subr.mxu0 0.0
      %470 = vmatpush1.msra.mxu0 0.0
      %471 = vmatprep.subr.mxu0 0.0
      %472 = vmatpush1.msra.mxu0 0.0
      %473 = vmatprep.subr.mxu0 0.0
      %474 = vmatpush1.msra.mxu0 0.0
      %475 = vmatprep.subr.mxu0 0.0
      %476 = vmatpush1.msra.mxu0 0.0
      %477 = vmatprep.subr.mxu0 0.0
      %478 = vmatpush1.msra.mxu0 %v351
      %479 = vmatprep.subr.mxu0 0.0
      %480 = vmatpush1.msra.mxu0 %v350
      %481 = vmatprep.subr.mxu0 0.0
      %482 = vmatpush2.msra.mxu0 0.0
      %483 = vmatprep.subr.mxu0 0.0
      %484 = vmatpush2.msra.mxu0 0.0
      %485 = vmatprep.subr.mxu0 0.0
      %486 = vmatpush2.msra.mxu0 0.0
      %487 = vmatprep.subr.mxu0 0.0
      %488 = vmatpush2.msra.mxu0 0.0
      %489 = vmatprep.subr.mxu0 0.0
      %490 = vmatpush2.msra.mxu0 0.0
      %491 = vmatprep.subr.mxu0 0.0
      %492 = vmatpush2.msra.mxu0 0.0
      %493 = vmatprep.subr.mxu0 0.0
      %494 = vmatpush2.msra.mxu0 0.0
      %495 = vmatprep.subr.mxu0 0.0
      %496 = vmatpush2.msra.mxu0 0.0
      %497 = vmatprep.subr.mxu0 0.0
      %498 = vmatpush2.msra.mxu0 0.0
      %499 = vmatprep.subr.mxu0 0.0
      %500 = vmatpush2.msra.mxu0 0.0
      %501 = vmatprep.subr.mxu0 0.0
      %502 = vmatpush2.msra.mxu0 0.0
      %503 = vmatprep.subr.mxu0 0.0
      %504 = vmatpush2.msra.mxu0 0.0
      %505 = vmatprep.subr.mxu0 0.0
      %506 = vmatpush2.msra.mxu0 0.0
      %507 = vmatprep.subr.mxu0 0.0
      %508 = vmatpush2.msra.mxu0 0.0
      %509 = vmatprep.subr.mxu0 0.0
      %510 = vmatpush2.msra.mxu0 0.0
      %511 = vmatprep.subr.mxu0 0.0
      %512 = vmatpush2.msra.mxu0 0.0
      %513 = vmatprep.mubr.f32.mxu0 0.0
      %514 = vmatmul.mubr.f32.gmra.mxu0 %v354
      %v515 = vpop.f32.mrf.mxu0
      %v516 = vadd.f32 0.0, %v515
      %v517 = vpop.f32.mrf.mxu0
      %518 = vmatprep.mubr.f32.mxu0 0.0
      %519 = vmatmul.mubr.f32.gmra.mxu0 %v357
      %v520 = vpop.f32.mrf.mxu0
      %v521 = vadd.f32 0.0, %v520
      %v522 = vpop.f32.mrf.mxu0
      %523 = vmatprep.mubr.f32.mxu0 0.0
      %524 = vmatmul.mubr.f32.gmra.mxu0 %v360
      %v525 = vpop.f32.mrf.mxu0
      %v526 = vadd.f32 0.0, %v525
      %v527 = vpop.f32.mrf.mxu0
      %528 = vmatprep.mubr.f32.mxu0 0.0
      %529 = vmatmul.mubr.f32.gmra.mxu0 %v363
      %v530 = vpop.f32.mrf.mxu0
      %v531 = vadd.f32 0.0, %v530
      %v532 = vpop.f32.mrf.mxu0
      %533 = vmatprep.mubr.f32.mxu0 0.0
      %534 = vmatmul.mubr.f32.gmra.mxu0 %v366
      %v535 = vpop.f32.mrf.mxu0
      %v536 = vadd.f32 0.0, %v535
      %v537 = vpop.f32.mrf.mxu0
      %538 = vmatprep.mubr.f32.mxu0 0.0
      %539 = vmatmul.mubr.f32.gmra.mxu0 %v369
      %v540 = vpop.f32.mrf.mxu0
      %v541 = vadd.f32 0.0, %v540
      %v542 = vpop.f32.mrf.mxu0
      %543 = vmatprep.mubr.f32.mxu0 0.0
      %544 = vmatmul.mubr.f32.gmra.mxu0 %v372
      %v545 = vpop.f32.mrf.mxu0
      %v546 = vadd.f32 0.0, %v545
      %v547 = vpop.f32.mrf.mxu0
      %548 = vmatprep.mubr.f32.mxu0 0.0
      %549 = vmatmul.mubr.f32.gmra.mxu0 %v375
      %v550 = vpop.f32.mrf.mxu0
      %v551 = vadd.f32 0.0, %v550
      %v552 = vpop.f32.mrf.mxu0
      %553 = vmatprep.mubr.f32.mxu0 0.0
      %554 = vmatmul.mubr.f32.gmra.mxu0 %v378
      %v555 = vpop.f32.mrf.mxu0
      %v556 = vadd.f32 0.0, %v555
      %v557 = vpop.f32.mrf.mxu0
      %558 = vmatprep.mubr.f32.mxu0 0.0
      %559 = vmatmul.mubr.f32.gmra.mxu0 %v381
      %v560 = vpop.f32.mrf.mxu0
      %v561 = vadd.f32 0.0, %v560
      %v562 = vpop.f32.mrf.mxu0
      %563 = vmatprep.mubr.f32.mxu0 0.0
      %564 = vmatmul.mubr.f32.gmra.mxu0 %v384
      %v565 = vpop.f32.mrf.mxu0
      %v566 = vadd.f32 0.0, %v565
      %v567 = vpop.f32.mrf.mxu0
      %568 = vmatprep.mubr.f32.mxu0 0.0
      %569 = vmatmul.mubr.f32.gmra.mxu0 %v387
      %v570 = vpop.f32.mrf.mxu0
      %v571 = vadd.f32 0.0, %v570
      %v572 = vpop.f32.mrf.mxu0
      %573 = vmatprep.mubr.f32.mxu0 0.0
      %574 = vmatmul.mubr.f32.gmra.mxu0 %v390
      %v575 = vpop.f32.mrf.mxu0
      %v576 = vadd.f32 0.0, %v575
      %v577 = vpop.f32.mrf.mxu0
      %578 = vmatprep.mubr.f32.mxu0 0.0
      %579 = vmatmul.mubr.f32.gmra.mxu0 %v393
      %v580 = vpop.f32.mrf.mxu0
      %v581 = vadd.f32 0.0, %v580
      %v582 = vpop.f32.mrf.mxu0
      %583 = vmatprep.mubr.f32.mxu0 0.0
      %584 = vmatmul.mubr.f32.gmra.mxu0 %v396
      %v585 = vpop.f32.mrf.mxu0
      %v586 = vadd.f32 0.0, %v585
      %v587 = vpop.f32.mrf.mxu0
      %588 = vmatprep.mubr.f32.mxu0 0.0
      %589 = vmatmul.mubr.f32.gmra.mxu0 %v399
      %v590 = vpop.f32.mrf.mxu0
      %v591 = vadd.f32 0.0, %v590
      %v592 = vpop.f32.mrf.mxu0
      %593 = vmatprep.mubr.f32.mxu0 0.0
      %594 = vmatmul.mubr.f32.gmra.mxu0 %v402
      %v595 = vpop.f32.mrf.mxu0
      %v596 = vadd.f32 0.0, %v595
      %v597 = vpop.f32.mrf.mxu0
      %598 = vmatprep.mubr.f32.mxu0 0.0
      %599 = vmatmul.mubr.f32.gmra.mxu0 %v405
      %v600 = vpop.f32.mrf.mxu0
      %v601 = vadd.f32 0.0, %v600
      %v602 = vpop.f32.mrf.mxu0
      %603 = vmatprep.mubr.f32.mxu0 0.0
      %604 = vmatmul.mubr.f32.gmra.mxu0 %v408
      %v605 = vpop.f32.mrf.mxu0
      %v606 = vadd.f32 0.0, %v605
      %v607 = vpop.f32.mrf.mxu0
      %608 = vmatprep.mubr.f32.mxu0 0.0
      %609 = vmatmul.mubr.f32.gmra.mxu0 %v411
      %v610 = vpop.f32.mrf.mxu0
      %v611 = vadd.f32 0.0, %v610
      %v612 = vpop.f32.mrf.mxu0
      %613 = vmatprep.mubr.f32.mxu0 0.0
      %614 = vmatmul.mubr.f32.gmra.mxu0 %v414
      %v615 = vpop.f32.mrf.mxu0
      %v616 = vadd.f32 0.0, %v615
      %v617 = vpop.f32.mrf.mxu0
      %618 = vmatprep.mubr.f32.mxu0 0.0
      %619 = vmatmul.mubr.f32.gmra.mxu0 %v417
      %v620 = vpop.f32.mrf.mxu0
      %v621 = vadd.f32 0.0, %v620
      %v622 = vpop.f32.mrf.mxu0
      %623 = vmatprep.mubr.f32.mxu0 0.0
      %624 = vmatmul.mubr.f32.gmra.mxu0 %v420
      %v625 = vpop.f32.mrf.mxu0
      %v626 = vadd.f32 0.0, %v625
      %v627 = vpop.f32.mrf.mxu0
      %628 = vmatprep.mubr.f32.mxu0 0.0
      %629 = vmatmul.mubr.f32.gmra.mxu0 %v423
      %v630 = vpop.f32.mrf.mxu0
      %v631 = vadd.f32 0.0, %v630
      %v632 = vpop.f32.mrf.mxu0
      %633 = vmatprep.mubr.f32.mxu0 0.0
      %634 = vmatmul.mubr.f32.gmra.mxu0 %v426
      %v635 = vpop.f32.mrf.mxu0
      %v636 = vadd.f32 0.0, %v635
      %v637 = vpop.f32.mrf.mxu0
      %638 = vmatprep.mubr.f32.mxu0 0.0
      %639 = vmatmul.mubr.f32.gmra.mxu0 %v429
      %v640 = vpop.f32.mrf.mxu0
      %v641 = vadd.f32 0.0, %v640
      %v642 = vpop.f32.mrf.mxu0
      %643 = vmatprep.mubr.f32.mxu0 0.0
      %644 = vmatmul.mubr.f32.gmra.mxu0 %v432
      %v645 = vpop.f32.mrf.mxu0
      %v646 = vadd.f32 0.0, %v645
      %v647 = vpop.f32.mrf.mxu0
      %648 = vmatprep.mubr.f32.mxu0 0.0
      %649 = vmatmul.mubr.f32.gmra.mxu0 %v435
      %v650 = vpop.f32.mrf.mxu0
      %v651 = vadd.f32 0.0, %v650
      %v652 = vpop.f32.mrf.mxu0
      %653 = vmatprep.mubr.f32.mxu0 0.0
      %654 = vmatmul.mubr.f32.gmra.mxu0 %v438
      %v655 = vpop.f32.mrf.mxu0
      %v656 = vadd.f32 0.0, %v655
      %v657 = vpop.f32.mrf.mxu0
      %658 = vmatprep.mubr.f32.mxu0 0.0
      %659 = vmatmul.mubr.f32.gmra.mxu0 %v441
      %v660 = vpop.f32.mrf.mxu0
      %v661 = vadd.f32 0.0, %v660
      %v662 = vpop.f32.mrf.mxu0
      %663 = vmatprep.mubr.f32.mxu0 0.0
      %664 = vmatmul.mubr.f32.gmra.mxu0 %v444
      %v665 = vpop.f32.mrf.mxu0
      %v666 = vadd.f32 0.0, %v665
      %v667 = vpop.f32.mrf.mxu0
      %668 = vmatprep.mubr.f32.mxu0 0.0
      %669 = vmatmul.mubr.f32.gmra.mxu0 %v447
      %v670 = vpop.f32.mrf.mxu0
      %v671 = vadd.f32 0.0, %v670
      %v672 = vpop.f32.mrf.mxu0
      %673 = vdwg.mxu0
      %706 = vrot.lane.b32.xlu0 %v516, 112
      %v707 = vpop.permute.xlu0 %706
      %708 = vrot.lane.b32.xlu0 %v521, 112
      %v709 = vpop.permute.xlu0 %708
      %710 = vrot.lane.b32.xlu0 %v526, 112
      %v711 = vpop.permute.xlu0 %710
      %712 = vrot.lane.b32.xlu0 %v531, 112
      %v713 = vpop.permute.xlu0 %712
      %714 = vrot.lane.b32.xlu0 %v536, 112
      %v715 = vpop.permute.xlu0 %714
      %716 = vrot.lane.b32.xlu0 %v541, 112
      %v717 = vpop.permute.xlu0 %716
      %718 = vrot.lane.b32.xlu0 %v546, 112
      %v719 = vpop.permute.xlu0 %718
      %720 = vrot.lane.b32.xlu0 %v551, 112
      %v721 = vpop.permute.xlu0 %720
      %722 = vrot.lane.b32.xlu0 %v556, 112
      %v723 = vpop.permute.xlu0 %722
      %724 = vrot.lane.b32.xlu0 %v561, 112
      %v725 = vpop.permute.xlu0 %724
      %726 = vrot.lane.b32.xlu0 %v566, 112
      %v727 = vpop.permute.xlu0 %726
      %728 = vrot.lane.b32.xlu0 %v571, 112
      %v729 = vpop.permute.xlu0 %728
      %730 = vrot.lane.b32.xlu0 %v576, 112
      %v731 = vpop.permute.xlu0 %730
      %732 = vrot.lane.b32.xlu0 %v581, 112
      %v733 = vpop.permute.xlu0 %732
      %734 = vrot.lane.b32.xlu0 %v586, 112
      %v735 = vpop.permute.xlu0 %734
      %736 = vrot.lane.b32.xlu0 %v591, 112
      %v737 = vpop.permute.xlu0 %736
      %738 = vrot.lane.b32.xlu0 %v596, 112
      %v739 = vpop.permute.xlu0 %738
      %740 = vrot.lane.b32.xlu0 %v601, 112
      %v741 = vpop.permute.xlu0 %740
      %742 = vrot.lane.b32.xlu0 %v606, 112
      %v743 = vpop.permute.xlu0 %742
      %744 = vrot.lane.b32.xlu0 %v611, 112
      %v745 = vpop.permute.xlu0 %744
      %746 = vrot.lane.b32.xlu0 %v616, 112
      %v747 = vpop.permute.xlu0 %746
      %748 = vrot.lane.b32.xlu0 %v621, 112
      %v749 = vpop.permute.xlu0 %748
      %750 = vrot.lane.b32.xlu0 %v626, 112
      %v751 = vpop.permute.xlu0 %750
      %752 = vrot.lane.b32.xlu0 %v631, 112
      %v753 = vpop.permute.xlu0 %752
      %754 = vrot.lane.b32.xlu0 %v636, 112
      %v755 = vpop.permute.xlu0 %754
      %756 = vrot.lane.b32.xlu0 %v641, 112
      %v757 = vpop.permute.xlu0 %756
      %758 = vrot.lane.b32.xlu0 %v646, 112
      %v759 = vpop.permute.xlu0 %758
      %760 = vrot.lane.b32.xlu0 %v651, 112
      %v761 = vpop.permute.xlu0 %760
      %762 = vrot.lane.b32.xlu0 %v656, 112
      %v763 = vpop.permute.xlu0 %762
      %764 = vrot.lane.b32.xlu0 %v661, 112
      %v765 = vpop.permute.xlu0 %764
      %766 = vrot.lane.b32.xlu0 %v666, 112
      %v767 = vpop.permute.xlu0 %766
      %768 = vrot.lane.b32.xlu0 %v671, 112
      %v769 = vpop.permute.xlu0 %768
      %v802 = vmul.f32 %v516, %v707
      %v803 = vmul.f32 %v521, %v709
      %v804 = vmul.f32 %v526, %v711
      %v805 = vmul.f32 %v531, %v713
      %v806 = vmul.f32 %v536, %v715
      %v807 = vmul.f32 %v541, %v717
      %v808 = vmul.f32 %v546, %v719
      %v809 = vmul.f32 %v551, %v721
      %v810 = vmul.f32 %v556, %v723
      %v811 = vmul.f32 %v561, %v725
      %v812 = vmul.f32 %v566, %v727
      %v813 = vmul.f32 %v571, %v729
      %v814 = vmul.f32 %v576, %v731
      %v815 = vmul.f32 %v581, %v733
      %v816 = vmul.f32 %v586, %v735
      %v817 = vmul.f32 %v591, %v737
      %v818 = vmul.f32 %v596, %v739
      %v819 = vmul.f32 %v601, %v741
      %v820 = vmul.f32 %v606, %v743
      %v821 = vmul.f32 %v611, %v745
      %v822 = vmul.f32 %v616, %v747
      %v823 = vmul.f32 %v621, %v749
      %v824 = vmul.f32 %v626, %v751
      %v825 = vmul.f32 %v631, %v753
      %v826 = vmul.f32 %v636, %v755
      %v827 = vmul.f32 %v641, %v757
      %v828 = vmul.f32 %v646, %v759
      %v829 = vmul.f32 %v651, %v761
      %v830 = vmul.f32 %v656, %v763
      %v831 = vmul.f32 %v661, %v765
      %v832 = vmul.f32 %v666, %v767
      %v833 = vmul.f32 %v671, %v769
      %v834 = vadd.f32 %v802, 0.0
      %v835 = vadd.f32 %v803, 0.0
      %v836 = vadd.f32 %v804, 0.0
      %v837 = vadd.f32 %v805, 0.0
      %v838 = vadd.f32 %v806, 0.0
      %v839 = vadd.f32 %v807, 0.0
      %v840 = vadd.f32 %v808, 0.0
      %v841 = vadd.f32 %v809, 0.0
      %v842 = vadd.f32 %v810, 0.0
      %v843 = vadd.f32 %v811, 0.0
      %v844 = vadd.f32 %v812, 0.0
      %v845 = vadd.f32 %v813, 0.0
      %v846 = vadd.f32 %v814, 0.0
      %v847 = vadd.f32 %v815, 0.0
      %v848 = vadd.f32 %v816, 0.0
      %v849 = vadd.f32 %v817, 0.0
      %v850 = vadd.f32 %v818, 0.0
      %v851 = vadd.f32 %v819, 0.0
      %v852 = vadd.f32 %v820, 0.0
      %v853 = vadd.f32 %v821, 0.0
      %v854 = vadd.f32 %v822, 0.0
      %v855 = vadd.f32 %v823, 0.0
      %v856 = vadd.f32 %v824, 0.0
      %v857 = vadd.f32 %v825, 0.0
      %v858 = vadd.f32 %v826, 0.0
      %v859 = vadd.f32 %v827, 0.0
      %v860 = vadd.f32 %v828, 0.0
      %v861 = vadd.f32 %v829, 0.0
      %v862 = vadd.f32 %v830, 0.0
      %v863 = vadd.f32 %v831, 0.0
      %v864 = vadd.f32 %v832, 0.0
      %v865 = vadd.f32 %v833, 0.0
      %866 = vrot.lane.b32.xlu0 %v318, 112
      %v867 = vpop.permute.xlu0 %866
      %868 = vrot.lane.b32.xlu0 %v319, 112
      %v869 = vpop.permute.xlu0 %868
      %870 = vrot.lane.b32.xlu0 %v320, 112
      %v871 = vpop.permute.xlu0 %870
      %872 = vrot.lane.b32.xlu0 %v321, 112
      %v873 = vpop.permute.xlu0 %872
      %874 = vrot.lane.b32.xlu0 %v322, 112
      %v875 = vpop.permute.xlu0 %874
      %876 = vrot.lane.b32.xlu0 %v323, 112
      %v877 = vpop.permute.xlu0 %876
      %878 = vrot.lane.b32.xlu0 %v324, 112
      %v879 = vpop.permute.xlu0 %878
      %880 = vrot.lane.b32.xlu0 %v325, 112
      %v881 = vpop.permute.xlu0 %880
      %882 = vrot.lane.b32.xlu0 %v326, 112
      %v883 = vpop.permute.xlu0 %882
      %884 = vrot.lane.b32.xlu0 %v327, 112
      %v885 = vpop.permute.xlu0 %884
      %886 = vrot.lane.b32.xlu0 %v328, 112
      %v887 = vpop.permute.xlu0 %886
      %888 = vrot.lane.b32.xlu0 %v329, 112
      %v889 = vpop.permute.xlu0 %888
      %890 = vrot.lane.b32.xlu0 %v330, 112
      %v891 = vpop.permute.xlu0 %890
      %892 = vrot.lane.b32.xlu0 %v331, 112
      %v893 = vpop.permute.xlu0 %892
      %894 = vrot.lane.b32.xlu0 %v332, 112
      %v895 = vpop.permute.xlu0 %894
      %896 = vrot.lane.b32.xlu0 %v333, 112
      %v897 = vpop.permute.xlu0 %896
      %898 = vrot.lane.b32.xlu0 %v334, 112
      %v899 = vpop.permute.xlu0 %898
      %900 = vrot.lane.b32.xlu0 %v335, 112
      %v901 = vpop.permute.xlu0 %900
      %902 = vrot.lane.b32.xlu0 %v336, 112
      %v903 = vpop.permute.xlu0 %902
      %904 = vrot.lane.b32.xlu0 %v337, 112
      %v905 = vpop.permute.xlu0 %904
      %906 = vrot.lane.b32.xlu0 %v338, 112
      %v907 = vpop.permute.xlu0 %906
      %908 = vrot.lane.b32.xlu0 %v339, 112
      %v909 = vpop.permute.xlu0 %908
      %910 = vrot.lane.b32.xlu0 %v340, 112
      %v911 = vpop.permute.xlu0 %910
      %912 = vrot.lane.b32.xlu0 %v341, 112
      %v913 = vpop.permute.xlu0 %912
      %914 = vrot.lane.b32.xlu0 %v342, 112
      %v915 = vpop.permute.xlu0 %914
      %916 = vrot.lane.b32.xlu0 %v343, 112
      %v917 = vpop.permute.xlu0 %916
      %918 = vrot.lane.b32.xlu0 %v344, 112
      %v919 = vpop.permute.xlu0 %918
      %920 = vrot.lane.b32.xlu0 %v345, 112
      %v921 = vpop.permute.xlu0 %920
      %922 = vrot.lane.b32.xlu0 %v346, 112
      %v923 = vpop.permute.xlu0 %922
      %924 = vrot.lane.b32.xlu0 %v347, 112
      %v925 = vpop.permute.xlu0 %924
      %926 = vrot.lane.b32.xlu0 %v348, 112
      %v927 = vpop.permute.xlu0 %926
      %928 = vrot.lane.b32.xlu0 %v349, 112
      %v929 = vpop.permute.xlu0 %928
      %v930 = vsel %vm352, %v867, 0
      %v932 = vsel %vm352, %v869, 0
      %v934 = vsel %vm352, %v871, 0
      %v936 = vsel %vm352, %v873, 0
      %v938 = vsel %vm352, %v875, 0
      %v940 = vsel %vm352, %v877, 0
      %v942 = vsel %vm352, %v879, 0
      %v944 = vsel %vm352, %v881, 0
      %v946 = vsel %vm352, %v883, 0
      %v948 = vsel %vm352, %v885, 0
      %v950 = vsel %vm352, %v887, 0
      %v952 = vsel %vm352, %v889, 0
      %v954 = vsel %vm352, %v891, 0
      %v956 = vsel %vm352, %v893, 0
      %v958 = vsel %vm352, %v895, 0
      %v960 = vsel %vm352, %v897, 0
      %v962 = vsel %vm352, %v899, 0
      %v964 = vsel %vm352, %v901, 0
      %v966 = vsel %vm352, %v903, 0
      %v968 = vsel %vm352, %v905, 0
      %v970 = vsel %vm352, %v907, 0
      %v972 = vsel %vm352, %v909, 0
      %v974 = vsel %vm352, %v911, 0
      %v976 = vsel %vm352, %v913, 0
      %v978 = vsel %vm352, %v915, 0
      %v980 = vsel %vm352, %v917, 0
      %v982 = vsel %vm352, %v919, 0
      %v984 = vsel %vm352, %v921, 0
      %v986 = vsel %vm352, %v923, 0
      %v988 = vsel %vm352, %v925, 0
      %v990 = vsel %vm352, %v927, 0
      %v992 = vsel %vm352, %v929, 0
      %994 = vmatprep.subr.mxu0 0.0
      %995 = vmatpush1.msra.mxu0 0.0
      %996 = vmatprep.subr.mxu0 0.0
      %997 = vmatpush1.msra.mxu0 0.0
      %998 = vmatprep.subr.mxu0 0.0
      %999 = vmatpush1.msra.mxu0 0.0
      %1000 = vmatprep.subr.mxu0 0.0
      %1001 = vmatpush1.msra.mxu0 0.0
      %1002 = vmatprep.subr.mxu0 0.0
      %1003 = vmatpush1.msra.mxu0 0.0
      %1004 = vmatprep.subr.mxu0 0.0
      %1005 = vmatpush1.msra.mxu0 0.0
      %1006 = vmatprep.subr.mxu0 0.0
      %1007 = vmatpush1.msra.mxu0 0.0
      %1008 = vmatprep.subr.mxu0 0.0
      %1009 = vmatpush1.msra.mxu0 0.0
      %1010 = vmatprep.subr.mxu0 0.0
      %1011 = vmatpush1.msra.mxu0 0.0
      %1012 = vmatprep.subr.mxu0 0.0
      %1013 = vmatpush1.msra.mxu0 0.0
      %1014 = vmatprep.subr.mxu0 0.0
      %1015 = vmatpush1.msra.mxu0 0.0
      %1016 = vmatprep.subr.mxu0 0.0
      %1017 = vmatpush1.msra.mxu0 0.0
      %1018 = vmatprep.subr.mxu0 0.0
      %1019 = vmatpush1.msra.mxu0 0.0
      %1020 = vmatprep.subr.mxu0 0.0
      %1021 = vmatpush1.msra.mxu0 0.0
      %1022 = vmatprep.subr.mxu0 0.0
      %1023 = vmatpush1.msra.mxu0 %v351
      %1024 = vmatprep.subr.mxu0 0.0
      %1025 = vmatpush1.msra.mxu0 %v350
      %1026 = vmatprep.subr.mxu0 0.0
      %1027 = vmatpush2.msra.mxu0 0.0
      %1028 = vmatprep.subr.mxu0 0.0
      %1029 = vmatpush2.msra.mxu0 0.0
      %1030 = vmatprep.subr.mxu0 0.0
      %1031 = vmatpush2.msra.mxu0 0.0
      %1032 = vmatprep.subr.mxu0 0.0
      %1033 = vmatpush2.msra.mxu0 0.0
      %1034 = vmatprep.subr.mxu0 0.0
      %1035 = vmatpush2.msra.mxu0 0.0
      %1036 = vmatprep.subr.mxu0 0.0
      %1037 = vmatpush2.msra.mxu0 0.0
      %1038 = vmatprep.subr.mxu0 0.0
      %1039 = vmatpush2.msra.mxu0 0.0
      %1040 = vmatprep.subr.mxu0 0.0
      %1041 = vmatpush2.msra.mxu0 0.0
      %1042 = vmatprep.subr.mxu0 0.0
      %1043 = vmatpush2.msra.mxu0 0.0
      %1044 = vmatprep.subr.mxu0 0.0
      %1045 = vmatpush2.msra.mxu0 0.0
      %1046 = vmatprep.subr.mxu0 0.0
      %1047 = vmatpush2.msra.mxu0 0.0
      %1048 = vmatprep.subr.mxu0 0.0
      %1049 = vmatpush2.msra.mxu0 0.0
      %1050 = vmatprep.subr.mxu0 0.0
      %1051 = vmatpush2.msra.mxu0 0.0
      %1052 = vmatprep.subr.mxu0 0.0
      %1053 = vmatpush2.msra.mxu0 0.0
      %1054 = vmatprep.subr.mxu0 0.0
      %1055 = vmatpush2.msra.mxu0 0.0
      %1056 = vmatprep.subr.mxu0 0.0
      %1057 = vmatpush2.msra.mxu0 0.0
      %1058 = vmatprep.mubr.f32.mxu0 0.0
      %1059 = vmatmul.mubr.f32.gmra.mxu0 %v930
      %v1060 = vpop.f32.mrf.mxu0
      %v1061 = vadd.f32 0.0, %v1060
      %v1062 = vpop.f32.mrf.mxu0
      %1063 = vmatprep.mubr.f32.mxu0 0.0
      %1064 = vmatmul.mubr.f32.gmra.mxu0 %v932
      %v1065 = vpop.f32.mrf.mxu0
      %v1066 = vadd.f32 0.0, %v1065
      %v1067 = vpop.f32.mrf.mxu0
      %1068 = vmatprep.mubr.f32.mxu0 0.0
      %1069 = vmatmul.mubr.f32.gmra.mxu0 %v934
      %v1070 = vpop.f32.mrf.mxu0
      %v1071 = vadd.f32 0.0, %v1070
      %v1072 = vpop.f32.mrf.mxu0
      %1073 = vmatprep.mubr.f32.mxu0 0.0
      %1074 = vmatmul.mubr.f32.gmra.mxu0 %v936
      %v1075 = vpop.f32.mrf.mxu0
      %v1076 = vadd.f32 0.0, %v1075
      %v1077 = vpop.f32.mrf.mxu0
      %1078 = vmatprep.mubr.f32.mxu0 0.0
      %1079 = vmatmul.mubr.f32.gmra.mxu0 %v938
      %v1080 = vpop.f32.mrf.mxu0
      %v1081 = vadd.f32 0.0, %v1080
      %v1082 = vpop.f32.mrf.mxu0
      %1083 = vmatprep.mubr.f32.mxu0 0.0
      %1084 = vmatmul.mubr.f32.gmra.mxu0 %v940
      %v1085 = vpop.f32.mrf.mxu0
      %v1086 = vadd.f32 0.0, %v1085
      %v1087 = vpop.f32.mrf.mxu0
      %1088 = vmatprep.mubr.f32.mxu0 0.0
      %1089 = vmatmul.mubr.f32.gmra.mxu0 %v942
      %v1090 = vpop.f32.mrf.mxu0
      %v1091 = vadd.f32 0.0, %v1090
      %v1092 = vpop.f32.mrf.mxu0
      %1093 = vmatprep.mubr.f32.mxu0 0.0
      %1094 = vmatmul.mubr.f32.gmra.mxu0 %v944
      %v1095 = vpop.f32.mrf.mxu0
      %v1096 = vadd.f32 0.0, %v1095
      %v1097 = vpop.f32.mrf.mxu0
      %1098 = vmatprep.mubr.f32.mxu0 0.0
      %1099 = vmatmul.mubr.f32.gmra.mxu0 %v946
      %v1100 = vpop.f32.mrf.mxu0
      %v1101 = vadd.f32 0.0, %v1100
      %v1102 = vpop.f32.mrf.mxu0
      %1103 = vmatprep.mubr.f32.mxu0 0.0
      %1104 = vmatmul.mubr.f32.gmra.mxu0 %v948
      %v1105 = vpop.f32.mrf.mxu0
      %v1106 = vadd.f32 0.0, %v1105
      %v1107 = vpop.f32.mrf.mxu0
      %1108 = vmatprep.mubr.f32.mxu0 0.0
      %1109 = vmatmul.mubr.f32.gmra.mxu0 %v950
      %v1110 = vpop.f32.mrf.mxu0
      %v1111 = vadd.f32 0.0, %v1110
      %v1112 = vpop.f32.mrf.mxu0
      %1113 = vmatprep.mubr.f32.mxu0 0.0
      %1114 = vmatmul.mubr.f32.gmra.mxu0 %v952
      %v1115 = vpop.f32.mrf.mxu0
      %v1116 = vadd.f32 0.0, %v1115
      %v1117 = vpop.f32.mrf.mxu0
      %1118 = vmatprep.mubr.f32.mxu0 0.0
      %1119 = vmatmul.mubr.f32.gmra.mxu0 %v954
      %v1120 = vpop.f32.mrf.mxu0
      %v1121 = vadd.f32 0.0, %v1120
      %v1122 = vpop.f32.mrf.mxu0
      %1123 = vmatprep.mubr.f32.mxu0 0.0
      %1124 = vmatmul.mubr.f32.gmra.mxu0 %v956
      %v1125 = vpop.f32.mrf.mxu0
      %v1126 = vadd.f32 0.0, %v1125
      %v1127 = vpop.f32.mrf.mxu0
      %1128 = vmatprep.mubr.f32.mxu0 0.0
      %1129 = vmatmul.mubr.f32.gmra.mxu0 %v958
      %v1130 = vpop.f32.mrf.mxu0
      %v1131 = vadd.f32 0.0, %v1130
      %v1132 = vpop.f32.mrf.mxu0
      %1133 = vmatprep.mubr.f32.mxu0 0.0
      %1134 = vmatmul.mubr.f32.gmra.mxu0 %v960
      %v1135 = vpop.f32.mrf.mxu0
      %v1136 = vadd.f32 0.0, %v1135
      %v1137 = vpop.f32.mrf.mxu0
      %1138 = vmatprep.mubr.f32.mxu0 0.0
      %1139 = vmatmul.mubr.f32.gmra.mxu0 %v962
      %v1140 = vpop.f32.mrf.mxu0
      %v1141 = vadd.f32 0.0, %v1140
      %v1142 = vpop.f32.mrf.mxu0
      %1143 = vmatprep.mubr.f32.mxu0 0.0
      %1144 = vmatmul.mubr.f32.gmra.mxu0 %v964
      %v1145 = vpop.f32.mrf.mxu0
      %v1146 = vadd.f32 0.0, %v1145
      %v1147 = vpop.f32.mrf.mxu0
      %1148 = vmatprep.mubr.f32.mxu0 0.0
      %1149 = vmatmul.mubr.f32.gmra.mxu0 %v966
      %v1150 = vpop.f32.mrf.mxu0
      %v1151 = vadd.f32 0.0, %v1150
      %v1152 = vpop.f32.mrf.mxu0
      %1153 = vmatprep.mubr.f32.mxu0 0.0
      %1154 = vmatmul.mubr.f32.gmra.mxu0 %v968
      %v1155 = vpop.f32.mrf.mxu0
      %v1156 = vadd.f32 0.0, %v1155
      %v1157 = vpop.f32.mrf.mxu0
      %1158 = vmatprep.mubr.f32.mxu0 0.0
      %1159 = vmatmul.mubr.f32.gmra.mxu0 %v970
      %v1160 = vpop.f32.mrf.mxu0
      %v1161 = vadd.f32 0.0, %v1160
      %v1162 = vpop.f32.mrf.mxu0
      %1163 = vmatprep.mubr.f32.mxu0 0.0
      %1164 = vmatmul.mubr.f32.gmra.mxu0 %v972
      %v1165 = vpop.f32.mrf.mxu0
      %v1166 = vadd.f32 0.0, %v1165
      %v1167 = vpop.f32.mrf.mxu0
      %1168 = vmatprep.mubr.f32.mxu0 0.0
      %1169 = vmatmul.mubr.f32.gmra.mxu0 %v974
      %v1170 = vpop.f32.mrf.mxu0
      %v1171 = vadd.f32 0.0, %v1170
      %v1172 = vpop.f32.mrf.mxu0
      %1173 = vmatprep.mubr.f32.mxu0 0.0
      %1174 = vmatmul.mubr.f32.gmra.mxu0 %v976
      %v1175 = vpop.f32.mrf.mxu0
      %v1176 = vadd.f32 0.0, %v1175
      %v1177 = vpop.f32.mrf.mxu0
      %1178 = vmatprep.mubr.f32.mxu0 0.0
      %1179 = vmatmul.mubr.f32.gmra.mxu0 %v978
      %v1180 = vpop.f32.mrf.mxu0
      %v1181 = vadd.f32 0.0, %v1180
      %v1182 = vpop.f32.mrf.mxu0
      %1183 = vmatprep.mubr.f32.mxu0 0.0
      %1184 = vmatmul.mubr.f32.gmra.mxu0 %v980
      %v1185 = vpop.f32.mrf.mxu0
      %v1186 = vadd.f32 0.0, %v1185
      %v1187 = vpop.f32.mrf.mxu0
      %1188 = vmatprep.mubr.f32.mxu0 0.0
      %1189 = vmatmul.mubr.f32.gmra.mxu0 %v982
      %v1190 = vpop.f32.mrf.mxu0
      %v1191 = vadd.f32 0.0, %v1190
      %v1192 = vpop.f32.mrf.mxu0
      %1193 = vmatprep.mubr.f32.mxu0 0.0
      %1194 = vmatmul.mubr.f32.gmra.mxu0 %v984
      %v1195 = vpop.f32.mrf.mxu0
      %v1196 = vadd.f32 0.0, %v1195
      %v1197 = vpop.f32.mrf.mxu0
      %1198 = vmatprep.mubr.f32.mxu0 0.0
      %1199 = vmatmul.mubr.f32.gmra.mxu0 %v986
      %v1200 = vpop.f32.mrf.mxu0
      %v1201 = vadd.f32 0.0, %v1200
      %v1202 = vpop.f32.mrf.mxu0
      %1203 = vmatprep.mubr.f32.mxu0 0.0
      %1204 = vmatmul.mubr.f32.gmra.mxu0 %v988
      %v1205 = vpop.f32.mrf.mxu0
      %v1206 = vadd.f32 0.0, %v1205
      %v1207 = vpop.f32.mrf.mxu0
      %1208 = vmatprep.mubr.f32.mxu0 0.0
      %1209 = vmatmul.mubr.f32.gmra.mxu0 %v990
      %v1210 = vpop.f32.mrf.mxu0
      %v1211 = vadd.f32 0.0, %v1210
      %v1212 = vpop.f32.mrf.mxu0
      %1213 = vmatprep.mubr.f32.mxu0 0.0
      %1214 = vmatmul.mubr.f32.gmra.mxu0 %v992
      %v1215 = vpop.f32.mrf.mxu0
      %v1216 = vadd.f32 0.0, %v1215
      %v1217 = vpop.f32.mrf.mxu0
      %1218 = vdwg.mxu0
      %1251 = vrot.lane.b32.xlu0 %v1061, 112
      %v1252 = vpop.permute.xlu0 %1251
      %1253 = vrot.lane.b32.xlu0 %v1066, 112
      %v1254 = vpop.permute.xlu0 %1253
      %1255 = vrot.lane.b32.xlu0 %v1071, 112
      %v1256 = vpop.permute.xlu0 %1255
      %1257 = vrot.lane.b32.xlu0 %v1076, 112
      %v1258 = vpop.permute.xlu0 %1257
      %1259 = vrot.lane.b32.xlu0 %v1081, 112
      %v1260 = vpop.permute.xlu0 %1259
      %1261 = vrot.lane.b32.xlu0 %v1086, 112
      %v1262 = vpop.permute.xlu0 %1261
      %1263 = vrot.lane.b32.xlu0 %v1091, 112
      %v1264 = vpop.permute.xlu0 %1263
      %1265 = vrot.lane.b32.xlu0 %v1096, 112
      %v1266 = vpop.permute.xlu0 %1265
      %1267 = vrot.lane.b32.xlu0 %v1101, 112
      %v1268 = vpop.permute.xlu0 %1267
      %1269 = vrot.lane.b32.xlu0 %v1106, 112
      %v1270 = vpop.permute.xlu0 %1269
      %1271 = vrot.lane.b32.xlu0 %v1111, 112
      %v1272 = vpop.permute.xlu0 %1271
      %1273 = vrot.lane.b32.xlu0 %v1116, 112
      %v1274 = vpop.permute.xlu0 %1273
      %1275 = vrot.lane.b32.xlu0 %v1121, 112
      %v1276 = vpop.permute.xlu0 %1275
      %1277 = vrot.lane.b32.xlu0 %v1126, 112
      %v1278 = vpop.permute.xlu0 %1277
      %1279 = vrot.lane.b32.xlu0 %v1131, 112
      %v1280 = vpop.permute.xlu0 %1279
      %1281 = vrot.lane.b32.xlu0 %v1136, 112
      %v1282 = vpop.permute.xlu0 %1281
      %1283 = vrot.lane.b32.xlu0 %v1141, 112
      %v1284 = vpop.permute.xlu0 %1283
      %1285 = vrot.lane.b32.xlu0 %v1146, 112
      %v1286 = vpop.permute.xlu0 %1285
      %1287 = vrot.lane.b32.xlu0 %v1151, 112
      %v1288 = vpop.permute.xlu0 %1287
      %1289 = vrot.lane.b32.xlu0 %v1156, 112
      %v1290 = vpop.permute.xlu0 %1289
      %1291 = vrot.lane.b32.xlu0 %v1161, 112
      %v1292 = vpop.permute.xlu0 %1291
      %1293 = vrot.lane.b32.xlu0 %v1166, 112
      %v1294 = vpop.permute.xlu0 %1293
      %1295 = vrot.lane.b32.xlu0 %v1171, 112
      %v1296 = vpop.permute.xlu0 %1295
      %1297 = vrot.lane.b32.xlu0 %v1176, 112
      %v1298 = vpop.permute.xlu0 %1297
      %1299 = vrot.lane.b32.xlu0 %v1181, 112
      %v1300 = vpop.permute.xlu0 %1299
      %1301 = vrot.lane.b32.xlu0 %v1186, 112
      %v1302 = vpop.permute.xlu0 %1301
      %1303 = vrot.lane.b32.xlu0 %v1191, 112
      %v1304 = vpop.permute.xlu0 %1303
      %1305 = vrot.lane.b32.xlu0 %v1196, 112
      %v1306 = vpop.permute.xlu0 %1305
      %1307 = vrot.lane.b32.xlu0 %v1201, 112
      %v1308 = vpop.permute.xlu0 %1307
      %1309 = vrot.lane.b32.xlu0 %v1206, 112
      %v1310 = vpop.permute.xlu0 %1309
      %1311 = vrot.lane.b32.xlu0 %v1211, 112
      %v1312 = vpop.permute.xlu0 %1311
      %1313 = vrot.lane.b32.xlu0 %v1216, 112
      %v1314 = vpop.permute.xlu0 %1313
      %v1347 = vmul.f32 %v1061, %v1252
      %v1348 = vmul.f32 %v1066, %v1254
      %v1349 = vmul.f32 %v1071, %v1256
      %v1350 = vmul.f32 %v1076, %v1258
      %v1351 = vmul.f32 %v1081, %v1260
      %v1352 = vmul.f32 %v1086, %v1262
      %v1353 = vmul.f32 %v1091, %v1264
      %v1354 = vmul.f32 %v1096, %v1266
      %v1355 = vmul.f32 %v1101, %v1268
      %v1356 = vmul.f32 %v1106, %v1270
      %v1357 = vmul.f32 %v1111, %v1272
      %v1358 = vmul.f32 %v1116, %v1274
      %v1359 = vmul.f32 %v1121, %v1276
      %v1360 = vmul.f32 %v1126, %v1278
      %v1361 = vmul.f32 %v1131, %v1280
      %v1362 = vmul.f32 %v1136, %v1282
      %v1363 = vmul.f32 %v1141, %v1284
      %v1364 = vmul.f32 %v1146, %v1286
      %v1365 = vmul.f32 %v1151, %v1288
      %v1366 = vmul.f32 %v1156, %v1290
      %v1367 = vmul.f32 %v1161, %v1292
      %v1368 = vmul.f32 %v1166, %v1294
      %v1369 = vmul.f32 %v1171, %v1296
      %v1370 = vmul.f32 %v1176, %v1298
      %v1371 = vmul.f32 %v1181, %v1300
      %v1372 = vmul.f32 %v1186, %v1302
      %v1373 = vmul.f32 %v1191, %v1304
      %v1374 = vmul.f32 %v1196, %v1306
      %v1375 = vmul.f32 %v1201, %v1308
      %v1376 = vmul.f32 %v1206, %v1310
      %v1377 = vmul.f32 %v1211, %v1312
      %v1378 = vmul.f32 %v1216, %v1314
      %v1379 = vadd.f32 %v834, %v1347
      %v1380 = vadd.f32 %v835, %v1348
      %v1381 = vadd.f32 %v836, %v1349
      %v1382 = vadd.f32 %v837, %v1350
      %v1383 = vadd.f32 %v838, %v1351
      %v1384 = vadd.f32 %v839, %v1352
      %v1385 = vadd.f32 %v840, %v1353
      %v1386 = vadd.f32 %v841, %v1354
      %v1387 = vadd.f32 %v842, %v1355
      %v1388 = vadd.f32 %v843, %v1356
      %v1389 = vadd.f32 %v844, %v1357
      %v1390 = vadd.f32 %v845, %v1358
      %v1391 = vadd.f32 %v846, %v1359
      %v1392 = vadd.f32 %v847, %v1360
      %v1393 = vadd.f32 %v848, %v1361
      %v1394 = vadd.f32 %v849, %v1362
      %v1395 = vadd.f32 %v850, %v1363
      %v1396 = vadd.f32 %v851, %v1364
      %v1397 = vadd.f32 %v852, %v1365
      %v1398 = vadd.f32 %v853, %v1366
      %v1399 = vadd.f32 %v854, %v1367
      %v1400 = vadd.f32 %v855, %v1368
      %v1401 = vadd.f32 %v856, %v1369
      %v1402 = vadd.f32 %v857, %v1370
      %v1403 = vadd.f32 %v858, %v1371
      %v1404 = vadd.f32 %v859, %v1372
      %v1405 = vadd.f32 %v860, %v1373
      %v1406 = vadd.f32 %v861, %v1374
      %v1407 = vadd.f32 %v862, %v1375
      %v1408 = vadd.f32 %v863, %v1376
      %v1409 = vadd.f32 %v864, %v1377
      %v1410 = vadd.f32 %v865, %v1378
      %1411 = vrot.lane.b32.xlu0 %v318, 96
      %v1412 = vpop.permute.xlu0 %1411
      %1413 = vrot.lane.b32.xlu0 %v319, 96
      %v1414 = vpop.permute.xlu0 %1413
      %1415 = vrot.lane.b32.xlu0 %v320, 96
      %v1416 = vpop.permute.xlu0 %1415
      %1417 = vrot.lane.b32.xlu0 %v321, 96
      %v1418 = vpop.permute.xlu0 %1417
      %1419 = vrot.lane.b32.xlu0 %v322, 96
      %v1420 = vpop.permute.xlu0 %1419
      %1421 = vrot.lane.b32.xlu0 %v323, 96
      %v1422 = vpop.permute.xlu0 %1421
      %1423 = vrot.lane.b32.xlu0 %v324, 96
      %v1424 = vpop.permute.xlu0 %1423
      %1425 = vrot.lane.b32.xlu0 %v325, 96
      %v1426 = vpop.permute.xlu0 %1425
      %1427 = vrot.lane.b32.xlu0 %v326, 96
      %v1428 = vpop.permute.xlu0 %1427
      %1429 = vrot.lane.b32.xlu0 %v327, 96
      %v1430 = vpop.permute.xlu0 %1429
      %1431 = vrot.lane.b32.xlu0 %v328, 96
      %v1432 = vpop.permute.xlu0 %1431
      %1433 = vrot.lane.b32.xlu0 %v329, 96
      %v1434 = vpop.permute.xlu0 %1433
      %1435 = vrot.lane.b32.xlu0 %v330, 96
      %v1436 = vpop.permute.xlu0 %1435
      %1437 = vrot.lane.b32.xlu0 %v331, 96
      %v1438 = vpop.permute.xlu0 %1437
      %1439 = vrot.lane.b32.xlu0 %v332, 96
      %v1440 = vpop.permute.xlu0 %1439
      %1441 = vrot.lane.b32.xlu0 %v333, 96
      %v1442 = vpop.permute.xlu0 %1441
      %1443 = vrot.lane.b32.xlu0 %v334, 96
      %v1444 = vpop.permute.xlu0 %1443
      %1445 = vrot.lane.b32.xlu0 %v335, 96
      %v1446 = vpop.permute.xlu0 %1445
      %1447 = vrot.lane.b32.xlu0 %v336, 96
      %v1448 = vpop.permute.xlu0 %1447
      %1449 = vrot.lane.b32.xlu0 %v337, 96
      %v1450 = vpop.permute.xlu0 %1449
      %1451 = vrot.lane.b32.xlu0 %v338, 96
      %v1452 = vpop.permute.xlu0 %1451
      %1453 = vrot.lane.b32.xlu0 %v339, 96
      %v1454 = vpop.permute.xlu0 %1453
      %1455 = vrot.lane.b32.xlu0 %v340, 96
      %v1456 = vpop.permute.xlu0 %1455
      %1457 = vrot.lane.b32.xlu0 %v341, 96
      %v1458 = vpop.permute.xlu0 %1457
      %1459 = vrot.lane.b32.xlu0 %v342, 96
      %v1460 = vpop.permute.xlu0 %1459
      %1461 = vrot.lane.b32.xlu0 %v343, 96
      %v1462 = vpop.permute.xlu0 %1461
      %1463 = vrot.lane.b32.xlu0 %v344, 96
      %v1464 = vpop.permute.xlu0 %1463
      %1465 = vrot.lane.b32.xlu0 %v345, 96
      %v1466 = vpop.permute.xlu0 %1465
      %1467 = vrot.lane.b32.xlu0 %v346, 96
      %v1468 = vpop.permute.xlu0 %1467
      %1469 = vrot.lane.b32.xlu0 %v347, 96
      %v1470 = vpop.permute.xlu0 %1469
      %1471 = vrot.lane.b32.xlu0 %v348, 96
      %v1472 = vpop.permute.xlu0 %1471
      %1473 = vrot.lane.b32.xlu0 %v349, 96
      %v1474 = vpop.permute.xlu0 %1473
      %v1475 = vsel %vm352, %v1412, 0
      %v1477 = vsel %vm352, %v1414, 0
      %v1479 = vsel %vm352, %v1416, 0
      %v1481 = vsel %vm352, %v1418, 0
      %v1483 = vsel %vm352, %v1420, 0
      %v1485 = vsel %vm352, %v1422, 0
      %v1487 = vsel %vm352, %v1424, 0
      %v1489 = vsel %vm352, %v1426, 0
      %v1491 = vsel %vm352, %v1428, 0
      %v1493 = vsel %vm352, %v1430, 0
      %v1495 = vsel %vm352, %v1432, 0
      %v1497 = vsel %vm352, %v1434, 0
      %v1499 = vsel %vm352, %v1436, 0
      %v1501 = vsel %vm352, %v1438, 0
      %v1503 = vsel %vm352, %v1440, 0
      %v1505 = vsel %vm352, %v1442, 0
      %v1507 = vsel %vm352, %v1444, 0
      %v1509 = vsel %vm352, %v1446, 0
      %v1511 = vsel %vm352, %v1448, 0
      %v1513 = vsel %vm352, %v1450, 0
      %v1515 = vsel %vm352, %v1452, 0
      %v1517 = vsel %vm352, %v1454, 0
      %v1519 = vsel %vm352, %v1456, 0
      %v1521 = vsel %vm352, %v1458, 0
      %v1523 = vsel %vm352, %v1460, 0
      %v1525 = vsel %vm352, %v1462, 0
      %v1527 = vsel %vm352, %v1464, 0
      %v1529 = vsel %vm352, %v1466, 0
      %v1531 = vsel %vm352, %v1468, 0
      %v1533 = vsel %vm352, %v1470, 0
      %v1535 = vsel %vm352, %v1472, 0
      %v1537 = vsel %vm352, %v1474, 0
      %1539 = vmatprep.subr.mxu0 0.0
      %1540 = vmatpush1.msra.mxu0 0.0
      %1541 = vmatprep.subr.mxu0 0.0
      %1542 = vmatpush1.msra.mxu0 0.0
      %1543 = vmatprep.subr.mxu0 0.0
      %1544 = vmatpush1.msra.mxu0 0.0
      %1545 = vmatprep.subr.mxu0 0.0
      %1546 = vmatpush1.msra.mxu0 0.0
      %1547 = vmatprep.subr.mxu0 0.0
      %1548 = vmatpush1.msra.mxu0 0.0
      %1549 = vmatprep.subr.mxu0 0.0
      %1550 = vmatpush1.msra.mxu0 0.0
      %1551 = vmatprep.subr.mxu0 0.0
      %1552 = vmatpush1.msra.mxu0 0.0
      %1553 = vmatprep.subr.mxu0 0.0
      %1554 = vmatpush1.msra.mxu0 0.0
      %1555 = vmatprep.subr.mxu0 0.0
      %1556 = vmatpush1.msra.mxu0 0.0
      %1557 = vmatprep.subr.mxu0 0.0
      %1558 = vmatpush1.msra.mxu0 0.0
      %1559 = vmatprep.subr.mxu0 0.0
      %1560 = vmatpush1.msra.mxu0 0.0
      %1561 = vmatprep.subr.mxu0 0.0
      %1562 = vmatpush1.msra.mxu0 0.0
      %1563 = vmatprep.subr.mxu0 0.0
      %1564 = vmatpush1.msra.mxu0 0.0
      %1565 = vmatprep.subr.mxu0 0.0
      %1566 = vmatpush1.msra.mxu0 0.0
      %1567 = vmatprep.subr.mxu0 0.0
      %1568 = vmatpush1.msra.mxu0 %v351
      %1569 = vmatprep.subr.mxu0 0.0
      %1570 = vmatpush1.msra.mxu0 %v350
      %1571 = vmatprep.subr.mxu0 0.0
      %1572 = vmatpush2.msra.mxu0 0.0
      %1573 = vmatprep.subr.mxu0 0.0
      %1574 = vmatpush2.msra.mxu0 0.0
      %1575 = vmatprep.subr.mxu0 0.0
      %1576 = vmatpush2.msra.mxu0 0.0
      %1577 = vmatprep.subr.mxu0 0.0
      %1578 = vmatpush2.msra.mxu0 0.0
      %1579 = vmatprep.subr.mxu0 0.0
      %1580 = vmatpush2.msra.mxu0 0.0
      %1581 = vmatprep.subr.mxu0 0.0
      %1582 = vmatpush2.msra.mxu0 0.0
      %1583 = vmatprep.subr.mxu0 0.0
      %1584 = vmatpush2.msra.mxu0 0.0
      %1585 = vmatprep.subr.mxu0 0.0
      %1586 = vmatpush2.msra.mxu0 0.0
      %1587 = vmatprep.subr.mxu0 0.0
      %1588 = vmatpush2.msra.mxu0 0.0
      %1589 = vmatprep.subr.mxu0 0.0
      %1590 = vmatpush2.msra.mxu0 0.0
      %1591 = vmatprep.subr.mxu0 0.0
      %1592 = vmatpush2.msra.mxu0 0.0
      %1593 = vmatprep.subr.mxu0 0.0
      %1594 = vmatpush2.msra.mxu0 0.0
      %1595 = vmatprep.subr.mxu0 0.0
      %1596 = vmatpush2.msra.mxu0 0.0
      %1597 = vmatprep.subr.mxu0 0.0
      %1598 = vmatpush2.msra.mxu0 0.0
      %1599 = vmatprep.subr.mxu0 0.0
      %1600 = vmatpush2.msra.mxu0 0.0
      %1601 = vmatprep.subr.mxu0 0.0
      %1602 = vmatpush2.msra.mxu0 0.0
      %1603 = vmatprep.mubr.f32.mxu0 0.0
      %1604 = vmatmul.mubr.f32.gmra.mxu0 %v1475
      %v1605 = vpop.f32.mrf.mxu0
      %v1606 = vadd.f32 0.0, %v1605
      %v1607 = vpop.f32.mrf.mxu0
      %1608 = vmatprep.mubr.f32.mxu0 0.0
      %1609 = vmatmul.mubr.f32.gmra.mxu0 %v1477
      %v1610 = vpop.f32.mrf.mxu0
      %v1611 = vadd.f32 0.0, %v1610
      %v1612 = vpop.f32.mrf.mxu0
      %1613 = vmatprep.mubr.f32.mxu0 0.0
      %1614 = vmatmul.mubr.f32.gmra.mxu0 %v1479
      %v1615 = vpop.f32.mrf.mxu0
      %v1616 = vadd.f32 0.0, %v1615
      %v1617 = vpop.f32.mrf.mxu0
      %1618 = vmatprep.mubr.f32.mxu0 0.0
      %1619 = vmatmul.mubr.f32.gmra.mxu0 %v1481
      %v1620 = vpop.f32.mrf.mxu0
      %v1621 = vadd.f32 0.0, %v1620
      %v1622 = vpop.f32.mrf.mxu0
      %1623 = vmatprep.mubr.f32.mxu0 0.0
      %1624 = vmatmul.mubr.f32.gmra.mxu0 %v1483
      %v1625 = vpop.f32.mrf.mxu0
      %v1626 = vadd.f32 0.0, %v1625
      %v1627 = vpop.f32.mrf.mxu0
      %1628 = vmatprep.mubr.f32.mxu0 0.0
      %1629 = vmatmul.mubr.f32.gmra.mxu0 %v1485
      %v1630 = vpop.f32.mrf.mxu0
      %v1631 = vadd.f32 0.0, %v1630
      %v1632 = vpop.f32.mrf.mxu0
      %1633 = vmatprep.mubr.f32.mxu0 0.0
      %1634 = vmatmul.mubr.f32.gmra.mxu0 %v1487
      %v1635 = vpop.f32.mrf.mxu0
      %v1636 = vadd.f32 0.0, %v1635
      %v1637 = vpop.f32.mrf.mxu0
      %1638 = vmatprep.mubr.f32.mxu0 0.0
      %1639 = vmatmul.mubr.f32.gmra.mxu0 %v1489
      %v1640 = vpop.f32.mrf.mxu0
      %v1641 = vadd.f32 0.0, %v1640
      %v1642 = vpop.f32.mrf.mxu0
      %1643 = vmatprep.mubr.f32.mxu0 0.0
      %1644 = vmatmul.mubr.f32.gmra.mxu0 %v1491
      %v1645 = vpop.f32.mrf.mxu0
      %v1646 = vadd.f32 0.0, %v1645
      %v1647 = vpop.f32.mrf.mxu0
      %1648 = vmatprep.mubr.f32.mxu0 0.0
      %1649 = vmatmul.mubr.f32.gmra.mxu0 %v1493
      %v1650 = vpop.f32.mrf.mxu0
      %v1651 = vadd.f32 0.0, %v1650
      %v1652 = vpop.f32.mrf.mxu0
      %1653 = vmatprep.mubr.f32.mxu0 0.0
      %1654 = vmatmul.mubr.f32.gmra.mxu0 %v1495
      %v1655 = vpop.f32.mrf.mxu0
      %v1656 = vadd.f32 0.0, %v1655
      %v1657 = vpop.f32.mrf.mxu0
      %1658 = vmatprep.mubr.f32.mxu0 0.0
      %1659 = vmatmul.mubr.f32.gmra.mxu0 %v1497
      %v1660 = vpop.f32.mrf.mxu0
      %v1661 = vadd.f32 0.0, %v1660
      %v1662 = vpop.f32.mrf.mxu0
      %1663 = vmatprep.mubr.f32.mxu0 0.0
      %1664 = vmatmul.mubr.f32.gmra.mxu0 %v1499
      %v1665 = vpop.f32.mrf.mxu0
      %v1666 = vadd.f32 0.0, %v1665
      %v1667 = vpop.f32.mrf.mxu0
      %1668 = vmatprep.mubr.f32.mxu0 0.0
      %1669 = vmatmul.mubr.f32.gmra.mxu0 %v1501
      %v1670 = vpop.f32.mrf.mxu0
      %v1671 = vadd.f32 0.0, %v1670
      %v1672 = vpop.f32.mrf.mxu0
      %1673 = vmatprep.mubr.f32.mxu0 0.0
      %1674 = vmatmul.mubr.f32.gmra.mxu0 %v1503
      %v1675 = vpop.f32.mrf.mxu0
      %v1676 = vadd.f32 0.0, %v1675
      %v1677 = vpop.f32.mrf.mxu0
      %1678 = vmatprep.mubr.f32.mxu0 0.0
      %1679 = vmatmul.mubr.f32.gmra.mxu0 %v1505
      %v1680 = vpop.f32.mrf.mxu0
      %v1681 = vadd.f32 0.0, %v1680
      %v1682 = vpop.f32.mrf.mxu0
      %1683 = vmatprep.mubr.f32.mxu0 0.0
      %1684 = vmatmul.mubr.f32.gmra.mxu0 %v1507
      %v1685 = vpop.f32.mrf.mxu0
      %v1686 = vadd.f32 0.0, %v1685
      %v1687 = vpop.f32.mrf.mxu0
      %1688 = vmatprep.mubr.f32.mxu0 0.0
      %1689 = vmatmul.mubr.f32.gmra.mxu0 %v1509
      %v1690 = vpop.f32.mrf.mxu0
      %v1691 = vadd.f32 0.0, %v1690
      %v1692 = vpop.f32.mrf.mxu0
      %1693 = vmatprep.mubr.f32.mxu0 0.0
      %1694 = vmatmul.mubr.f32.gmra.mxu0 %v1511
      %v1695 = vpop.f32.mrf.mxu0
      %v1696 = vadd.f32 0.0, %v1695
      %v1697 = vpop.f32.mrf.mxu0
      %1698 = vmatprep.mubr.f32.mxu0 0.0
      %1699 = vmatmul.mubr.f32.gmra.mxu0 %v1513
      %v1700 = vpop.f32.mrf.mxu0
      %v1701 = vadd.f32 0.0, %v1700
      %v1702 = vpop.f32.mrf.mxu0
      %1703 = vmatprep.mubr.f32.mxu0 0.0
      %1704 = vmatmul.mubr.f32.gmra.mxu0 %v1515
      %v1705 = vpop.f32.mrf.mxu0
      %v1706 = vadd.f32 0.0, %v1705
      %v1707 = vpop.f32.mrf.mxu0
      %1708 = vmatprep.mubr.f32.mxu0 0.0
      %1709 = vmatmul.mubr.f32.gmra.mxu0 %v1517
      %v1710 = vpop.f32.mrf.mxu0
      %v1711 = vadd.f32 0.0, %v1710
      %v1712 = vpop.f32.mrf.mxu0
      %1713 = vmatprep.mubr.f32.mxu0 0.0
      %1714 = vmatmul.mubr.f32.gmra.mxu0 %v1519
      %v1715 = vpop.f32.mrf.mxu0
      %v1716 = vadd.f32 0.0, %v1715
      %v1717 = vpop.f32.mrf.mxu0
      %1718 = vmatprep.mubr.f32.mxu0 0.0
      %1719 = vmatmul.mubr.f32.gmra.mxu0 %v1521
      %v1720 = vpop.f32.mrf.mxu0
      %v1721 = vadd.f32 0.0, %v1720
      %v1722 = vpop.f32.mrf.mxu0
      %1723 = vmatprep.mubr.f32.mxu0 0.0
      %1724 = vmatmul.mubr.f32.gmra.mxu0 %v1523
      %v1725 = vpop.f32.mrf.mxu0
      %v1726 = vadd.f32 0.0, %v1725
      %v1727 = vpop.f32.mrf.mxu0
      %1728 = vmatprep.mubr.f32.mxu0 0.0
      %1729 = vmatmul.mubr.f32.gmra.mxu0 %v1525
      %v1730 = vpop.f32.mrf.mxu0
      %v1731 = vadd.f32 0.0, %v1730
      %v1732 = vpop.f32.mrf.mxu0
      %1733 = vmatprep.mubr.f32.mxu0 0.0
      %1734 = vmatmul.mubr.f32.gmra.mxu0 %v1527
      %v1735 = vpop.f32.mrf.mxu0
      %v1736 = vadd.f32 0.0, %v1735
      %v1737 = vpop.f32.mrf.mxu0
      %1738 = vmatprep.mubr.f32.mxu0 0.0
      %1739 = vmatmul.mubr.f32.gmra.mxu0 %v1529
      %v1740 = vpop.f32.mrf.mxu0
      %v1741 = vadd.f32 0.0, %v1740
      %v1742 = vpop.f32.mrf.mxu0
      %1743 = vmatprep.mubr.f32.mxu0 0.0
      %1744 = vmatmul.mubr.f32.gmra.mxu0 %v1531
      %v1745 = vpop.f32.mrf.mxu0
      %v1746 = vadd.f32 0.0, %v1745
      %v1747 = vpop.f32.mrf.mxu0
      %1748 = vmatprep.mubr.f32.mxu0 0.0
      %1749 = vmatmul.mubr.f32.gmra.mxu0 %v1533
      %v1750 = vpop.f32.mrf.mxu0
      %v1751 = vadd.f32 0.0, %v1750
      %v1752 = vpop.f32.mrf.mxu0
      %1753 = vmatprep.mubr.f32.mxu0 0.0
      %1754 = vmatmul.mubr.f32.gmra.mxu0 %v1535
      %v1755 = vpop.f32.mrf.mxu0
      %v1756 = vadd.f32 0.0, %v1755
      %v1757 = vpop.f32.mrf.mxu0
      %1758 = vmatprep.mubr.f32.mxu0 0.0
      %1759 = vmatmul.mubr.f32.gmra.mxu0 %v1537
      %v1760 = vpop.f32.mrf.mxu0
      %v1761 = vadd.f32 0.0, %v1760
      %v1762 = vpop.f32.mrf.mxu0
      %1763 = vdwg.mxu0
      %1796 = vrot.lane.b32.xlu0 %v1606, 112
      %v1797 = vpop.permute.xlu0 %1796
      %1798 = vrot.lane.b32.xlu0 %v1611, 112
      %v1799 = vpop.permute.xlu0 %1798
      %1800 = vrot.lane.b32.xlu0 %v1616, 112
      %v1801 = vpop.permute.xlu0 %1800
      %1802 = vrot.lane.b32.xlu0 %v1621, 112
      %v1803 = vpop.permute.xlu0 %1802
      %1804 = vrot.lane.b32.xlu0 %v1626, 112
      %v1805 = vpop.permute.xlu0 %1804
      %1806 = vrot.lane.b32.xlu0 %v1631, 112
      %v1807 = vpop.permute.xlu0 %1806
      %1808 = vrot.lane.b32.xlu0 %v1636, 112
      %v1809 = vpop.permute.xlu0 %1808
      %1810 = vrot.lane.b32.xlu0 %v1641, 112
      %v1811 = vpop.permute.xlu0 %1810
      %1812 = vrot.lane.b32.xlu0 %v1646, 112
      %v1813 = vpop.permute.xlu0 %1812
      %1814 = vrot.lane.b32.xlu0 %v1651, 112
      %v1815 = vpop.permute.xlu0 %1814
      %1816 = vrot.lane.b32.xlu0 %v1656, 112
      %v1817 = vpop.permute.xlu0 %1816
      %1818 = vrot.lane.b32.xlu0 %v1661, 112
      %v1819 = vpop.permute.xlu0 %1818
      %1820 = vrot.lane.b32.xlu0 %v1666, 112
      %v1821 = vpop.permute.xlu0 %1820
      %1822 = vrot.lane.b32.xlu0 %v1671, 112
      %v1823 = vpop.permute.xlu0 %1822
      %1824 = vrot.lane.b32.xlu0 %v1676, 112
      %v1825 = vpop.permute.xlu0 %1824
      %1826 = vrot.lane.b32.xlu0 %v1681, 112
      %v1827 = vpop.permute.xlu0 %1826
      %1828 = vrot.lane.b32.xlu0 %v1686, 112
      %v1829 = vpop.permute.xlu0 %1828
      %1830 = vrot.lane.b32.xlu0 %v1691, 112
      %v1831 = vpop.permute.xlu0 %1830
      %1832 = vrot.lane.b32.xlu0 %v1696, 112
      %v1833 = vpop.permute.xlu0 %1832
      %1834 = vrot.lane.b32.xlu0 %v1701, 112
      %v1835 = vpop.permute.xlu0 %1834
      %1836 = vrot.lane.b32.xlu0 %v1706, 112
      %v1837 = vpop.permute.xlu0 %1836
      %1838 = vrot.lane.b32.xlu0 %v1711, 112
      %v1839 = vpop.permute.xlu0 %1838
      %1840 = vrot.lane.b32.xlu0 %v1716, 112
      %v1841 = vpop.permute.xlu0 %1840
      %1842 = vrot.lane.b32.xlu0 %v1721, 112
      %v1843 = vpop.permute.xlu0 %1842
      %1844 = vrot.lane.b32.xlu0 %v1726, 112
      %v1845 = vpop.permute.xlu0 %1844
      %1846 = vrot.lane.b32.xlu0 %v1731, 112
      %v1847 = vpop.permute.xlu0 %1846
      %1848 = vrot.lane.b32.xlu0 %v1736, 112
      %v1849 = vpop.permute.xlu0 %1848
      %1850 = vrot.lane.b32.xlu0 %v1741, 112
      %v1851 = vpop.permute.xlu0 %1850
      %1852 = vrot.lane.b32.xlu0 %v1746, 112
      %v1853 = vpop.permute.xlu0 %1852
      %1854 = vrot.lane.b32.xlu0 %v1751, 112
      %v1855 = vpop.permute.xlu0 %1854
      %1856 = vrot.lane.b32.xlu0 %v1756, 112
      %v1857 = vpop.permute.xlu0 %1856
      %1858 = vrot.lane.b32.xlu0 %v1761, 112
      %v1859 = vpop.permute.xlu0 %1858
      %v1892 = vmul.f32 %v1606, %v1797
      %v1893 = vmul.f32 %v1611, %v1799
      %v1894 = vmul.f32 %v1616, %v1801
      %v1895 = vmul.f32 %v1621, %v1803
      %v1896 = vmul.f32 %v1626, %v1805
      %v1897 = vmul.f32 %v1631, %v1807
      %v1898 = vmul.f32 %v1636, %v1809
      %v1899 = vmul.f32 %v1641, %v1811
      %v1900 = vmul.f32 %v1646, %v1813
      %v1901 = vmul.f32 %v1651, %v1815
      %v1902 = vmul.f32 %v1656, %v1817
      %v1903 = vmul.f32 %v1661, %v1819
      %v1904 = vmul.f32 %v1666, %v1821
      %v1905 = vmul.f32 %v1671, %v1823
      %v1906 = vmul.f32 %v1676, %v1825
      %v1907 = vmul.f32 %v1681, %v1827
      %v1908 = vmul.f32 %v1686, %v1829
      %v1909 = vmul.f32 %v1691, %v1831
      %v1910 = vmul.f32 %v1696, %v1833
      %v1911 = vmul.f32 %v1701, %v1835
      %v1912 = vmul.f32 %v1706, %v1837
      %v1913 = vmul.f32 %v1711, %v1839
      %v1914 = vmul.f32 %v1716, %v1841
      %v1915 = vmul.f32 %v1721, %v1843
      %v1916 = vmul.f32 %v1726, %v1845
      %v1917 = vmul.f32 %v1731, %v1847
      %v1918 = vmul.f32 %v1736, %v1849
      %v1919 = vmul.f32 %v1741, %v1851
      %v1920 = vmul.f32 %v1746, %v1853
      %v1921 = vmul.f32 %v1751, %v1855
      %v1922 = vmul.f32 %v1756, %v1857
      %v1923 = vmul.f32 %v1761, %v1859
      %v1924 = vadd.f32 %v1379, %v1892
      %v1925 = vadd.f32 %v1380, %v1893
      %v1926 = vadd.f32 %v1381, %v1894
      %v1927 = vadd.f32 %v1382, %v1895
      %v1928 = vadd.f32 %v1383, %v1896
      %v1929 = vadd.f32 %v1384, %v1897
      %v1930 = vadd.f32 %v1385, %v1898
      %v1931 = vadd.f32 %v1386, %v1899
      %v1932 = vadd.f32 %v1387, %v1900
      %v1933 = vadd.f32 %v1388, %v1901
      %v1934 = vadd.f32 %v1389, %v1902
      %v1935 = vadd.f32 %v1390, %v1903
      %v1936 = vadd.f32 %v1391, %v1904
      %v1937 = vadd.f32 %v1392, %v1905
      %v1938 = vadd.f32 %v1393, %v1906
      %v1939 = vadd.f32 %v1394, %v1907
      %v1940 = vadd.f32 %v1395, %v1908
      %v1941 = vadd.f32 %v1396, %v1909
      %v1942 = vadd.f32 %v1397, %v1910
      %v1943 = vadd.f32 %v1398, %v1911
      %v1944 = vadd.f32 %v1399, %v1912
      %v1945 = vadd.f32 %v1400, %v1913
      %v1946 = vadd.f32 %v1401, %v1914
      %v1947 = vadd.f32 %v1402, %v1915
      %v1948 = vadd.f32 %v1403, %v1916
      %v1949 = vadd.f32 %v1404, %v1917
      %v1950 = vadd.f32 %v1405, %v1918
      %v1951 = vadd.f32 %v1406, %v1919
      %v1952 = vadd.f32 %v1407, %v1920
      %v1953 = vadd.f32 %v1408, %v1921
      %v1954 = vadd.f32 %v1409, %v1922
      %v1955 = vadd.f32 %v1410, %v1923
      %v1956 = vld [vmem:[%s298] sm:$0xff]
      %v1957 = vld [vmem:[%s298 + $0x8] sm:$0xff]
      %v1958 = vld [vmem:[%s298 + $0x10] sm:$0xff]
      %v1959 = vld [vmem:[%s298 + $0x18] sm:$0xff]
      %v1960 = vld [vmem:[%s298 + $0x20] sm:$0xff]
      %v1961 = vld [vmem:[%s298 + $0x28] sm:$0xff]
      %v1962 = vld [vmem:[%s298 + $0x30] sm:$0xff]
      %v1963 = vld [vmem:[%s298 + $0x38] sm:$0xff]
      %v1964 = vld [vmem:[%s298 + $0x40] sm:$0xff]
      %v1965 = vld [vmem:[%s298 + $0x48] sm:$0xff]
      %v1966 = vld [vmem:[%s298 + $0x50] sm:$0xff]
      %v1967 = vld [vmem:[%s298 + $0x58] sm:$0xff]
      %v1968 = vld [vmem:[%s298 + $0x60] sm:$0xff]
      %v1969 = vld [vmem:[%s298 + $0x68] sm:$0xff]
      %v1970 = vld [vmem:[%s298 + $0x70] sm:$0xff]
      %v1971 = vld [vmem:[%s298 + $0x78] sm:$0xff]
      %v1972 = vld [vmem:[%s298 + $0x80] sm:$0xff]
      %v1973 = vld [vmem:[%s298 + $0x88] sm:$0xff]
      %v1974 = vld [vmem:[%s298 + $0x90] sm:$0xff]
      %v1975 = vld [vmem:[%s298 + $0x98] sm:$0xff]
      %v1976 = vld [vmem:[%s298 + $0xa0] sm:$0xff]
      %v1977 = vld [vmem:[%s298 + $0xa8] sm:$0xff]
      %v1978 = vld [vmem:[%s298 + $0xb0] sm:$0xff]
      %v1979 = vld [vmem:[%s298 + $0xb8] sm:$0xff]
      %v1980 = vld [vmem:[%s298 + $0xc0] sm:$0xff]
      %v1981 = vld [vmem:[%s298 + $0xc8] sm:$0xff]
      %v1982 = vld [vmem:[%s298 + $0xd0] sm:$0xff]
      %v1983 = vld [vmem:[%s298 + $0xd8] sm:$0xff]
      %v1984 = vld [vmem:[%s298 + $0xe0] sm:$0xff]
      %v1985 = vld [vmem:[%s298 + $0xe8] sm:$0xff]
      %v1986 = vld [vmem:[%s298 + $0xf0] sm:$0xff]
      %v1987 = vld [vmem:[%s298 + $0xf8] sm:$0xff]
      %v1988 = vld [vmem:[%s3] sm:$0xff]
      %v1989 = vld [vmem:[%s3 + $0x8] sm:$0xff]
      %v1990 = vld [vmem:[%s4] sm:$0xff]
      %v1991 = vld [vmem:[%s4 + $0x8] sm:$0xff]
      %v1993 = vsel %vm352, %v1924, 0
      %v1996 = vsel %vm352, %v1925, 0
      %v1999 = vsel %vm352, %v1926, 0
      %v2002 = vsel %vm352, %v1927, 0
      %v2005 = vsel %vm352, %v1928, 0
      %v2008 = vsel %vm352, %v1929, 0
      %v2011 = vsel %vm352, %v1930, 0
      %v2014 = vsel %vm352, %v1931, 0
      %v2017 = vsel %vm352, %v1932, 0
      %v2020 = vsel %vm352, %v1933, 0
      %v2023 = vsel %vm352, %v1934, 0
      %v2026 = vsel %vm352, %v1935, 0
      %v2029 = vsel %vm352, %v1936, 0
      %v2032 = vsel %vm352, %v1937, 0
      %v2035 = vsel %vm352, %v1938, 0
      %v2038 = vsel %vm352, %v1939, 0
      %v2041 = vsel %vm352, %v1940, 0
      %v2044 = vsel %vm352, %v1941, 0
      %v2047 = vsel %vm352, %v1942, 0
      %v2050 = vsel %vm352, %v1943, 0
      %v2053 = vsel %vm352, %v1944, 0
      %v2056 = vsel %vm352, %v1945, 0
      %v2059 = vsel %vm352, %v1946, 0
      %v2062 = vsel %vm352, %v1947, 0
      %v2065 = vsel %vm352, %v1948, 0
      %v2068 = vsel %vm352, %v1949, 0
      %v2071 = vsel %vm352, %v1950, 0
      %v2074 = vsel %vm352, %v1951, 0
      %v2077 = vsel %vm352, %v1952, 0
      %v2080 = vsel %vm352, %v1953, 0
      %v2083 = vsel %vm352, %v1954, 0
      %v2086 = vsel %vm352, %v1955, 0
      %2088 = vmatprep.subr.mxu0 0.0
      %2089 = vmatpush1.msra.mxu0 0.0
      %2090 = vmatprep.subr.mxu0 0.0
      %2091 = vmatpush1.msra.mxu0 0.0
      %2092 = vmatprep.subr.mxu0 0.0
      %2093 = vmatpush1.msra.mxu0 0.0
      %2094 = vmatprep.subr.mxu0 0.0
      %2095 = vmatpush1.msra.mxu0 0.0
      %2096 = vmatprep.subr.mxu0 0.0
      %2097 = vmatpush1.msra.mxu0 0.0
      %2098 = vmatprep.subr.mxu0 0.0
      %2099 = vmatpush1.msra.mxu0 0.0
      %2100 = vmatprep.subr.mxu0 0.0
      %2101 = vmatpush1.msra.mxu0 0.0
      %2102 = vmatprep.subr.mxu0 0.0
      %2103 = vmatpush1.msra.mxu0 0.0
      %2104 = vmatprep.subr.mxu0 0.0
      %2105 = vmatpush1.msra.mxu0 0.0
      %2106 = vmatprep.subr.mxu0 0.0
      %2107 = vmatpush1.msra.mxu0 0.0
      %2108 = vmatprep.subr.mxu0 0.0
      %2109 = vmatpush1.msra.mxu0 0.0
      %2110 = vmatprep.subr.mxu0 0.0
      %2111 = vmatpush1.msra.mxu0 0.0
      %2112 = vmatprep.subr.mxu0 0.0
      %2113 = vmatpush1.msra.mxu0 0.0
      %2114 = vmatprep.subr.mxu0 0.0
      %2115 = vmatpush1.msra.mxu0 0.0
      %2116 = vmatprep.subr.mxu0 0.0
      %2117 = vmatpush1.msra.mxu0 %v1991
      %2118 = vmatprep.subr.mxu0 0.0
      %2119 = vmatpush1.msra.mxu0 %v1990
      %2120 = vmatprep.subr.mxu0 0.0
      %2121 = vmatpush2.msra.mxu0 0.0
      %2122 = vmatprep.subr.mxu0 0.0
      %2123 = vmatpush2.msra.mxu0 0.0
      %2124 = vmatprep.subr.mxu0 0.0
      %2125 = vmatpush2.msra.mxu0 0.0
      %2126 = vmatprep.subr.mxu0 0.0
      %2127 = vmatpush2.msra.mxu0 0.0
      %2128 = vmatprep.subr.mxu0 0.0
      %2129 = vmatpush2.msra.mxu0 0.0
      %2130 = vmatprep.subr.mxu0 0.0
      %2131 = vmatpush2.msra.mxu0 0.0
      %2132 = vmatprep.subr.mxu0 0.0
      %2133 = vmatpush2.msra.mxu0 0.0
      %2134 = vmatprep.subr.mxu0 0.0
      %2135 = vmatpush2.msra.mxu0 0.0
      %2136 = vmatprep.subr.mxu0 0.0
      %2137 = vmatpush2.msra.mxu0 0.0
      %2138 = vmatprep.subr.mxu0 0.0
      %2139 = vmatpush2.msra.mxu0 0.0
      %2140 = vmatprep.subr.mxu0 0.0
      %2141 = vmatpush2.msra.mxu0 0.0
      %2142 = vmatprep.subr.mxu0 0.0
      %2143 = vmatpush2.msra.mxu0 0.0
      %2144 = vmatprep.subr.mxu0 0.0
      %2145 = vmatpush2.msra.mxu0 0.0
      %2146 = vmatprep.subr.mxu0 0.0
      %2147 = vmatpush2.msra.mxu0 0.0
      %2148 = vmatprep.subr.mxu0 0.0
      %2149 = vmatpush2.msra.mxu0 0.0
      %2150 = vmatprep.subr.mxu0 0.0
      %2151 = vmatpush2.msra.mxu0 0.0
      %2152 = vmatprep.mubr.f32.mxu0 0.0
      %2153 = vmatmul.mubr.f32.gmra.mxu0 %v1993
      %v2154 = vpop.f32.mrf.mxu0
      %v2155 = vadd.f32 0.0, %v2154
      %v2156 = vpop.f32.mrf.mxu0
      %2157 = vmatprep.mubr.f32.mxu0 0.0
      %2158 = vmatmul.mubr.f32.gmra.mxu0 %v1996
      %v2159 = vpop.f32.mrf.mxu0
      %v2160 = vadd.f32 0.0, %v2159
      %v2161 = vpop.f32.mrf.mxu0
      %2162 = vmatprep.mubr.f32.mxu0 0.0
      %2163 = vmatmul.mubr.f32.gmra.mxu0 %v1999
      %v2164 = vpop.f32.mrf.mxu0
      %v2165 = vadd.f32 0.0, %v2164
      %v2166 = vpop.f32.mrf.mxu0
      %2167 = vmatprep.mubr.f32.mxu0 0.0
      %2168 = vmatmul.mubr.f32.gmra.mxu0 %v2002
      %v2169 = vpop.f32.mrf.mxu0
      %v2170 = vadd.f32 0.0, %v2169
      %v2171 = vpop.f32.mrf.mxu0
      %2172 = vmatprep.mubr.f32.mxu0 0.0
      %2173 = vmatmul.mubr.f32.gmra.mxu0 %v2005
      %v2174 = vpop.f32.mrf.mxu0
      %v2175 = vadd.f32 0.0, %v2174
      %v2176 = vpop.f32.mrf.mxu0
      %2177 = vmatprep.mubr.f32.mxu0 0.0
      %2178 = vmatmul.mubr.f32.gmra.mxu0 %v2008
      %v2179 = vpop.f32.mrf.mxu0
      %v2180 = vadd.f32 0.0, %v2179
      %v2181 = vpop.f32.mrf.mxu0
      %2182 = vmatprep.mubr.f32.mxu0 0.0
      %2183 = vmatmul.mubr.f32.gmra.mxu0 %v2011
      %v2184 = vpop.f32.mrf.mxu0
      %v2185 = vadd.f32 0.0, %v2184
      %v2186 = vpop.f32.mrf.mxu0
      %2187 = vmatprep.mubr.f32.mxu0 0.0
      %2188 = vmatmul.mubr.f32.gmra.mxu0 %v2014
      %v2189 = vpop.f32.mrf.mxu0
      %v2190 = vadd.f32 0.0, %v2189
      %v2191 = vpop.f32.mrf.mxu0
      %2192 = vmatprep.mubr.f32.mxu0 0.0
      %2193 = vmatmul.mubr.f32.gmra.mxu0 %v2017
      %v2194 = vpop.f32.mrf.mxu0
      %v2195 = vadd.f32 0.0, %v2194
      %v2196 = vpop.f32.mrf.mxu0
      %2197 = vmatprep.mubr.f32.mxu0 0.0
      %2198 = vmatmul.mubr.f32.gmra.mxu0 %v2020
      %v2199 = vpop.f32.mrf.mxu0
      %v2200 = vadd.f32 0.0, %v2199
      %v2201 = vpop.f32.mrf.mxu0
      %2202 = vmatprep.mubr.f32.mxu0 0.0
      %2203 = vmatmul.mubr.f32.gmra.mxu0 %v2023
      %v2204 = vpop.f32.mrf.mxu0
      %v2205 = vadd.f32 0.0, %v2204
      %v2206 = vpop.f32.mrf.mxu0
      %2207 = vmatprep.mubr.f32.mxu0 0.0
      %2208 = vmatmul.mubr.f32.gmra.mxu0 %v2026
      %v2209 = vpop.f32.mrf.mxu0
      %v2210 = vadd.f32 0.0, %v2209
      %v2211 = vpop.f32.mrf.mxu0
      %2212 = vmatprep.mubr.f32.mxu0 0.0
      %2213 = vmatmul.mubr.f32.gmra.mxu0 %v2029
      %v2214 = vpop.f32.mrf.mxu0
      %v2215 = vadd.f32 0.0, %v2214
      %v2216 = vpop.f32.mrf.mxu0
      %2217 = vmatprep.mubr.f32.mxu0 0.0
      %2218 = vmatmul.mubr.f32.gmra.mxu0 %v2032
      %v2219 = vpop.f32.mrf.mxu0
      %v2220 = vadd.f32 0.0, %v2219
      %v2221 = vpop.f32.mrf.mxu0
      %2222 = vmatprep.mubr.f32.mxu0 0.0
      %2223 = vmatmul.mubr.f32.gmra.mxu0 %v2035
      %v2224 = vpop.f32.mrf.mxu0
      %v2225 = vadd.f32 0.0, %v2224
      %v2226 = vpop.f32.mrf.mxu0
      %2227 = vmatprep.mubr.f32.mxu0 0.0
      %2228 = vmatmul.mubr.f32.gmra.mxu0 %v2038
      %v2229 = vpop.f32.mrf.mxu0
      %v2230 = vadd.f32 0.0, %v2229
      %v2231 = vpop.f32.mrf.mxu0
      %2232 = vmatprep.mubr.f32.mxu0 0.0
      %2233 = vmatmul.mubr.f32.gmra.mxu0 %v2041
      %v2234 = vpop.f32.mrf.mxu0
      %v2235 = vadd.f32 0.0, %v2234
      %v2236 = vpop.f32.mrf.mxu0
      %2237 = vmatprep.mubr.f32.mxu0 0.0
      %2238 = vmatmul.mubr.f32.gmra.mxu0 %v2044
      %v2239 = vpop.f32.mrf.mxu0
      %v2240 = vadd.f32 0.0, %v2239
      %v2241 = vpop.f32.mrf.mxu0
      %2242 = vmatprep.mubr.f32.mxu0 0.0
      %2243 = vmatmul.mubr.f32.gmra.mxu0 %v2047
      %v2244 = vpop.f32.mrf.mxu0
      %v2245 = vadd.f32 0.0, %v2244
      %v2246 = vpop.f32.mrf.mxu0
      %2247 = vmatprep.mubr.f32.mxu0 0.0
      %2248 = vmatmul.mubr.f32.gmra.mxu0 %v2050
      %v2249 = vpop.f32.mrf.mxu0
      %v2250 = vadd.f32 0.0, %v2249
      %v2251 = vpop.f32.mrf.mxu0
      %2252 = vmatprep.mubr.f32.mxu0 0.0
      %2253 = vmatmul.mubr.f32.gmra.mxu0 %v2053
      %v2254 = vpop.f32.mrf.mxu0
      %v2255 = vadd.f32 0.0, %v2254
      %v2256 = vpop.f32.mrf.mxu0
      %2257 = vmatprep.mubr.f32.mxu0 0.0
      %2258 = vmatmul.mubr.f32.gmra.mxu0 %v2056
      %v2259 = vpop.f32.mrf.mxu0
      %v2260 = vadd.f32 0.0, %v2259
      %v2261 = vpop.f32.mrf.mxu0
      %2262 = vmatprep.mubr.f32.mxu0 0.0
      %2263 = vmatmul.mubr.f32.gmra.mxu0 %v2059
      %v2264 = vpop.f32.mrf.mxu0
      %v2265 = vadd.f32 0.0, %v2264
      %v2266 = vpop.f32.mrf.mxu0
      %2267 = vmatprep.mubr.f32.mxu0 0.0
      %2268 = vmatmul.mubr.f32.gmra.mxu0 %v2062
      %v2269 = vpop.f32.mrf.mxu0
      %v2270 = vadd.f32 0.0, %v2269
      %v2271 = vpop.f32.mrf.mxu0
      %2272 = vmatprep.mubr.f32.mxu0 0.0
      %2273 = vmatmul.mubr.f32.gmra.mxu0 %v2065
      %v2274 = vpop.f32.mrf.mxu0
      %v2275 = vadd.f32 0.0, %v2274
      %v2276 = vpop.f32.mrf.mxu0
      %2277 = vmatprep.mubr.f32.mxu0 0.0
      %2278 = vmatmul.mubr.f32.gmra.mxu0 %v2068
      %v2279 = vpop.f32.mrf.mxu0
      %v2280 = vadd.f32 0.0, %v2279
      %v2281 = vpop.f32.mrf.mxu0
      %2282 = vmatprep.mubr.f32.mxu0 0.0
      %2283 = vmatmul.mubr.f32.gmra.mxu0 %v2071
      %v2284 = vpop.f32.mrf.mxu0
      %v2285 = vadd.f32 0.0, %v2284
      %v2286 = vpop.f32.mrf.mxu0
      %2287 = vmatprep.mubr.f32.mxu0 0.0
      %2288 = vmatmul.mubr.f32.gmra.mxu0 %v2074
      %v2289 = vpop.f32.mrf.mxu0
      %v2290 = vadd.f32 0.0, %v2289
      %v2291 = vpop.f32.mrf.mxu0
      %2292 = vmatprep.mubr.f32.mxu0 0.0
      %2293 = vmatmul.mubr.f32.gmra.mxu0 %v2077
      %v2294 = vpop.f32.mrf.mxu0
      %v2295 = vadd.f32 0.0, %v2294
      %v2296 = vpop.f32.mrf.mxu0
      %2297 = vmatprep.mubr.f32.mxu0 0.0
      %2298 = vmatmul.mubr.f32.gmra.mxu0 %v2080
      %v2299 = vpop.f32.mrf.mxu0
      %v2300 = vadd.f32 0.0, %v2299
      %v2301 = vpop.f32.mrf.mxu0
      %2302 = vmatprep.mubr.f32.mxu0 0.0
      %2303 = vmatmul.mubr.f32.gmra.mxu0 %v2083
      %v2304 = vpop.f32.mrf.mxu0
      %v2305 = vadd.f32 0.0, %v2304
      %v2306 = vpop.f32.mrf.mxu0
      %2307 = vmatprep.mubr.f32.mxu0 0.0
      %2308 = vmatmul.mubr.f32.gmra.mxu0 %v2086
      %v2309 = vpop.f32.mrf.mxu0
      %v2310 = vadd.f32 0.0, %v2309
      %v2311 = vpop.f32.mrf.mxu0
      %2312 = vdwg.mxu0
      %v2314 = vsel %vm352, %v1956, 0
      %v2317 = vsel %vm352, %v1957, 0
      %v2320 = vsel %vm352, %v1958, 0
      %v2323 = vsel %vm352, %v1959, 0
      %v2326 = vsel %vm352, %v1960, 0
      %v2329 = vsel %vm352, %v1961, 0
      %v2332 = vsel %vm352, %v1962, 0
      %v2335 = vsel %vm352, %v1963, 0
      %v2338 = vsel %vm352, %v1964, 0
      %v2341 = vsel %vm352, %v1965, 0
      %v2344 = vsel %vm352, %v1966, 0
      %v2347 = vsel %vm352, %v1967, 0
      %v2350 = vsel %vm352, %v1968, 0
      %v2353 = vsel %vm352, %v1969, 0
      %v2356 = vsel %vm352, %v1970, 0
      %v2359 = vsel %vm352, %v1971, 0
      %v2362 = vsel %vm352, %v1972, 0
      %v2365 = vsel %vm352, %v1973, 0
      %v2368 = vsel %vm352, %v1974, 0
      %v2371 = vsel %vm352, %v1975, 0
      %v2374 = vsel %vm352, %v1976, 0
      %v2377 = vsel %vm352, %v1977, 0
      %v2380 = vsel %vm352, %v1978, 0
      %v2383 = vsel %vm352, %v1979, 0
      %v2386 = vsel %vm352, %v1980, 0
      %v2389 = vsel %vm352, %v1981, 0
      %v2392 = vsel %vm352, %v1982, 0
      %v2395 = vsel %vm352, %v1983, 0
      %v2398 = vsel %vm352, %v1984, 0
      %v2401 = vsel %vm352, %v1985, 0
      %v2404 = vsel %vm352, %v1986, 0
      %v2407 = vsel %vm352, %v1987, 0
      %2409 = vmatprep.subr.mxu0 0.0
      %2410 = vmatpush1.msra.mxu0 0.0
      %2411 = vmatprep.subr.mxu0 0.0
      %2412 = vmatpush1.msra.mxu0 0.0
      %2413 = vmatprep.subr.mxu0 0.0
      %2414 = vmatpush1.msra.mxu0 0.0
      %2415 = vmatprep.subr.mxu0 0.0
      %2416 = vmatpush1.msra.mxu0 0.0
      %2417 = vmatprep.subr.mxu0 0.0
      %2418 = vmatpush1.msra.mxu0 0.0
      %2419 = vmatprep.subr.mxu0 0.0
      %2420 = vmatpush1.msra.mxu0 0.0
      %2421 = vmatprep.subr.mxu0 0.0
      %2422 = vmatpush1.msra.mxu0 0.0
      %2423 = vmatprep.subr.mxu0 0.0
      %2424 = vmatpush1.msra.mxu0 0.0
      %2425 = vmatprep.subr.mxu0 0.0
      %2426 = vmatpush1.msra.mxu0 0.0
      %2427 = vmatprep.subr.mxu0 0.0
      %2428 = vmatpush1.msra.mxu0 0.0
      %2429 = vmatprep.subr.mxu0 0.0
      %2430 = vmatpush1.msra.mxu0 0.0
      %2431 = vmatprep.subr.mxu0 0.0
      %2432 = vmatpush1.msra.mxu0 0.0
      %2433 = vmatprep.subr.mxu0 0.0
      %2434 = vmatpush1.msra.mxu0 0.0
      %2435 = vmatprep.subr.mxu0 0.0
      %2436 = vmatpush1.msra.mxu0 0.0
      %2437 = vmatprep.subr.mxu0 0.0
      %2438 = vmatpush1.msra.mxu0 %v1989
      %2439 = vmatprep.subr.mxu0 0.0
      %2440 = vmatpush1.msra.mxu0 %v1988
      %2441 = vmatprep.subr.mxu0 0.0
      %2442 = vmatpush2.msra.mxu0 0.0
      %2443 = vmatprep.subr.mxu0 0.0
      %2444 = vmatpush2.msra.mxu0 0.0
      %2445 = vmatprep.subr.mxu0 0.0
      %2446 = vmatpush2.msra.mxu0 0.0
      %2447 = vmatprep.subr.mxu0 0.0
      %2448 = vmatpush2.msra.mxu0 0.0
      %2449 = vmatprep.subr.mxu0 0.0
      %2450 = vmatpush2.msra.mxu0 0.0
      %2451 = vmatprep.subr.mxu0 0.0
      %2452 = vmatpush2.msra.mxu0 0.0
      %2453 = vmatprep.subr.mxu0 0.0
      %2454 = vmatpush2.msra.mxu0 0.0
      %2455 = vmatprep.subr.mxu0 0.0
      %2456 = vmatpush2.msra.mxu0 0.0
      %2457 = vmatprep.subr.mxu0 0.0
      %2458 = vmatpush2.msra.mxu0 0.0
      %2459 = vmatprep.subr.mxu0 0.0
      %2460 = vmatpush2.msra.mxu0 0.0
      %2461 = vmatprep.subr.mxu0 0.0
      %2462 = vmatpush2.msra.mxu0 0.0
      %2463 = vmatprep.subr.mxu0 0.0
      %2464 = vmatpush2.msra.mxu0 0.0
      %2465 = vmatprep.subr.mxu0 0.0
      %2466 = vmatpush2.msra.mxu0 0.0
      %2467 = vmatprep.subr.mxu0 0.0
      %2468 = vmatpush2.msra.mxu0 0.0
      %2469 = vmatprep.subr.mxu0 0.0
      %2470 = vmatpush2.msra.mxu0 0.0
      %2471 = vmatprep.subr.mxu0 0.0
      %2472 = vmatpush2.msra.mxu0 0.0
      %2473 = vmatprep.mubr.f32.mxu0 0.0
      %2474 = vmatmul.mubr.f32.gmra.mxu0 %v2314
      %v2475 = vpop.f32.mrf.mxu0
      %v2476 = vadd.f32 %v2155, %v2475
      %v2477 = vpop.f32.mrf.mxu0
      %2478 = vmatprep.mubr.f32.mxu0 0.0
      %2479 = vmatmul.mubr.f32.gmra.mxu0 %v2317
      %v2480 = vpop.f32.mrf.mxu0
      %v2481 = vadd.f32 %v2160, %v2480
      %v2482 = vpop.f32.mrf.mxu0
      %2483 = vmatprep.mubr.f32.mxu0 0.0
      %2484 = vmatmul.mubr.f32.gmra.mxu0 %v2320
      %v2485 = vpop.f32.mrf.mxu0
      %v2486 = vadd.f32 %v2165, %v2485
      %v2487 = vpop.f32.mrf.mxu0
      %2488 = vmatprep.mubr.f32.mxu0 0.0
      %2489 = vmatmul.mubr.f32.gmra.mxu0 %v2323
      %v2490 = vpop.f32.mrf.mxu0
      %v2491 = vadd.f32 %v2170, %v2490
      %v2492 = vpop.f32.mrf.mxu0
      %2493 = vmatprep.mubr.f32.mxu0 0.0
      %2494 = vmatmul.mubr.f32.gmra.mxu0 %v2326
      %v2495 = vpop.f32.mrf.mxu0
      %v2496 = vadd.f32 %v2175, %v2495
      %v2497 = vpop.f32.mrf.mxu0
      %2498 = vmatprep.mubr.f32.mxu0 0.0
      %2499 = vmatmul.mubr.f32.gmra.mxu0 %v2329
      %v2500 = vpop.f32.mrf.mxu0
      %v2501 = vadd.f32 %v2180, %v2500
      %v2502 = vpop.f32.mrf.mxu0
      %2503 = vmatprep.mubr.f32.mxu0 0.0
      %2504 = vmatmul.mubr.f32.gmra.mxu0 %v2332
      %v2505 = vpop.f32.mrf.mxu0
      %v2506 = vadd.f32 %v2185, %v2505
      %v2507 = vpop.f32.mrf.mxu0
      %2508 = vmatprep.mubr.f32.mxu0 0.0
      %2509 = vmatmul.mubr.f32.gmra.mxu0 %v2335
      %v2510 = vpop.f32.mrf.mxu0
      %v2511 = vadd.f32 %v2190, %v2510
      %v2512 = vpop.f32.mrf.mxu0
      %2513 = vmatprep.mubr.f32.mxu0 0.0
      %2514 = vmatmul.mubr.f32.gmra.mxu0 %v2338
      %v2515 = vpop.f32.mrf.mxu0
      %v2516 = vadd.f32 %v2195, %v2515
      %v2517 = vpop.f32.mrf.mxu0
      %2518 = vmatprep.mubr.f32.mxu0 0.0
      %2519 = vmatmul.mubr.f32.gmra.mxu0 %v2341
      %v2520 = vpop.f32.mrf.mxu0
      %v2521 = vadd.f32 %v2200, %v2520
      %v2522 = vpop.f32.mrf.mxu0
      %2523 = vmatprep.mubr.f32.mxu0 0.0
      %2524 = vmatmul.mubr.f32.gmra.mxu0 %v2344
      %v2525 = vpop.f32.mrf.mxu0
      %v2526 = vadd.f32 %v2205, %v2525
      %v2527 = vpop.f32.mrf.mxu0
      %2528 = vmatprep.mubr.f32.mxu0 0.0
      %2529 = vmatmul.mubr.f32.gmra.mxu0 %v2347
      %v2530 = vpop.f32.mrf.mxu0
      %v2531 = vadd.f32 %v2210, %v2530
      %v2532 = vpop.f32.mrf.mxu0
      %2533 = vmatprep.mubr.f32.mxu0 0.0
      %2534 = vmatmul.mubr.f32.gmra.mxu0 %v2350
      %v2535 = vpop.f32.mrf.mxu0
      %v2536 = vadd.f32 %v2215, %v2535
      %v2537 = vpop.f32.mrf.mxu0
      %2538 = vmatprep.mubr.f32.mxu0 0.0
      %2539 = vmatmul.mubr.f32.gmra.mxu0 %v2353
      %v2540 = vpop.f32.mrf.mxu0
      %v2541 = vadd.f32 %v2220, %v2540
      %v2542 = vpop.f32.mrf.mxu0
      %2543 = vmatprep.mubr.f32.mxu0 0.0
      %2544 = vmatmul.mubr.f32.gmra.mxu0 %v2356
      %v2545 = vpop.f32.mrf.mxu0
      %v2546 = vadd.f32 %v2225, %v2545
      %v2547 = vpop.f32.mrf.mxu0
      %2548 = vmatprep.mubr.f32.mxu0 0.0
      %2549 = vmatmul.mubr.f32.gmra.mxu0 %v2359
      %v2550 = vpop.f32.mrf.mxu0
      %v2551 = vadd.f32 %v2230, %v2550
      %v2552 = vpop.f32.mrf.mxu0
      %2553 = vmatprep.mubr.f32.mxu0 0.0
      %2554 = vmatmul.mubr.f32.gmra.mxu0 %v2362
      %v2555 = vpop.f32.mrf.mxu0
      %v2556 = vadd.f32 %v2235, %v2555
      %v2557 = vpop.f32.mrf.mxu0
      %2558 = vmatprep.mubr.f32.mxu0 0.0
      %2559 = vmatmul.mubr.f32.gmra.mxu0 %v2365
      %v2560 = vpop.f32.mrf.mxu0
      %v2561 = vadd.f32 %v2240, %v2560
      %v2562 = vpop.f32.mrf.mxu0
      %2563 = vmatprep.mubr.f32.mxu0 0.0
      %2564 = vmatmul.mubr.f32.gmra.mxu0 %v2368
      %v2565 = vpop.f32.mrf.mxu0
      %v2566 = vadd.f32 %v2245, %v2565
      %v2567 = vpop.f32.mrf.mxu0
      %2568 = vmatprep.mubr.f32.mxu0 0.0
      %2569 = vmatmul.mubr.f32.gmra.mxu0 %v2371
      %v2570 = vpop.f32.mrf.mxu0
      %v2571 = vadd.f32 %v2250, %v2570
      %v2572 = vpop.f32.mrf.mxu0
      %2573 = vmatprep.mubr.f32.mxu0 0.0
      %2574 = vmatmul.mubr.f32.gmra.mxu0 %v2374
      %v2575 = vpop.f32.mrf.mxu0
      %v2576 = vadd.f32 %v2255, %v2575
      %v2577 = vpop.f32.mrf.mxu0
      %2578 = vmatprep.mubr.f32.mxu0 0.0
      %2579 = vmatmul.mubr.f32.gmra.mxu0 %v2377
      %v2580 = vpop.f32.mrf.mxu0
      %v2581 = vadd.f32 %v2260, %v2580
      %v2582 = vpop.f32.mrf.mxu0
      %2583 = vmatprep.mubr.f32.mxu0 0.0
      %2584 = vmatmul.mubr.f32.gmra.mxu0 %v2380
      %v2585 = vpop.f32.mrf.mxu0
      %v2586 = vadd.f32 %v2265, %v2585
      %v2587 = vpop.f32.mrf.mxu0
      %2588 = vmatprep.mubr.f32.mxu0 0.0
      %2589 = vmatmul.mubr.f32.gmra.mxu0 %v2383
      %v2590 = vpop.f32.mrf.mxu0
      %v2591 = vadd.f32 %v2270, %v2590
      %v2592 = vpop.f32.mrf.mxu0
      %2593 = vmatprep.mubr.f32.mxu0 0.0
      %2594 = vmatmul.mubr.f32.gmra.mxu0 %v2386
      %v2595 = vpop.f32.mrf.mxu0
      %v2596 = vadd.f32 %v2275, %v2595
      %v2597 = vpop.f32.mrf.mxu0
      %2598 = vmatprep.mubr.f32.mxu0 0.0
      %2599 = vmatmul.mubr.f32.gmra.mxu0 %v2389
      %v2600 = vpop.f32.mrf.mxu0
      %v2601 = vadd.f32 %v2280, %v2600
      %v2602 = vpop.f32.mrf.mxu0
      %2603 = vmatprep.mubr.f32.mxu0 0.0
      %2604 = vmatmul.mubr.f32.gmra.mxu0 %v2392
      %v2605 = vpop.f32.mrf.mxu0
      %v2606 = vadd.f32 %v2285, %v2605
      %v2607 = vpop.f32.mrf.mxu0
      %2608 = vmatprep.mubr.f32.mxu0 0.0
      %2609 = vmatmul.mubr.f32.gmra.mxu0 %v2395
      %v2610 = vpop.f32.mrf.mxu0
      %v2611 = vadd.f32 %v2290, %v2610
      %v2612 = vpop.f32.mrf.mxu0
      %2613 = vmatprep.mubr.f32.mxu0 0.0
      %2614 = vmatmul.mubr.f32.gmra.mxu0 %v2398
      %v2615 = vpop.f32.mrf.mxu0
      %v2616 = vadd.f32 %v2295, %v2615
      %v2617 = vpop.f32.mrf.mxu0
      %2618 = vmatprep.mubr.f32.mxu0 0.0
      %2619 = vmatmul.mubr.f32.gmra.mxu0 %v2401
      %v2620 = vpop.f32.mrf.mxu0
      %v2621 = vadd.f32 %v2300, %v2620
      %v2622 = vpop.f32.mrf.mxu0
      %2623 = vmatprep.mubr.f32.mxu0 0.0
      %2624 = vmatmul.mubr.f32.gmra.mxu0 %v2404
      %v2625 = vpop.f32.mrf.mxu0
      %v2626 = vadd.f32 %v2305, %v2625
      %v2627 = vpop.f32.mrf.mxu0
      %2628 = vmatprep.mubr.f32.mxu0 0.0
      %2629 = vmatmul.mubr.f32.gmra.mxu0 %v2407
      %v2630 = vpop.f32.mrf.mxu0
      %v2631 = vadd.f32 %v2310, %v2630
      %v2632 = vpop.f32.mrf.mxu0
      %2633 = vdwg.mxu0
      %v2634 = vld [vmem:[%s5] sm:$0x1]
      %v2636 = vlaneseq
      %v2637 = vshrl.u32 %v2636, 7
      %v2638 = vsub.s32 0, %v2637
      %v2639 = vrot.slane %v2634, %v2638
      %v2641 = vadd.f32 %v2476, %v2639
      %v2642 = vadd.f32 %v2481, %v2639
      %v2643 = vadd.f32 %v2486, %v2639
      %v2644 = vadd.f32 %v2491, %v2639
      %v2645 = vadd.f32 %v2496, %v2639
      %v2646 = vadd.f32 %v2501, %v2639
      %v2647 = vadd.f32 %v2506, %v2639
      %v2648 = vadd.f32 %v2511, %v2639
      %v2649 = vadd.f32 %v2516, %v2639
      %v2650 = vadd.f32 %v2521, %v2639
      %v2651 = vadd.f32 %v2526, %v2639
      %v2652 = vadd.f32 %v2531, %v2639
      %v2653 = vadd.f32 %v2536, %v2639
      %v2654 = vadd.f32 %v2541, %v2639
      %v2655 = vadd.f32 %v2546, %v2639
      %v2656 = vadd.f32 %v2551, %v2639
      %v2657 = vadd.f32 %v2556, %v2639
      %v2658 = vadd.f32 %v2561, %v2639
      %v2659 = vadd.f32 %v2566, %v2639
      %v2660 = vadd.f32 %v2571, %v2639
      %v2661 = vadd.f32 %v2576, %v2639
      %v2662 = vadd.f32 %v2581, %v2639
      %v2663 = vadd.f32 %v2586, %v2639
      %v2664 = vadd.f32 %v2591, %v2639
      %v2665 = vadd.f32 %v2596, %v2639
      %v2666 = vadd.f32 %v2601, %v2639
      %v2667 = vadd.f32 %v2606, %v2639
      %v2668 = vadd.f32 %v2611, %v2639
      %v2669 = vadd.f32 %v2616, %v2639
      %v2670 = vadd.f32 %v2621, %v2639
      %v2671 = vadd.f32 %v2626, %v2639
      %v2672 = vadd.f32 %v2631, %v2639
      %v2673 = vmax.f32 %v2641, 0.0
      %v2674 = vmax.f32 %v2642, 0.0
      %v2675 = vmax.f32 %v2643, 0.0
      %v2676 = vmax.f32 %v2644, 0.0
      %v2677 = vmax.f32 %v2645, 0.0
      %v2678 = vmax.f32 %v2646, 0.0
      %v2679 = vmax.f32 %v2647, 0.0
      %v2680 = vmax.f32 %v2648, 0.0
      %v2681 = vmax.f32 %v2649, 0.0
      %v2682 = vmax.f32 %v2650, 0.0
      %v2683 = vmax.f32 %v2651, 0.0
      %v2684 = vmax.f32 %v2652, 0.0
      %v2685 = vmax.f32 %v2653, 0.0
      %v2686 = vmax.f32 %v2654, 0.0
      %v2687 = vmax.f32 %v2655, 0.0
      %v2688 = vmax.f32 %v2656, 0.0
      %v2689 = vmax.f32 %v2657, 0.0
      %v2690 = vmax.f32 %v2658, 0.0
      %v2691 = vmax.f32 %v2659, 0.0
      %v2692 = vmax.f32 %v2660, 0.0
      %v2693 = vmax.f32 %v2661, 0.0
      %v2694 = vmax.f32 %v2662, 0.0
      %v2695 = vmax.f32 %v2663, 0.0
      %v2696 = vmax.f32 %v2664, 0.0
      %v2697 = vmax.f32 %v2665, 0.0
      %v2698 = vmax.f32 %v2666, 0.0
      %v2699 = vmax.f32 %v2667, 0.0
      %v2700 = vmax.f32 %v2668, 0.0
      %v2701 = vmax.f32 %v2669, 0.0
      %v2702 = vmax.f32 %v2670, 0.0
      %v2703 = vmax.f32 %v2671, 0.0
      %v2704 = vmax.f32 %v2672, 0.0
      %vm2705 = vcmask 261120
      %2706 = vst.msk [vmem:[%s310] sm:$0xff] %vm2705, %v2673
      %2707 = vst.msk [vmem:[%s310 + $0x8] sm:$0xff] %vm2705, %v2674
      %2708 = vst.msk [vmem:[%s310 + $0x10] sm:$0xff] %vm2705, %v2675
      %2709 = vst.msk [vmem:[%s310 + $0x18] sm:$0xff] %vm2705, %v2676
      %2710 = vst.msk [vmem:[%s310 + $0x20] sm:$0xff] %vm2705, %v2677
      %2711 = vst.msk [vmem:[%s310 + $0x28] sm:$0xff] %vm2705, %v2678
      %2712 = vst.msk [vmem:[%s310 + $0x30] sm:$0xff] %vm2705, %v2679
      %2713 = vst.msk [vmem:[%s310 + $0x38] sm:$0xff] %vm2705, %v2680
      %2714 = vst.msk [vmem:[%s310 + $0x40] sm:$0xff] %vm2705, %v2681
      %2715 = vst.msk [vmem:[%s310 + $0x48] sm:$0xff] %vm2705, %v2682
      %2716 = vst.msk [vmem:[%s310 + $0x50] sm:$0xff] %vm2705, %v2683
      %2717 = vst.msk [vmem:[%s310 + $0x58] sm:$0xff] %vm2705, %v2684
      %2718 = vst.msk [vmem:[%s310 + $0x60] sm:$0xff] %vm2705, %v2685
      %2719 = vst.msk [vmem:[%s310 + $0x68] sm:$0xff] %vm2705, %v2686
      %2720 = vst.msk [vmem:[%s310 + $0x70] sm:$0xff] %vm2705, %v2687
      %2721 = vst.msk [vmem:[%s310 + $0x78] sm:$0xff] %vm2705, %v2688
      %2722 = vst.msk [vmem:[%s310 + $0x80] sm:$0xff] %vm2705, %v2689
      %2723 = vst.msk [vmem:[%s310 + $0x88] sm:$0xff] %vm2705, %v2690
      %2724 = vst.msk [vmem:[%s310 + $0x90] sm:$0xff] %vm2705, %v2691
      %2725 = vst.msk [vmem:[%s310 + $0x98] sm:$0xff] %vm2705, %v2692
      %2726 = vst.msk [vmem:[%s310 + $0xa0] sm:$0xff] %vm2705, %v2693
      %2727 = vst.msk [vmem:[%s310 + $0xa8] sm:$0xff] %vm2705, %v2694
      %2728 = vst.msk [vmem:[%s310 + $0xb0] sm:$0xff] %vm2705, %v2695
      %2729 = vst.msk [vmem:[%s310 + $0xb8] sm:$0xff] %vm2705, %v2696
      %2730 = vst.msk [vmem:[%s310 + $0xc0] sm:$0xff] %vm2705, %v2697
      %2731 = vst.msk [vmem:[%s310 + $0xc8] sm:$0xff] %vm2705, %v2698
      %2732 = vst.msk [vmem:[%s310 + $0xd0] sm:$0xff] %vm2705, %v2699
      %2733 = vst.msk [vmem:[%s310 + $0xd8] sm:$0xff] %vm2705, %v2700
      %2734 = vst.msk [vmem:[%s310 + $0xe0] sm:$0xff] %vm2705, %v2701
      %2735 = vst.msk [vmem:[%s310 + $0xe8] sm:$0xff] %vm2705, %v2702
      %2736 = vst.msk [vmem:[%s310 + $0xf0] sm:$0xff] %vm2705, %v2703
      %2737 = vst.msk [vmem:[%s310 + $0xf8] sm:$0xff] %vm2705, %v2704
      %v2738 = vmul.f32 %v516, %v516
      %v2739 = vmul.f32 %v521, %v521
      %v2740 = vmul.f32 %v526, %v526
      %v2741 = vmul.f32 %v531, %v531
      %v2742 = vmul.f32 %v536, %v536
      %v2743 = vmul.f32 %v541, %v541
      %v2744 = vmul.f32 %v546, %v546
      %v2745 = vmul.f32 %v551, %v551
      %v2746 = vmul.f32 %v556, %v556
      %v2747 = vmul.f32 %v561, %v561
      %v2748 = vmul.f32 %v566, %v566
      %v2749 = vmul.f32 %v571, %v571
      %v2750 = vmul.f32 %v576, %v576
      %v2751 = vmul.f32 %v581, %v581
      %v2752 = vmul.f32 %v586, %v586
      %v2753 = vmul.f32 %v591, %v591
      %v2754 = vmul.f32 %v596, %v596
      %v2755 = vmul.f32 %v601, %v601
      %v2756 = vmul.f32 %v606, %v606
      %v2757 = vmul.f32 %v611, %v611
      %v2758 = vmul.f32 %v616, %v616
      %v2759 = vmul.f32 %v621, %v621
      %v2760 = vmul.f32 %v626, %v626
      %v2761 = vmul.f32 %v631, %v631
      %v2762 = vmul.f32 %v636, %v636
      %v2763 = vmul.f32 %v641, %v641
      %v2764 = vmul.f32 %v646, %v646
      %v2765 = vmul.f32 %v651, %v651
      %v2766 = vmul.f32 %v656, %v656
      %v2767 = vmul.f32 %v661, %v661
      %v2768 = vmul.f32 %v666, %v666
      %v2769 = vmul.f32 %v671, %v671
      %v2770 = vmul.f32 %v1061, %v1061
      %v2771 = vmul.f32 %v1066, %v1066
      %v2772 = vmul.f32 %v1071, %v1071
      %v2773 = vmul.f32 %v1076, %v1076
      %v2774 = vmul.f32 %v1081, %v1081
      %v2775 = vmul.f32 %v1086, %v1086
      %v2776 = vmul.f32 %v1091, %v1091
      %v2777 = vmul.f32 %v1096, %v1096
      %v2778 = vmul.f32 %v1101, %v1101
      %v2779 = vmul.f32 %v1106, %v1106
      %v2780 = vmul.f32 %v1111, %v1111
      %v2781 = vmul.f32 %v1116, %v1116
      %v2782 = vmul.f32 %v1121, %v1121
      %v2783 = vmul.f32 %v1126, %v1126
      %v2784 = vmul.f32 %v1131, %v1131
      %v2785 = vmul.f32 %v1136, %v1136
      %v2786 = vmul.f32 %v1141, %v1141
      %v2787 = vmul.f32 %v1146, %v1146
      %v2788 = vmul.f32 %v1151, %v1151
      %v2789 = vmul.f32 %v1156, %v1156
      %v2790 = vmul.f32 %v1161, %v1161
      %v2791 = vmul.f32 %v1166, %v1166
      %v2792 = vmul.f32 %v1171, %v1171
      %v2793 = vmul.f32 %v1176, %v1176
      %v2794 = vmul.f32 %v1181, %v1181
      %v2795 = vmul.f32 %v1186, %v1186
      %v2796 = vmul.f32 %v1191, %v1191
      %v2797 = vmul.f32 %v1196, %v1196
      %v2798 = vmul.f32 %v1201, %v1201
      %v2799 = vmul.f32 %v1206, %v1206
      %v2800 = vmul.f32 %v1211, %v1211
      %v2801 = vmul.f32 %v1216, %v1216
      %v2802 = vadd.f32 %v2738, %v2770
      %v2803 = vadd.f32 %v2739, %v2771
      %v2804 = vadd.f32 %v2740, %v2772
      %v2805 = vadd.f32 %v2741, %v2773
      %v2806 = vadd.f32 %v2742, %v2774
      %v2807 = vadd.f32 %v2743, %v2775
      %v2808 = vadd.f32 %v2744, %v2776
      %v2809 = vadd.f32 %v2745, %v2777
      %v2810 = vadd.f32 %v2746, %v2778
      %v2811 = vadd.f32 %v2747, %v2779
      %v2812 = vadd.f32 %v2748, %v2780
      %v2813 = vadd.f32 %v2749, %v2781
      %v2814 = vadd.f32 %v2750, %v2782
      %v2815 = vadd.f32 %v2751, %v2783
      %v2816 = vadd.f32 %v2752, %v2784
      %v2817 = vadd.f32 %v2753, %v2785
      %v2818 = vadd.f32 %v2754, %v2786
      %v2819 = vadd.f32 %v2755, %v2787
      %v2820 = vadd.f32 %v2756, %v2788
      %v2821 = vadd.f32 %v2757, %v2789
      %v2822 = vadd.f32 %v2758, %v2790
      %v2823 = vadd.f32 %v2759, %v2791
      %v2824 = vadd.f32 %v2760, %v2792
      %v2825 = vadd.f32 %v2761, %v2793
      %v2826 = vadd.f32 %v2762, %v2794
      %v2827 = vadd.f32 %v2763, %v2795
      %v2828 = vadd.f32 %v2764, %v2796
      %v2829 = vadd.f32 %v2765, %v2797
      %v2830 = vadd.f32 %v2766, %v2798
      %v2831 = vadd.f32 %v2767, %v2799
      %v2832 = vadd.f32 %v2768, %v2800
      %v2833 = vadd.f32 %v2769, %v2801
      %v2834 = vmul.f32 %v1606, %v1606
      %v2835 = vmul.f32 %v1611, %v1611
      %v2836 = vmul.f32 %v1616, %v1616
      %v2837 = vmul.f32 %v1621, %v1621
      %v2838 = vmul.f32 %v1626, %v1626
      %v2839 = vmul.f32 %v1631, %v1631
      %v2840 = vmul.f32 %v1636, %v1636
      %v2841 = vmul.f32 %v1641, %v1641
      %v2842 = vmul.f32 %v1646, %v1646
      %v2843 = vmul.f32 %v1651, %v1651
      %v2844 = vmul.f32 %v1656, %v1656
      %v2845 = vmul.f32 %v1661, %v1661
      %v2846 = vmul.f32 %v1666, %v1666
      %v2847 = vmul.f32 %v1671, %v1671
      %v2848 = vmul.f32 %v1676, %v1676
      %v2849 = vmul.f32 %v1681, %v1681
      %v2850 = vmul.f32 %v1686, %v1686
      %v2851 = vmul.f32 %v1691, %v1691
      %v2852 = vmul.f32 %v1696, %v1696
      %v2853 = vmul.f32 %v1701, %v1701
      %v2854 = vmul.f32 %v1706, %v1706
      %v2855 = vmul.f32 %v1711, %v1711
      %v2856 = vmul.f32 %v1716, %v1716
      %v2857 = vmul.f32 %v1721, %v1721
      %v2858 = vmul.f32 %v1726, %v1726
      %v2859 = vmul.f32 %v1731, %v1731
      %v2860 = vmul.f32 %v1736, %v1736
      %v2861 = vmul.f32 %v1741, %v1741
      %v2862 = vmul.f32 %v1746, %v1746
      %v2863 = vmul.f32 %v1751, %v1751
      %v2864 = vmul.f32 %v1756, %v1756
      %v2865 = vmul.f32 %v1761, %v1761
      %v2866 = vadd.f32 %v2802, %v2834
      %v2867 = vadd.f32 %v2803, %v2835
      %v2868 = vadd.f32 %v2804, %v2836
      %v2869 = vadd.f32 %v2805, %v2837
      %v2870 = vadd.f32 %v2806, %v2838
      %v2871 = vadd.f32 %v2807, %v2839
      %v2872 = vadd.f32 %v2808, %v2840
      %v2873 = vadd.f32 %v2809, %v2841
      %v2874 = vadd.f32 %v2810, %v2842
      %v2875 = vadd.f32 %v2811, %v2843
      %v2876 = vadd.f32 %v2812, %v2844
      %v2877 = vadd.f32 %v2813, %v2845
      %v2878 = vadd.f32 %v2814, %v2846
      %v2879 = vadd.f32 %v2815, %v2847
      %v2880 = vadd.f32 %v2816, %v2848
      %v2881 = vadd.f32 %v2817, %v2849
      %v2882 = vadd.f32 %v2818, %v2850
      %v2883 = vadd.f32 %v2819, %v2851
      %v2884 = vadd.f32 %v2820, %v2852
      %v2885 = vadd.f32 %v2821, %v2853
      %v2886 = vadd.f32 %v2822, %v2854
      %v2887 = vadd.f32 %v2823, %v2855
      %v2888 = vadd.f32 %v2824, %v2856
      %v2889 = vadd.f32 %v2825, %v2857
      %v2890 = vadd.f32 %v2826, %v2858
      %v2891 = vadd.f32 %v2827, %v2859
      %v2892 = vadd.f32 %v2828, %v2860
      %v2893 = vadd.f32 %v2829, %v2861
      %v2894 = vadd.f32 %v2830, %v2862
      %v2895 = vadd.f32 %v2831, %v2863
      %v2896 = vadd.f32 %v2832, %v2864
      %v2897 = vadd.f32 %v2833, %v2865
      %v2898 = vmax.f32 %v2866, 1e-08
      %v2899 = vmax.f32 %v2867, 1e-08
      %v2900 = vmax.f32 %v2868, 1e-08
      %v2901 = vmax.f32 %v2869, 1e-08
      %v2902 = vmax.f32 %v2870, 1e-08
      %v2903 = vmax.f32 %v2871, 1e-08
      %v2904 = vmax.f32 %v2872, 1e-08
      %v2905 = vmax.f32 %v2873, 1e-08
      %v2906 = vmax.f32 %v2874, 1e-08
      %v2907 = vmax.f32 %v2875, 1e-08
      %v2908 = vmax.f32 %v2876, 1e-08
      %v2909 = vmax.f32 %v2877, 1e-08
      %v2910 = vmax.f32 %v2878, 1e-08
      %v2911 = vmax.f32 %v2879, 1e-08
      %v2912 = vmax.f32 %v2880, 1e-08
      %v2913 = vmax.f32 %v2881, 1e-08
      %v2914 = vmax.f32 %v2882, 1e-08
      %v2915 = vmax.f32 %v2883, 1e-08
      %v2916 = vmax.f32 %v2884, 1e-08
      %v2917 = vmax.f32 %v2885, 1e-08
      %v2918 = vmax.f32 %v2886, 1e-08
      %v2919 = vmax.f32 %v2887, 1e-08
      %v2920 = vmax.f32 %v2888, 1e-08
      %v2921 = vmax.f32 %v2889, 1e-08
      %v2922 = vmax.f32 %v2890, 1e-08
      %v2923 = vmax.f32 %v2891, 1e-08
      %v2924 = vmax.f32 %v2892, 1e-08
      %v2925 = vmax.f32 %v2893, 1e-08
      %v2926 = vmax.f32 %v2894, 1e-08
      %v2927 = vmax.f32 %v2895, 1e-08
      %v2928 = vmax.f32 %v2896, 1e-08
      %v2929 = vmax.f32 %v2897, 1e-08
      %v2930 = vrsqrt.pop %v2898
      %v2931 = vmul.f32 %v2898, %v2930
      %vm2932 = vcmp.eq.f32.partialorder %v2898, inf
      %v2933 = vsel %vm2932, %v2898, %v2931
      %vm2934 = vcmp.eq.f32.partialorder %v2898, 0.0
      %v2935 = vand.u32 %v2898, 2147483648
      %v2936 = vsel %vm2934, %v2935, %v2933
      %v2937 = vrsqrt.pop %v2899
      %v2938 = vmul.f32 %v2899, %v2937
      %vm2939 = vcmp.eq.f32.partialorder %v2899, inf
      %v2940 = vsel %vm2939, %v2899, %v2938
      %vm2941 = vcmp.eq.f32.partialorder %v2899, 0.0
      %v2942 = vand.u32 %v2899, 2147483648
      %v2943 = vsel %vm2941, %v2942, %v2940
      %v2944 = vrsqrt.pop %v2900
      %v2945 = vmul.f32 %v2900, %v2944
      %vm2946 = vcmp.eq.f32.partialorder %v2900, inf
      %v2947 = vsel %vm2946, %v2900, %v2945
      %vm2948 = vcmp.eq.f32.partialorder %v2900, 0.0
      %v2949 = vand.u32 %v2900, 2147483648
      %v2950 = vsel %vm2948, %v2949, %v2947
      %v2951 = vrsqrt.pop %v2901
      %v2952 = vmul.f32 %v2901, %v2951
      %vm2953 = vcmp.eq.f32.partialorder %v2901, inf
      %v2954 = vsel %vm2953, %v2901, %v2952
      %vm2955 = vcmp.eq.f32.partialorder %v2901, 0.0
      %v2956 = vand.u32 %v2901, 2147483648
      %v2957 = vsel %vm2955, %v2956, %v2954
      %v2958 = vrsqrt.pop %v2902
      %v2959 = vmul.f32 %v2902, %v2958
      %vm2960 = vcmp.eq.f32.partialorder %v2902, inf
      %v2961 = vsel %vm2960, %v2902, %v2959
      %vm2962 = vcmp.eq.f32.partialorder %v2902, 0.0
      %v2963 = vand.u32 %v2902, 2147483648
      %v2964 = vsel %vm2962, %v2963, %v2961
      %v2965 = vrsqrt.pop %v2903
      %v2966 = vmul.f32 %v2903, %v2965
      %vm2967 = vcmp.eq.f32.partialorder %v2903, inf
      %v2968 = vsel %vm2967, %v2903, %v2966
      %vm2969 = vcmp.eq.f32.partialorder %v2903, 0.0
      %v2970 = vand.u32 %v2903, 2147483648
      %v2971 = vsel %vm2969, %v2970, %v2968
      %v2972 = vrsqrt.pop %v2904
      %v2973 = vmul.f32 %v2904, %v2972
      %vm2974 = vcmp.eq.f32.partialorder %v2904, inf
      %v2975 = vsel %vm2974, %v2904, %v2973
      %vm2976 = vcmp.eq.f32.partialorder %v2904, 0.0
      %v2977 = vand.u32 %v2904, 2147483648
      %v2978 = vsel %vm2976, %v2977, %v2975
      %v2979 = vrsqrt.pop %v2905
      %v2980 = vmul.f32 %v2905, %v2979
      %vm2981 = vcmp.eq.f32.partialorder %v2905, inf
      %v2982 = vsel %vm2981, %v2905, %v2980
      %vm2983 = vcmp.eq.f32.partialorder %v2905, 0.0
      %v2984 = vand.u32 %v2905, 2147483648
      %v2985 = vsel %vm2983, %v2984, %v2982
      %v2986 = vrsqrt.pop %v2906
      %v2987 = vmul.f32 %v2906, %v2986
      %vm2988 = vcmp.eq.f32.partialorder %v2906, inf
      %v2989 = vsel %vm2988, %v2906, %v2987
      %vm2990 = vcmp.eq.f32.partialorder %v2906, 0.0
      %v2991 = vand.u32 %v2906, 2147483648
      %v2992 = vsel %vm2990, %v2991, %v2989
      %v2993 = vrsqrt.pop %v2907
      %v2994 = vmul.f32 %v2907, %v2993
      %vm2995 = vcmp.eq.f32.partialorder %v2907, inf
      %v2996 = vsel %vm2995, %v2907, %v2994
      %vm2997 = vcmp.eq.f32.partialorder %v2907, 0.0
      %v2998 = vand.u32 %v2907, 2147483648
      %v2999 = vsel %vm2997, %v2998, %v2996
      %v3000 = vrsqrt.pop %v2908
      %v3001 = vmul.f32 %v2908, %v3000
      %vm3002 = vcmp.eq.f32.partialorder %v2908, inf
      %v3003 = vsel %vm3002, %v2908, %v3001
      %vm3004 = vcmp.eq.f32.partialorder %v2908, 0.0
      %v3005 = vand.u32 %v2908, 2147483648
      %v3006 = vsel %vm3004, %v3005, %v3003
      %v3007 = vrsqrt.pop %v2909
      %v3008 = vmul.f32 %v2909, %v3007
      %vm3009 = vcmp.eq.f32.partialorder %v2909, inf
      %v3010 = vsel %vm3009, %v2909, %v3008
      %vm3011 = vcmp.eq.f32.partialorder %v2909, 0.0
      %v3012 = vand.u32 %v2909, 2147483648
      %v3013 = vsel %vm3011, %v3012, %v3010
      %v3014 = vrsqrt.pop %v2910
      %v3015 = vmul.f32 %v2910, %v3014
      %vm3016 = vcmp.eq.f32.partialorder %v2910, inf
      %v3017 = vsel %vm3016, %v2910, %v3015
      %vm3018 = vcmp.eq.f32.partialorder %v2910, 0.0
      %v3019 = vand.u32 %v2910, 2147483648
      %v3020 = vsel %vm3018, %v3019, %v3017
      %v3021 = vrsqrt.pop %v2911
      %v3022 = vmul.f32 %v2911, %v3021
      %vm3023 = vcmp.eq.f32.partialorder %v2911, inf
      %v3024 = vsel %vm3023, %v2911, %v3022
      %vm3025 = vcmp.eq.f32.partialorder %v2911, 0.0
      %v3026 = vand.u32 %v2911, 2147483648
      %v3027 = vsel %vm3025, %v3026, %v3024
      %v3028 = vrsqrt.pop %v2912
      %v3029 = vmul.f32 %v2912, %v3028
      %vm3030 = vcmp.eq.f32.partialorder %v2912, inf
      %v3031 = vsel %vm3030, %v2912, %v3029
      %vm3032 = vcmp.eq.f32.partialorder %v2912, 0.0
      %v3033 = vand.u32 %v2912, 2147483648
      %v3034 = vsel %vm3032, %v3033, %v3031
      %v3035 = vrsqrt.pop %v2913
      %v3036 = vmul.f32 %v2913, %v3035
      %vm3037 = vcmp.eq.f32.partialorder %v2913, inf
      %v3038 = vsel %vm3037, %v2913, %v3036
      %vm3039 = vcmp.eq.f32.partialorder %v2913, 0.0
      %v3040 = vand.u32 %v2913, 2147483648
      %v3041 = vsel %vm3039, %v3040, %v3038
      %v3042 = vrsqrt.pop %v2914
      %v3043 = vmul.f32 %v2914, %v3042
      %vm3044 = vcmp.eq.f32.partialorder %v2914, inf
      %v3045 = vsel %vm3044, %v2914, %v3043
      %vm3046 = vcmp.eq.f32.partialorder %v2914, 0.0
      %v3047 = vand.u32 %v2914, 2147483648
      %v3048 = vsel %vm3046, %v3047, %v3045
      %v3049 = vrsqrt.pop %v2915
      %v3050 = vmul.f32 %v2915, %v3049
      %vm3051 = vcmp.eq.f32.partialorder %v2915, inf
      %v3052 = vsel %vm3051, %v2915, %v3050
      %vm3053 = vcmp.eq.f32.partialorder %v2915, 0.0
      %v3054 = vand.u32 %v2915, 2147483648
      %v3055 = vsel %vm3053, %v3054, %v3052
      %v3056 = vrsqrt.pop %v2916
      %v3057 = vmul.f32 %v2916, %v3056
      %vm3058 = vcmp.eq.f32.partialorder %v2916, inf
      %v3059 = vsel %vm3058, %v2916, %v3057
      %vm3060 = vcmp.eq.f32.partialorder %v2916, 0.0
      %v3061 = vand.u32 %v2916, 2147483648
      %v3062 = vsel %vm3060, %v3061, %v3059
      %v3063 = vrsqrt.pop %v2917
      %v3064 = vmul.f32 %v2917, %v3063
      %vm3065 = vcmp.eq.f32.partialorder %v2917, inf
      %v3066 = vsel %vm3065, %v2917, %v3064
      %vm3067 = vcmp.eq.f32.partialorder %v2917, 0.0
      %v3068 = vand.u32 %v2917, 2147483648
      %v3069 = vsel %vm3067, %v3068, %v3066
      %v3070 = vrsqrt.pop %v2918
      %v3071 = vmul.f32 %v2918, %v3070
      %vm3072 = vcmp.eq.f32.partialorder %v2918, inf
      %v3073 = vsel %vm3072, %v2918, %v3071
      %vm3074 = vcmp.eq.f32.partialorder %v2918, 0.0
      %v3075 = vand.u32 %v2918, 2147483648
      %v3076 = vsel %vm3074, %v3075, %v3073
      %v3077 = vrsqrt.pop %v2919
      %v3078 = vmul.f32 %v2919, %v3077
      %vm3079 = vcmp.eq.f32.partialorder %v2919, inf
      %v3080 = vsel %vm3079, %v2919, %v3078
      %vm3081 = vcmp.eq.f32.partialorder %v2919, 0.0
      %v3082 = vand.u32 %v2919, 2147483648
      %v3083 = vsel %vm3081, %v3082, %v3080
      %v3084 = vrsqrt.pop %v2920
      %v3085 = vmul.f32 %v2920, %v3084
      %vm3086 = vcmp.eq.f32.partialorder %v2920, inf
      %v3087 = vsel %vm3086, %v2920, %v3085
      %vm3088 = vcmp.eq.f32.partialorder %v2920, 0.0
      %v3089 = vand.u32 %v2920, 2147483648
      %v3090 = vsel %vm3088, %v3089, %v3087
      %v3091 = vrsqrt.pop %v2921
      %v3092 = vmul.f32 %v2921, %v3091
      %vm3093 = vcmp.eq.f32.partialorder %v2921, inf
      %v3094 = vsel %vm3093, %v2921, %v3092
      %vm3095 = vcmp.eq.f32.partialorder %v2921, 0.0
      %v3096 = vand.u32 %v2921, 2147483648
      %v3097 = vsel %vm3095, %v3096, %v3094
      %v3098 = vrsqrt.pop %v2922
      %v3099 = vmul.f32 %v2922, %v3098
      %vm3100 = vcmp.eq.f32.partialorder %v2922, inf
      %v3101 = vsel %vm3100, %v2922, %v3099
      %vm3102 = vcmp.eq.f32.partialorder %v2922, 0.0
      %v3103 = vand.u32 %v2922, 2147483648
      %v3104 = vsel %vm3102, %v3103, %v3101
      %v3105 = vrsqrt.pop %v2923
      %v3106 = vmul.f32 %v2923, %v3105
      %vm3107 = vcmp.eq.f32.partialorder %v2923, inf
      %v3108 = vsel %vm3107, %v2923, %v3106
      %vm3109 = vcmp.eq.f32.partialorder %v2923, 0.0
      %v3110 = vand.u32 %v2923, 2147483648
      %v3111 = vsel %vm3109, %v3110, %v3108
      %v3112 = vrsqrt.pop %v2924
      %v3113 = vmul.f32 %v2924, %v3112
      %vm3114 = vcmp.eq.f32.partialorder %v2924, inf
      %v3115 = vsel %vm3114, %v2924, %v3113
      %vm3116 = vcmp.eq.f32.partialorder %v2924, 0.0
      %v3117 = vand.u32 %v2924, 2147483648
      %v3118 = vsel %vm3116, %v3117, %v3115
      %v3119 = vrsqrt.pop %v2925
      %v3120 = vmul.f32 %v2925, %v3119
      %vm3121 = vcmp.eq.f32.partialorder %v2925, inf
      %v3122 = vsel %vm3121, %v2925, %v3120
      %vm3123 = vcmp.eq.f32.partialorder %v2925, 0.0
      %v3124 = vand.u32 %v2925, 2147483648
      %v3125 = vsel %vm3123, %v3124, %v3122
      %v3126 = vrsqrt.pop %v2926
      %v3127 = vmul.f32 %v2926, %v3126
      %vm3128 = vcmp.eq.f32.partialorder %v2926, inf
      %v3129 = vsel %vm3128, %v2926, %v3127
      %vm3130 = vcmp.eq.f32.partialorder %v2926, 0.0
      %v3131 = vand.u32 %v2926, 2147483648
      %v3132 = vsel %vm3130, %v3131, %v3129
      %v3133 = vrsqrt.pop %v2927
      %v3134 = vmul.f32 %v2927, %v3133
      %vm3135 = vcmp.eq.f32.partialorder %v2927, inf
      %v3136 = vsel %vm3135, %v2927, %v3134
      %vm3137 = vcmp.eq.f32.partialorder %v2927, 0.0
      %v3138 = vand.u32 %v2927, 2147483648
      %v3139 = vsel %vm3137, %v3138, %v3136
      %v3140 = vrsqrt.pop %v2928
      %v3141 = vmul.f32 %v2928, %v3140
      %vm3142 = vcmp.eq.f32.partialorder %v2928, inf
      %v3143 = vsel %vm3142, %v2928, %v3141
      %vm3144 = vcmp.eq.f32.partialorder %v2928, 0.0
      %v3145 = vand.u32 %v2928, 2147483648
      %v3146 = vsel %vm3144, %v3145, %v3143
      %v3147 = vrsqrt.pop %v2929
      %v3148 = vmul.f32 %v2929, %v3147
      %vm3149 = vcmp.eq.f32.partialorder %v2929, inf
      %v3150 = vsel %vm3149, %v2929, %v3148
      %vm3151 = vcmp.eq.f32.partialorder %v2929, 0.0
      %v3152 = vand.u32 %v2929, 2147483648
      %v3153 = vsel %vm3151, %v3152, %v3150
      %v3154 = vsub.f32 0.0, %v2936
      %v3155 = vsub.f32 0.0, %v2943
      %v3156 = vsub.f32 0.0, %v2950
      %v3157 = vsub.f32 0.0, %v2957
      %v3158 = vsub.f32 0.0, %v2964
      %v3159 = vsub.f32 0.0, %v2971
      %v3160 = vsub.f32 0.0, %v2978
      %v3161 = vsub.f32 0.0, %v2985
      %v3162 = vsub.f32 0.0, %v2992
      %v3163 = vsub.f32 0.0, %v2999
      %v3164 = vsub.f32 0.0, %v3006
      %v3165 = vsub.f32 0.0, %v3013
      %v3166 = vsub.f32 0.0, %v3020
      %v3167 = vsub.f32 0.0, %v3027
      %v3168 = vsub.f32 0.0, %v3034
      %v3169 = vsub.f32 0.0, %v3041
      %v3170 = vsub.f32 0.0, %v3048
      %v3171 = vsub.f32 0.0, %v3055
      %v3172 = vsub.f32 0.0, %v3062
      %v3173 = vsub.f32 0.0, %v3069
      %v3174 = vsub.f32 0.0, %v3076
      %v3175 = vsub.f32 0.0, %v3083
      %v3176 = vsub.f32 0.0, %v3090
      %v3177 = vsub.f32 0.0, %v3097
      %v3178 = vsub.f32 0.0, %v3104
      %v3179 = vsub.f32 0.0, %v3111
      %v3180 = vsub.f32 0.0, %v3118
      %v3181 = vsub.f32 0.0, %v3125
      %v3182 = vsub.f32 0.0, %v3132
      %v3183 = vsub.f32 0.0, %v3139
      %v3184 = vsub.f32 0.0, %v3146
      %v3185 = vsub.f32 0.0, %v3153
      %v3186 = vmul.f32 %v3154, 1.442695
      %v3187 = vpow.pop %v3186
      %v3188 = vmul.f32 %v3155, 1.442695
      %v3189 = vpow.pop %v3188
      %v3190 = vmul.f32 %v3156, 1.442695
      %v3191 = vpow.pop %v3190
      %v3192 = vmul.f32 %v3157, 1.442695
      %v3193 = vpow.pop %v3192
      %v3194 = vmul.f32 %v3158, 1.442695
      %v3195 = vpow.pop %v3194
      %v3196 = vmul.f32 %v3159, 1.442695
      %v3197 = vpow.pop %v3196
      %v3198 = vmul.f32 %v3160, 1.442695
      %v3199 = vpow.pop %v3198
      %v3200 = vmul.f32 %v3161, 1.442695
      %v3201 = vpow.pop %v3200
      %v3202 = vmul.f32 %v3162, 1.442695
      %v3203 = vpow.pop %v3202
      %v3204 = vmul.f32 %v3163, 1.442695
      %v3205 = vpow.pop %v3204
      %v3206 = vmul.f32 %v3164, 1.442695
      %v3207 = vpow.pop %v3206
      %v3208 = vmul.f32 %v3165, 1.442695
      %v3209 = vpow.pop %v3208
      %v3210 = vmul.f32 %v3166, 1.442695
      %v3211 = vpow.pop %v3210
      %v3212 = vmul.f32 %v3167, 1.442695
      %v3213 = vpow.pop %v3212
      %v3214 = vmul.f32 %v3168, 1.442695
      %v3215 = vpow.pop %v3214
      %v3216 = vmul.f32 %v3169, 1.442695
      %v3217 = vpow.pop %v3216
      %v3218 = vmul.f32 %v3170, 1.442695
      %v3219 = vpow.pop %v3218
      %v3220 = vmul.f32 %v3171, 1.442695
      %v3221 = vpow.pop %v3220
      %v3222 = vmul.f32 %v3172, 1.442695
      %v3223 = vpow.pop %v3222
      %v3224 = vmul.f32 %v3173, 1.442695
      %v3225 = vpow.pop %v3224
      %v3226 = vmul.f32 %v3174, 1.442695
      %v3227 = vpow.pop %v3226
      %v3228 = vmul.f32 %v3175, 1.442695
      %v3229 = vpow.pop %v3228
      %v3230 = vmul.f32 %v3176, 1.442695
      %v3231 = vpow.pop %v3230
      %v3232 = vmul.f32 %v3177, 1.442695
      %v3233 = vpow.pop %v3232
      %v3234 = vmul.f32 %v3178, 1.442695
      %v3235 = vpow.pop %v3234
      %v3236 = vmul.f32 %v3179, 1.442695
      %v3237 = vpow.pop %v3236
      %v3238 = vmul.f32 %v3180, 1.442695
      %v3239 = vpow.pop %v3238
      %v3240 = vmul.f32 %v3181, 1.442695
      %v3241 = vpow.pop %v3240
      %v3242 = vmul.f32 %v3182, 1.442695
      %v3243 = vpow.pop %v3242
      %v3244 = vmul.f32 %v3183, 1.442695
      %v3245 = vpow.pop %v3244
      %v3246 = vmul.f32 %v3184, 1.442695
      %v3247 = vpow.pop %v3246
      %v3248 = vmul.f32 %v3185, 1.442695
      %v3249 = vpow.pop %v3248
      %v3250 = vadd.f32 %v3187, 1.0
      %v3251 = vadd.f32 %v3189, 1.0
      %v3252 = vadd.f32 %v3191, 1.0
      %v3253 = vadd.f32 %v3193, 1.0
      %v3254 = vadd.f32 %v3195, 1.0
      %v3255 = vadd.f32 %v3197, 1.0
      %v3256 = vadd.f32 %v3199, 1.0
      %v3257 = vadd.f32 %v3201, 1.0
      %v3258 = vadd.f32 %v3203, 1.0
      %v3259 = vadd.f32 %v3205, 1.0
      %v3260 = vadd.f32 %v3207, 1.0
      %v3261 = vadd.f32 %v3209, 1.0
      %v3262 = vadd.f32 %v3211, 1.0
      %v3263 = vadd.f32 %v3213, 1.0
      %v3264 = vadd.f32 %v3215, 1.0
      %v3265 = vadd.f32 %v3217, 1.0
      %v3266 = vadd.f32 %v3219, 1.0
      %v3267 = vadd.f32 %v3221, 1.0
      %v3268 = vadd.f32 %v3223, 1.0
      %v3269 = vadd.f32 %v3225, 1.0
      %v3270 = vadd.f32 %v3227, 1.0
      %v3271 = vadd.f32 %v3229, 1.0
      %v3272 = vadd.f32 %v3231, 1.0
      %v3273 = vadd.f32 %v3233, 1.0
      %v3274 = vadd.f32 %v3235, 1.0
      %v3275 = vadd.f32 %v3237, 1.0
      %v3276 = vadd.f32 %v3239, 1.0
      %v3277 = vadd.f32 %v3241, 1.0
      %v3278 = vadd.f32 %v3243, 1.0
      %v3279 = vadd.f32 %v3245, 1.0
      %v3280 = vadd.f32 %v3247, 1.0
      %v3281 = vadd.f32 %v3249, 1.0
      %v3282 = vrcp.pop %v3250
      %v3283 = vmul.f32 1.0, %v3282
      %v3284 = vrcp.pop %v3251
      %v3285 = vmul.f32 1.0, %v3284
      %v3286 = vrcp.pop %v3252
      %v3287 = vmul.f32 1.0, %v3286
      %v3288 = vrcp.pop %v3253
      %v3289 = vmul.f32 1.0, %v3288
      %v3290 = vrcp.pop %v3254
      %v3291 = vmul.f32 1.0, %v3290
      %v3292 = vrcp.pop %v3255
      %v3293 = vmul.f32 1.0, %v3292
      %v3294 = vrcp.pop %v3256
      %v3295 = vmul.f32 1.0, %v3294
      %v3296 = vrcp.pop %v3257
      %v3297 = vmul.f32 1.0, %v3296
      %v3298 = vrcp.pop %v3258
      %v3299 = vmul.f32 1.0, %v3298
      %v3300 = vrcp.pop %v3259
      %v3301 = vmul.f32 1.0, %v3300
      %v3302 = vrcp.pop %v3260
      %v3303 = vmul.f32 1.0, %v3302
      %v3304 = vrcp.pop %v3261
      %v3305 = vmul.f32 1.0, %v3304
      %v3306 = vrcp.pop %v3262
      %v3307 = vmul.f32 1.0, %v3306
      %v3308 = vrcp.pop %v3263
      %v3309 = vmul.f32 1.0, %v3308
      %v3310 = vrcp.pop %v3264
      %v3311 = vmul.f32 1.0, %v3310
      %v3312 = vrcp.pop %v3265
      %v3313 = vmul.f32 1.0, %v3312
      %v3314 = vrcp.pop %v3266
      %v3315 = vmul.f32 1.0, %v3314
      %v3316 = vrcp.pop %v3267
      %v3317 = vmul.f32 1.0, %v3316
      %v3318 = vrcp.pop %v3268
      %v3319 = vmul.f32 1.0, %v3318
      %v3320 = vrcp.pop %v3269
      %v3321 = vmul.f32 1.0, %v3320
      %v3322 = vrcp.pop %v3270
      %v3323 = vmul.f32 1.0, %v3322
      %v3324 = vrcp.pop %v3271
      %v3325 = vmul.f32 1.0, %v3324
      %v3326 = vrcp.pop %v3272
      %v3327 = vmul.f32 1.0, %v3326
      %v3328 = vrcp.pop %v3273
      %v3329 = vmul.f32 1.0, %v3328
      %v3330 = vrcp.pop %v3274
      %v3331 = vmul.f32 1.0, %v3330
      %v3332 = vrcp.pop %v3275
      %v3333 = vmul.f32 1.0, %v3332
      %v3334 = vrcp.pop %v3276
      %v3335 = vmul.f32 1.0, %v3334
      %v3336 = vrcp.pop %v3277
      %v3337 = vmul.f32 1.0, %v3336
      %v3338 = vrcp.pop %v3278
      %v3339 = vmul.f32 1.0, %v3338
      %v3340 = vrcp.pop %v3279
      %v3341 = vmul.f32 1.0, %v3340
      %v3342 = vrcp.pop %v3280
      %v3343 = vmul.f32 1.0, %v3342
      %v3344 = vrcp.pop %v3281
      %v3345 = vmul.f32 1.0, %v3344
      %v3346 = vmul.f32 %v516, %v3283
      %v3347 = vmul.f32 %v521, %v3285
      %v3348 = vmul.f32 %v526, %v3287
      %v3349 = vmul.f32 %v531, %v3289
      %v3350 = vmul.f32 %v536, %v3291
      %v3351 = vmul.f32 %v541, %v3293
      %v3352 = vmul.f32 %v546, %v3295
      %v3353 = vmul.f32 %v551, %v3297
      %v3354 = vmul.f32 %v556, %v3299
      %v3355 = vmul.f32 %v561, %v3301
      %v3356 = vmul.f32 %v566, %v3303
      %v3357 = vmul.f32 %v571, %v3305
      %v3358 = vmul.f32 %v576, %v3307
      %v3359 = vmul.f32 %v581, %v3309
      %v3360 = vmul.f32 %v586, %v3311
      %v3361 = vmul.f32 %v591, %v3313
      %v3362 = vmul.f32 %v596, %v3315
      %v3363 = vmul.f32 %v601, %v3317
      %v3364 = vmul.f32 %v606, %v3319
      %v3365 = vmul.f32 %v611, %v3321
      %v3366 = vmul.f32 %v616, %v3323
      %v3367 = vmul.f32 %v621, %v3325
      %v3368 = vmul.f32 %v626, %v3327
      %v3369 = vmul.f32 %v631, %v3329
      %v3370 = vmul.f32 %v636, %v3331
      %v3371 = vmul.f32 %v641, %v3333
      %v3372 = vmul.f32 %v646, %v3335
      %v3373 = vmul.f32 %v651, %v3337
      %v3374 = vmul.f32 %v656, %v3339
      %v3375 = vmul.f32 %v661, %v3341
      %v3376 = vmul.f32 %v666, %v3343
      %v3377 = vmul.f32 %v671, %v3345
      %v3378 = vmul.f32 %v1061, %v3283
      %v3379 = vmul.f32 %v1066, %v3285
      %v3380 = vmul.f32 %v1071, %v3287
      %v3381 = vmul.f32 %v1076, %v3289
      %v3382 = vmul.f32 %v1081, %v3291
      %v3383 = vmul.f32 %v1086, %v3293
      %v3384 = vmul.f32 %v1091, %v3295
      %v3385 = vmul.f32 %v1096, %v3297
      %v3386 = vmul.f32 %v1101, %v3299
      %v3387 = vmul.f32 %v1106, %v3301
      %v3388 = vmul.f32 %v1111, %v3303
      %v3389 = vmul.f32 %v1116, %v3305
      %v3390 = vmul.f32 %v1121, %v3307
      %v3391 = vmul.f32 %v1126, %v3309
      %v3392 = vmul.f32 %v1131, %v3311
      %v3393 = vmul.f32 %v1136, %v3313
      %v3394 = vmul.f32 %v1141, %v3315
      %v3395 = vmul.f32 %v1146, %v3317
      %v3396 = vmul.f32 %v1151, %v3319
      %v3397 = vmul.f32 %v1156, %v3321
      %v3398 = vmul.f32 %v1161, %v3323
      %v3399 = vmul.f32 %v1166, %v3325
      %v3400 = vmul.f32 %v1171, %v3327
      %v3401 = vmul.f32 %v1176, %v3329
      %v3402 = vmul.f32 %v1181, %v3331
      %v3403 = vmul.f32 %v1186, %v3333
      %v3404 = vmul.f32 %v1191, %v3335
      %v3405 = vmul.f32 %v1196, %v3337
      %v3406 = vmul.f32 %v1201, %v3339
      %v3407 = vmul.f32 %v1206, %v3341
      %v3408 = vmul.f32 %v1211, %v3343
      %v3409 = vmul.f32 %v1216, %v3345
      %v3410 = vmul.f32 %v1606, %v3283
      %v3411 = vmul.f32 %v1611, %v3285
      %v3412 = vmul.f32 %v1616, %v3287
      %v3413 = vmul.f32 %v1621, %v3289
      %v3414 = vmul.f32 %v1626, %v3291
      %v3415 = vmul.f32 %v1631, %v3293
      %v3416 = vmul.f32 %v1636, %v3295
      %v3417 = vmul.f32 %v1641, %v3297
      %v3418 = vmul.f32 %v1646, %v3299
      %v3419 = vmul.f32 %v1651, %v3301
      %v3420 = vmul.f32 %v1656, %v3303
      %v3421 = vmul.f32 %v1661, %v3305
      %v3422 = vmul.f32 %v1666, %v3307
      %v3423 = vmul.f32 %v1671, %v3309
      %v3424 = vmul.f32 %v1676, %v3311
      %v3425 = vmul.f32 %v1681, %v3313
      %v3426 = vmul.f32 %v1686, %v3315
      %v3427 = vmul.f32 %v1691, %v3317
      %v3428 = vmul.f32 %v1696, %v3319
      %v3429 = vmul.f32 %v1701, %v3321
      %v3430 = vmul.f32 %v1706, %v3323
      %v3431 = vmul.f32 %v1711, %v3325
      %v3432 = vmul.f32 %v1716, %v3327
      %v3433 = vmul.f32 %v1721, %v3329
      %v3434 = vmul.f32 %v1726, %v3331
      %v3435 = vmul.f32 %v1731, %v3333
      %v3436 = vmul.f32 %v1736, %v3335
      %v3437 = vmul.f32 %v1741, %v3337
      %v3438 = vmul.f32 %v1746, %v3339
      %v3439 = vmul.f32 %v1751, %v3341
      %v3440 = vmul.f32 %v1756, %v3343
      %v3441 = vmul.f32 %v1761, %v3345
      %3474 = vrot.lane.b32.xlu0 %v3346, 96
      %v3475 = vpop.permute.xlu0 %3474
      %3476 = vrot.lane.b32.xlu0 %v3347, 96
      %v3477 = vpop.permute.xlu0 %3476
      %3478 = vrot.lane.b32.xlu0 %v3348, 96
      %v3479 = vpop.permute.xlu0 %3478
      %3480 = vrot.lane.b32.xlu0 %v3349, 96
      %v3481 = vpop.permute.xlu0 %3480
      %3482 = vrot.lane.b32.xlu0 %v3350, 96
      %v3483 = vpop.permute.xlu0 %3482
      %3484 = vrot.lane.b32.xlu0 %v3351, 96
      %v3485 = vpop.permute.xlu0 %3484
      %3486 = vrot.lane.b32.xlu0 %v3352, 96
      %v3487 = vpop.permute.xlu0 %3486
      %3488 = vrot.lane.b32.xlu0 %v3353, 96
      %v3489 = vpop.permute.xlu0 %3488
      %3490 = vrot.lane.b32.xlu0 %v3354, 96
      %v3491 = vpop.permute.xlu0 %3490
      %3492 = vrot.lane.b32.xlu0 %v3355, 96
      %v3493 = vpop.permute.xlu0 %3492
      %3494 = vrot.lane.b32.xlu0 %v3356, 96
      %v3495 = vpop.permute.xlu0 %3494
      %3496 = vrot.lane.b32.xlu0 %v3357, 96
      %v3497 = vpop.permute.xlu0 %3496
      %3498 = vrot.lane.b32.xlu0 %v3358, 96
      %v3499 = vpop.permute.xlu0 %3498
      %3500 = vrot.lane.b32.xlu0 %v3359, 96
      %v3501 = vpop.permute.xlu0 %3500
      %3502 = vrot.lane.b32.xlu0 %v3360, 96
      %v3503 = vpop.permute.xlu0 %3502
      %3504 = vrot.lane.b32.xlu0 %v3361, 96
      %v3505 = vpop.permute.xlu0 %3504
      %3506 = vrot.lane.b32.xlu0 %v3362, 96
      %v3507 = vpop.permute.xlu0 %3506
      %3508 = vrot.lane.b32.xlu0 %v3363, 96
      %v3509 = vpop.permute.xlu0 %3508
      %3510 = vrot.lane.b32.xlu0 %v3364, 96
      %v3511 = vpop.permute.xlu0 %3510
      %3512 = vrot.lane.b32.xlu0 %v3365, 96
      %v3513 = vpop.permute.xlu0 %3512
      %3514 = vrot.lane.b32.xlu0 %v3366, 96
      %v3515 = vpop.permute.xlu0 %3514
      %3516 = vrot.lane.b32.xlu0 %v3367, 96
      %v3517 = vpop.permute.xlu0 %3516
      %3518 = vrot.lane.b32.xlu0 %v3368, 96
      %v3519 = vpop.permute.xlu0 %3518
      %3520 = vrot.lane.b32.xlu0 %v3369, 96
      %v3521 = vpop.permute.xlu0 %3520
      %3522 = vrot.lane.b32.xlu0 %v3370, 96
      %v3523 = vpop.permute.xlu0 %3522
      %3524 = vrot.lane.b32.xlu0 %v3371, 96
      %v3525 = vpop.permute.xlu0 %3524
      %3526 = vrot.lane.b32.xlu0 %v3372, 96
      %v3527 = vpop.permute.xlu0 %3526
      %3528 = vrot.lane.b32.xlu0 %v3373, 96
      %v3529 = vpop.permute.xlu0 %3528
      %3530 = vrot.lane.b32.xlu0 %v3374, 96
      %v3531 = vpop.permute.xlu0 %3530
      %3532 = vrot.lane.b32.xlu0 %v3375, 96
      %v3533 = vpop.permute.xlu0 %3532
      %3534 = vrot.lane.b32.xlu0 %v3376, 96
      %v3535 = vpop.permute.xlu0 %3534
      %3536 = vrot.lane.b32.xlu0 %v3377, 96
      %v3537 = vpop.permute.xlu0 %3536
      %3602 = vrot.lane.b32.xlu0 %v3378, 112
      %v3603 = vpop.permute.xlu0 %3602
      %3604 = vrot.lane.b32.xlu0 %v3379, 112
      %v3605 = vpop.permute.xlu0 %3604
      %3606 = vrot.lane.b32.xlu0 %v3380, 112
      %v3607 = vpop.permute.xlu0 %3606
      %3608 = vrot.lane.b32.xlu0 %v3381, 112
      %v3609 = vpop.permute.xlu0 %3608
      %3610 = vrot.lane.b32.xlu0 %v3382, 112
      %v3611 = vpop.permute.xlu0 %3610
      %3612 = vrot.lane.b32.xlu0 %v3383, 112
      %v3613 = vpop.permute.xlu0 %3612
      %3614 = vrot.lane.b32.xlu0 %v3384, 112
      %v3615 = vpop.permute.xlu0 %3614
      %3616 = vrot.lane.b32.xlu0 %v3385, 112
      %v3617 = vpop.permute.xlu0 %3616
      %3618 = vrot.lane.b32.xlu0 %v3386, 112
      %v3619 = vpop.permute.xlu0 %3618
      %3620 = vrot.lane.b32.xlu0 %v3387, 112
      %v3621 = vpop.permute.xlu0 %3620
      %3622 = vrot.lane.b32.xlu0 %v3388, 112
      %v3623 = vpop.permute.xlu0 %3622
      %3624 = vrot.lane.b32.xlu0 %v3389, 112
      %v3625 = vpop.permute.xlu0 %3624
      %3626 = vrot.lane.b32.xlu0 %v3390, 112
      %v3627 = vpop.permute.xlu0 %3626
      %3628 = vrot.lane.b32.xlu0 %v3391, 112
      %v3629 = vpop.permute.xlu0 %3628
      %3630 = vrot.lane.b32.xlu0 %v3392, 112
      %v3631 = vpop.permute.xlu0 %3630
      %3632 = vrot.lane.b32.xlu0 %v3393, 112
      %v3633 = vpop.permute.xlu0 %3632
      %3634 = vrot.lane.b32.xlu0 %v3394, 112
      %v3635 = vpop.permute.xlu0 %3634
      %3636 = vrot.lane.b32.xlu0 %v3395, 112
      %v3637 = vpop.permute.xlu0 %3636
      %3638 = vrot.lane.b32.xlu0 %v3396, 112
      %v3639 = vpop.permute.xlu0 %3638
      %3640 = vrot.lane.b32.xlu0 %v3397, 112
      %v3641 = vpop.permute.xlu0 %3640
      %3642 = vrot.lane.b32.xlu0 %v3398, 112
      %v3643 = vpop.permute.xlu0 %3642
      %3644 = vrot.lane.b32.xlu0 %v3399, 112
      %v3645 = vpop.permute.xlu0 %3644
      %3646 = vrot.lane.b32.xlu0 %v3400, 112
      %v3647 = vpop.permute.xlu0 %3646
      %3648 = vrot.lane.b32.xlu0 %v3401, 112
      %v3649 = vpop.permute.xlu0 %3648
      %3650 = vrot.lane.b32.xlu0 %v3402, 112
      %v3651 = vpop.permute.xlu0 %3650
      %3652 = vrot.lane.b32.xlu0 %v3403, 112
      %v3653 = vpop.permute.xlu0 %3652
      %3654 = vrot.lane.b32.xlu0 %v3404, 112
      %v3655 = vpop.permute.xlu0 %3654
      %3656 = vrot.lane.b32.xlu0 %v3405, 112
      %v3657 = vpop.permute.xlu0 %3656
      %3658 = vrot.lane.b32.xlu0 %v3406, 112
      %v3659 = vpop.permute.xlu0 %3658
      %3660 = vrot.lane.b32.xlu0 %v3407, 112
      %v3661 = vpop.permute.xlu0 %3660
      %3662 = vrot.lane.b32.xlu0 %v3408, 112
      %v3663 = vpop.permute.xlu0 %3662
      %3664 = vrot.lane.b32.xlu0 %v3409, 112
      %v3665 = vpop.permute.xlu0 %3664
      %v3698 = vsel %vm352, %v3475, %v3603
      %v3699 = vsel %vm352, %v3477, %v3605
      %v3700 = vsel %vm352, %v3479, %v3607
      %v3701 = vsel %vm352, %v3481, %v3609
      %v3702 = vsel %vm352, %v3483, %v3611
      %v3703 = vsel %vm352, %v3485, %v3613
      %v3704 = vsel %vm352, %v3487, %v3615
      %v3705 = vsel %vm352, %v3489, %v3617
      %v3706 = vsel %vm352, %v3491, %v3619
      %v3707 = vsel %vm352, %v3493, %v3621
      %v3708 = vsel %vm352, %v3495, %v3623
      %v3709 = vsel %vm352, %v3497, %v3625
      %v3710 = vsel %vm352, %v3499, %v3627
      %v3711 = vsel %vm352, %v3501, %v3629
      %v3712 = vsel %vm352, %v3503, %v3631
      %v3713 = vsel %vm352, %v3505, %v3633
      %v3714 = vsel %vm352, %v3507, %v3635
      %v3715 = vsel %vm352, %v3509, %v3637
      %v3716 = vsel %vm352, %v3511, %v3639
      %v3717 = vsel %vm352, %v3513, %v3641
      %v3718 = vsel %vm352, %v3515, %v3643
      %v3719 = vsel %vm352, %v3517, %v3645
      %v3720 = vsel %vm352, %v3519, %v3647
      %v3721 = vsel %vm352, %v3521, %v3649
      %v3722 = vsel %vm352, %v3523, %v3651
      %v3723 = vsel %vm352, %v3525, %v3653
      %v3724 = vsel %vm352, %v3527, %v3655
      %v3725 = vsel %vm352, %v3529, %v3657
      %v3726 = vsel %vm352, %v3531, %v3659
      %v3727 = vsel %vm352, %v3533, %v3661
      %v3728 = vsel %vm352, %v3535, %v3663
      %v3729 = vsel %vm352, %v3537, %v3665
      %v3730 = vsel %vm2705, %v3698, %v3410
      %v3731 = vsel %vm2705, %v3699, %v3411
      %v3732 = vsel %vm2705, %v3700, %v3412
      %v3733 = vsel %vm2705, %v3701, %v3413
      %v3734 = vsel %vm2705, %v3702, %v3414
      %v3735 = vsel %vm2705, %v3703, %v3415
      %v3736 = vsel %vm2705, %v3704, %v3416
      %v3737 = vsel %vm2705, %v3705, %v3417
      %v3738 = vsel %vm2705, %v3706, %v3418
      %v3739 = vsel %vm2705, %v3707, %v3419
      %v3740 = vsel %vm2705, %v3708, %v3420
      %v3741 = vsel %vm2705, %v3709, %v3421
      %v3742 = vsel %vm2705, %v3710, %v3422
      %v3743 = vsel %vm2705, %v3711, %v3423
      %v3744 = vsel %vm2705, %v3712, %v3424
      %v3745 = vsel %vm2705, %v3713, %v3425
      %v3746 = vsel %vm2705, %v3714, %v3426
      %v3747 = vsel %vm2705, %v3715, %v3427
      %v3748 = vsel %vm2705, %v3716, %v3428
      %v3749 = vsel %vm2705, %v3717, %v3429
      %v3750 = vsel %vm2705, %v3718, %v3430
      %v3751 = vsel %vm2705, %v3719, %v3431
      %v3752 = vsel %vm2705, %v3720, %v3432
      %v3753 = vsel %vm2705, %v3721, %v3433
      %v3754 = vsel %vm2705, %v3722, %v3434
      %v3755 = vsel %vm2705, %v3723, %v3435
      %v3756 = vsel %vm2705, %v3724, %v3436
      %v3757 = vsel %vm2705, %v3725, %v3437
      %v3758 = vsel %vm2705, %v3726, %v3438
      %v3759 = vsel %vm2705, %v3727, %v3439
      %v3760 = vsel %vm2705, %v3728, %v3440
      %v3761 = vsel %vm2705, %v3729, %v3441
      %vm3762 = vcmask 392192
      %3763 = vst.msk [vmem:[%s316] sm:$0xff] %vm3762, %v3730
      %3764 = vst.msk [vmem:[%s316 + $0x8] sm:$0xff] %vm3762, %v3731
      %3765 = vst.msk [vmem:[%s316 + $0x10] sm:$0xff] %vm3762, %v3732
      %3766 = vst.msk [vmem:[%s316 + $0x18] sm:$0xff] %vm3762, %v3733
      %3767 = vst.msk [vmem:[%s316 + $0x20] sm:$0xff] %vm3762, %v3734
      %3768 = vst.msk [vmem:[%s316 + $0x28] sm:$0xff] %vm3762, %v3735
      %3769 = vst.msk [vmem:[%s316 + $0x30] sm:$0xff] %vm3762, %v3736
      %3770 = vst.msk [vmem:[%s316 + $0x38] sm:$0xff] %vm3762, %v3737
      %3771 = vst.msk [vmem:[%s316 + $0x40] sm:$0xff] %vm3762, %v3738
      %3772 = vst.msk [vmem:[%s316 + $0x48] sm:$0xff] %vm3762, %v3739
      %3773 = vst.msk [vmem:[%s316 + $0x50] sm:$0xff] %vm3762, %v3740
      %3774 = vst.msk [vmem:[%s316 + $0x58] sm:$0xff] %vm3762, %v3741
      %3775 = vst.msk [vmem:[%s316 + $0x60] sm:$0xff] %vm3762, %v3742
      %3776 = vst.msk [vmem:[%s316 + $0x68] sm:$0xff] %vm3762, %v3743
      %3777 = vst.msk [vmem:[%s316 + $0x70] sm:$0xff] %vm3762, %v3744
      %3778 = vst.msk [vmem:[%s316 + $0x78] sm:$0xff] %vm3762, %v3745
      %3779 = vst.msk [vmem:[%s316 + $0x80] sm:$0xff] %vm3762, %v3746
      %3780 = vst.msk [vmem:[%s316 + $0x88] sm:$0xff] %vm3762, %v3747
      %3781 = vst.msk [vmem:[%s316 + $0x90] sm:$0xff] %vm3762, %v3748
      %3782 = vst.msk [vmem:[%s316 + $0x98] sm:$0xff] %vm3762, %v3749
      %3783 = vst.msk [vmem:[%s316 + $0xa0] sm:$0xff] %vm3762, %v3750
      %3784 = vst.msk [vmem:[%s316 + $0xa8] sm:$0xff] %vm3762, %v3751
      %3785 = vst.msk [vmem:[%s316 + $0xb0] sm:$0xff] %vm3762, %v3752
      %3786 = vst.msk [vmem:[%s316 + $0xb8] sm:$0xff] %vm3762, %v3753
      %3787 = vst.msk [vmem:[%s316 + $0xc0] sm:$0xff] %vm3762, %v3754
      %3788 = vst.msk [vmem:[%s316 + $0xc8] sm:$0xff] %vm3762, %v3755
      %3789 = vst.msk [vmem:[%s316 + $0xd0] sm:$0xff] %vm3762, %v3756
      %3790 = vst.msk [vmem:[%s316 + $0xd8] sm:$0xff] %vm3762, %v3757
      %3791 = vst.msk [vmem:[%s316 + $0xe0] sm:$0xff] %vm3762, %v3758
      %3792 = vst.msk [vmem:[%s316 + $0xe8] sm:$0xff] %vm3762, %v3759
      %3793 = vst.msk [vmem:[%s316 + $0xf0] sm:$0xff] %vm3762, %v3760
      %3794 = vst.msk [vmem:[%s316 + $0xf8] sm:$0xff] %vm3762, %v3761
      %s3795 = smul.u32 32, %s19
      %p3796 = scmp.lt.s32.totalorder %s3795, 63
      %s3797 = scalar_select %p3796, %s3795, 63
      %s3798 = smul.addr %s3797, 8
      %s3799 = scalar_lea.vmem %s6, %s3798
      %s3800 = smul.u32 32, %s19
      %p3801 = scmp.lt.s32.totalorder %s3800, 63
      %s3802 = scalar_select %p3801, %s3800, 63
      %s3803 = smul.addr %s3802, 8
      %s3804 = scalar_lea.vmem %s7, %s3803
      // Predicated region
      $region45: #{tpu_custom_call.1} parent=43 // pred_check
        %p3805 = pneg %p173
      $region46: #{tpu_custom_call.1} parent=43 // pred_check_branch
        %3807 = sbr.rel (%p3805) target = $region48
      $region47: #{tpu_custom_call.1} parent=43 // pred_region
        %s3808 = smul.u32 32, %s19
      $region48: #{tpu_custom_call.1} parent=43 // pred_fallthru
        _
      // Predicated region
      $region49: #{tpu_custom_call.1} parent=43 // pred_check
        %p3809 = pneg %p199
      $region50: #{tpu_custom_call.1} parent=43 // pred_check_branch
        %3811 = sbr.rel (%p3809) target = $region52
      $region51: #{tpu_custom_call.1} parent=43 // pred_region
        %s3812 = smul.u32 32, %s19
      $region52: #{tpu_custom_call.1} parent=43 // pred_fallthru
        _
    $region44: #{tpu_custom_call.1} parent=5 // pred_fallthru
      _
    %p3813 = scmp.le.s32.totalorder 2, %s14
    // Predicated region
    $region53: #{tpu_custom_call.1} parent=5 // pred_check
      %p3814 = pneg %p3813
    $region54: #{tpu_custom_call.1} parent=5 // pred_check_branch
      %3816 = sbr.rel (%p3814) target = $region56
    $region55: #{tpu_custom_call.1} parent=5 // pred_region
      %s3817 = ssub.s32 %s14, 2
      // Predicated region
      $region57: #{tpu_custom_call.1} parent=55 // pred_check
        %p3818 = pneg %p179
      $region58: #{tpu_custom_call.1} parent=55 // pred_check_branch
        %3820 = sbr.rel (%p3818) target = $region60
      $region59: #{tpu_custom_call.1} parent=55 // pred_region
        %s3821 = smul.u32 32, %s20
        %p3822 = scmp.lt.s32.totalorder %s3821, 63
        %s3823 = scalar_select %p3822, %s3821, 63
        %s3824 = smul.addr %s3823, 8
        %s3825 = scalar_lea.vmem %s6, %s3824
      $region60: #{tpu_custom_call.1} parent=55 // pred_fallthru
        _
      // Predicated region
      $region61: #{tpu_custom_call.1} parent=55 // pred_check
        %p3826 = pneg %p205
      $region62: #{tpu_custom_call.1} parent=55 // pred_check_branch
        %3828 = sbr.rel (%p3826) target = $region64
      $region63: #{tpu_custom_call.1} parent=55 // pred_region
        %s3829 = smul.u32 32, %s20
        %p3830 = scmp.lt.s32.totalorder %s3829, 63
        %s3831 = scalar_select %p3830, %s3829, 63
        %s3832 = smul.addr %s3831, 8
        %s3833 = scalar_lea.vmem %s7, %s3832
      $region64: #{tpu_custom_call.1} parent=55 // pred_fallthru
        _
    $region56: #{tpu_custom_call.1} parent=5 // pred_fallthru
      _
  $region6: #{tpu_custom_call.1} parent=0 // loop_footer
    %s18 = sadd.s32 1, %s14
  $region7: #{tpu_custom_call.1} parent=0 // loop_footer_branch
    %13 = sbr.rel target = $region3
  $region8: #{tpu_custom_call.1} parent=0 // loop_exit
    _

</llo_original>
